<compile_context>
chip_gen: v7x
topology: tpu7x:2x2x1
jax: 0.10.0
libtpu: 0.0.40
codegen_flags: <defaults>
</compile_context>

<pallas_src>
import functools

import jax
import jax.numpy as jnp
import numpy as np
from jax import lax
from jax.experimental import pallas as pl
from jax.experimental.pallas import tpu as pltpu

NUM_NEURONS = 512
LATENT_D = 32
NUM_JOINTS = 21
N_FEATURES = 1 * NUM_JOINTS * 3          # 63
BN_EPS = 1e-5
_TB_MAX = 256                            # batch rows per grid step (mult of 8)


# ----------------------------------------------------------------------------
# shared elementwise math (used inside kernels and in the JAX reference)
# ----------------------------------------------------------------------------
def _leaky_relu(x, slope=0.2):
    return jnp.where(x >= 0, x, slope * x)


def _rot6d_to_quat(u0, u1, u2, v0, v1, v2):
    """ContinousRotReprDecoder (Gram-Schmidt) + kornia-style rotmat->quaternion.

    column0 = (u0,u1,u2), column1 = (v0,v1,v2).  Pure elementwise f32 math;
    divisions are expressed as rsqrt-multiplies so they land on the EUP slot
    inside the Pallas kernel.
    """
    eps = 1e-12
    inv_un = lax.rsqrt(u0 * u0 + u1 * u1 + u2 * u2 + eps)
    b10, b11, b12 = u0 * inv_un, u1 * inv_un, u2 * inv_un
    dot = b10 * v0 + b11 * v1 + b12 * v2
    w0, w1, w2 = v0 - dot * b10, v1 - dot * b11, v2 - dot * b12
    inv_wn = lax.rsqrt(w0 * w0 + w1 * w1 + w2 * w2 + eps)
    b20, b21, b22 = w0 * inv_wn, w1 * inv_wn, w2 * inv_wn
    # b3 = cross(b1, b2)
    b30 = b11 * b22 - b12 * b21
    b31 = b12 * b20 - b10 * b22
    b32 = b10 * b21 - b11 * b20

    # Rotation matrix M has columns (b1, b2, b3); the kornia routine works on
    # rmat_t = M^T whose rows are b1, b2, b3.
    r00, r01, r02 = b10, b11, b12
    r10, r11, r12 = b20, b21, b22
    r20, r21, r22 = b30, b31, b32

    mask_d2 = r22 < 1e-6
    mask_d0_d1 = r00 > r11
    mask_d0_nd1 = r00 < -r11

    t0 = 1.0 + r00 - r11 - r22
    t1 = 1.0 - r00 + r11 - r22
    t2 = 1.0 - r00 - r11 + r22
    t3 = 1.0 + r00 + r11 + r22

    q0 = (r12 - r21, t0, r01 + r10, r20 + r02)
    q1 = (r20 - r02, r01 + r10, t1, r12 + r21)
    q2 = (r01 - r10, r20 + r02, r12 + r21, t2)
    q3 = (t3, r12 - r21, r20 - r02, r01 - r10)

    c0 = jnp.where(jnp.logical_and(mask_d2, mask_d0_d1), 1.0, 0.0)
    c1 = jnp.where(jnp.logical_and(mask_d2, jnp.logical_not(mask_d0_d1)), 1.0, 0.0)
    c2 = jnp.where(jnp.logical_and(jnp.logical_not(mask_d2), mask_d0_nd1), 1.0, 0.0)
    c3 = jnp.where(
        jnp.logical_and(jnp.logical_not(mask_d2), jnp.logical_not(mask_d0_nd1)),
        1.0, 0.0)

    half_inv = 0.5 * lax.rsqrt(t0 * c0 + t1 * c1 + t2 * c2 + t3 * c3)
    quat = [(q0[k] * c0 + q1[k] * c1 + q2[k] * c2 + q3[k] * c3) * half_inv
            for k in range(4)]
    return quat[0], quat[1], quat[2], quat[3]


def _quat_to_aa(qw, qx, qy, qz):
    # TODO(synk): atan2 has uncertain Mosaic lowering coverage; this tiny
    # per-joint (N, 21) epilogue stays in plain JAX (single fused XLA op).
    sin_sq = qx * qx + qy * qy + qz * qz
    sin_t = jnp.sqrt(sin_sq)
    two_theta = 2.0 * jnp.where(qw < 0.0,
                                jnp.arctan2(-sin_t, -qw),
                                jnp.arctan2(sin_t, qw))
    k = jnp.where(sin_sq > 0.0, two_theta / sin_t, 2.0)
    return jnp.stack([qx * k, qy * k, qz * k], axis=-1)        # (..., 3)


def _bn_affine(bn):
    scale = bn['gamma'] / jnp.sqrt(bn['var'] + BN_EPS)
    shift = bn['beta'] - bn['mean'] * scale
    return scale.reshape(1, -1), shift.reshape(1, -1)


# ----------------------------------------------------------------------------
# kernel math helpers (operate on refs + a loaded activation value)
# ----------------------------------------------------------------------------
def _encoder_math(x, bn1s, bn1b, w1, b1, bn2s, bn2b, w2, b2, wmu, bmu):
    h = x * bn1s[...] + bn1b[...]                              # BatchNorm1d (eval)
    h = _leaky_relu(jnp.dot(h.astype(jnp.bfloat16), w1[...],
                            preferred_element_type=jnp.float32) + b1[...])
    h = h * bn2s[...] + bn2b[...]                              # BatchNorm1d (eval)
    # Dropout(p=0.1) -> identity in eval mode
    h = _leaky_relu(jnp.dot(h.astype(jnp.bfloat16), w2[...],
                            preferred_element_type=jnp.float32) + b2[...])
    return jnp.dot(h.astype(jnp.bfloat16), wmu[...],
                   preferred_element_type=jnp.float32) + bmu[...]


def _decoder_math(z, dw1, db1, dw2, db2, wo6, bo6):
    h = _leaky_relu(jnp.dot(z.astype(jnp.bfloat16), dw1[...],
                            preferred_element_type=jnp.float32) + db1[...])
    # Dropout(p=0.1) -> identity in eval mode
    h = _leaky_relu(jnp.dot(h.astype(jnp.bfloat16), dw2[...],
                            preferred_element_type=jnp.float32) + db2[...])
    h16 = h.astype(jnp.bfloat16)
    # component-major decoder output: one (TB, 21) slab per rot6d component,
    # produced directly by matmuls against the permuted weight slices.
    comp = [jnp.dot(h16, wo6[c], preferred_element_type=jnp.float32) + bo6[c]
            for c in range(6)]
    return _rot6d_to_quat(comp[0], comp[2], comp[4],
                          comp[1], comp[3], comp[5])


# ----------------------------------------------------------------------------
# Pallas kernels
# ----------------------------------------------------------------------------
def _encode_kernel(x_ref, bn1s, bn1b, w1, b1, bn2s, bn2b, w2, b2, wmu, bmu,
                   mu_ref):
    mu_ref[...] = _encoder_math(x_ref[...], bn1s, bn1b, w1, b1,
                                bn2s, bn2b, w2, b2, wmu, bmu)


def _decode_kernel(z_ref, dw1, db1, dw2, db2, wo6, bo6,
                   qw_ref, qx_ref, qy_ref, qz_ref):
    qw, qx, qy, qz = _decoder_math(z_ref[...], dw1, db1, dw2, db2, wo6, bo6)
    qw_ref[...] = qw
    qx_ref[...] = qx
    qy_ref[...] = qy
    qz_ref[...] = qz


def _autoencode_kernel(x_ref, bn1s, bn1b, w1, b1, bn2s, bn2b, w2, b2, wmu, bmu,
                       dw1, db1, dw2, db2, wo6, bo6,
                       mu_ref, qw_ref, qx_ref, qy_ref, qz_ref):
    mu = _encoder_math(x_ref[...], bn1s, bn1b, w1, b1,
                       bn2s, bn2b, w2, b2, wmu, bmu)
    mu_ref[...] = mu
    qw, qx, qy, qz = _decoder_math(mu, dw1, db1, dw2, db2, wo6, bo6)
    qw_ref[...] = qw
    qx_ref[...] = qx
    qy_ref[...] = qy
    qz_ref[...] = qz


# ----------------------------------------------------------------------------
# spec / operand builders
# ----------------------------------------------------------------------------
def _batch_tile(n):
    if n <= _TB_MAX:
        return n, 1
    return _TB_MAX, pl.cdiv(n, _TB_MAX)


def _row_spec(tb, width):
    return pl.BlockSpec((tb, width), lambda i: (i, 0))


def _resident_spec(shape):
    zeros = (0,) * len(shape)
    return pl.BlockSpec(shape, lambda i: zeros)


def _enc_specs(tb):
    return [
        _row_spec(tb, N_FEATURES),
        _resident_spec((1, N_FEATURES)), _resident_spec((1, N_FEATURES)),
        _resident_spec((N_FEATURES, NUM_NEURONS)), _resident_spec((1, NUM_NEURONS)),
        _resident_spec((1, NUM_NEURONS)), _resident_spec((1, NUM_NEURONS)),
        _resident_spec((NUM_NEURONS, NUM_NEURONS)), _resident_spec((1, NUM_NEURONS)),
        _resident_spec((NUM_NEURONS, LATENT_D)), _resident_spec((1, LATENT_D)),
    ]


def _dec_weight_specs():
    return [
        _resident_spec((LATENT_D, NUM_NEURONS)), _resident_spec((1, NUM_NEURONS)),
        _resident_spec((NUM_NEURONS, NUM_NEURONS)), _resident_spec((1, NUM_NEURONS)),
        _resident_spec((6, NUM_NEURONS, NUM_JOINTS)),
        _resident_spec((6, 1, NUM_JOINTS)),
    ]


def _enc_operands(params, x):
    bf = jnp.bfloat16
    bn1s, bn1b = _bn_affine(params['bn1'])
    bn2s, bn2b = _bn_affine(params['bn2'])
    return (x, bn1s, bn1b,
            params['enc_w1'].astype(bf), params['enc_b1'],
            bn2s, bn2b,
            params['enc_w2'].astype(bf), params['enc_b2'],
            params['enc_wmu'].astype(bf), params['enc_bmu'])


def _dec_operands(params):
    bf = jnp.bfloat16
    # Permute the decoder-output weights offline to component-major layout:
    # wo6[c, :, j] = dec_wo[:, j*6 + c]  (c = rot6d component, j = joint)
    wo6 = params['dec_wo'].reshape(NUM_NEURONS, NUM_JOINTS, 6)
    wo6 = jnp.transpose(wo6, (2, 0, 1)).astype(bf)             # (6, 512, 21)
    bo6 = params['dec_bo'].reshape(NUM_JOINTS, 6).T.reshape(6, 1, NUM_JOINTS)
    return (params['dec_w1'].astype(bf), params['dec_b1'],
            params['dec_w2'].astype(bf), params['dec_b2'],
            wo6, bo6)


_COMPILER_PARAMS = pltpu.CompilerParams(dimension_semantics=("parallel",))


# ----------------------------------------------------------------------------
# wrappers
# ----------------------------------------------------------------------------
@jax.jit
def vposer_encode(params, pin):
    """Pin: (N, 1, 21, 3) (or anything flattening to (N, 63)) -> mean (N, 32)."""
    n = pin.shape[0]
    x = pin.reshape(n, -1).astype(jnp.float32)
    tb, grid = _batch_tile(n)
    return pl.pallas_call(
        _encode_kernel,
        grid=(grid,),
        out_shape=jax.ShapeDtypeStruct((n, LATENT_D), jnp.float32),
        in_specs=_enc_specs(tb),
        out_specs=_row_spec(tb, LATENT_D),
        compiler_params=_COMPILER_PARAMS,
    )(*_enc_operands(params, x))


@functools.partial(jax.jit, static_argnames=("flatten_pose",))
def vposer_decode_pose(params, z, flatten_pose=True):
    """z: (N, 32) latent -> angle-axis pose (N, 63) or (N, 21, 3)."""
    n = z.shape[0]
    tb, grid = _batch_tile(n)
    qw, qx, qy, qz = pl.pallas_call(
        _decode_kernel,
        grid=(grid,),
        out_shape=tuple(jax.ShapeDtypeStruct((n, NUM_JOINTS), jnp.float32)
                        for _ in range(4)),
        in_specs=[_row_spec(tb, LATENT_D)] + _dec_weight_specs(),
        out_specs=tuple(_row_spec(tb, NUM_JOINTS) for _ in range(4)),
        compiler_params=_COMPILER_PARAMS,
    )(z.astype(jnp.float32), *_dec_operands(params))
    pose = _quat_to_aa(qw, qx, qy, qz)                         # (N, 21, 3)
    return pose.reshape(n, -1) if flatten_pose else pose


@functools.partial(jax.jit, static_argnames=("flatten_pose",))
def vposer_autoencode(params, pin, flatten_pose=True):
    """Fused encoder -> mu -> decoder -> quaternion in a single pallas_call."""
    n = pin.shape[0]
    x = pin.reshape(n, -1).astype(jnp.float32)
    tb, grid = _batch_tile(n)
    out_shape = (jax.ShapeDtypeStruct((n, LATENT_D), jnp.float32),) + tuple(
        jax.ShapeDtypeStruct((n, NUM_JOINTS), jnp.float32) for _ in range(4))
    out_specs = (_row_spec(tb, LATENT_D),) + tuple(
        _row_spec(tb, NUM_JOINTS) for _ in range(4))
    mu, qw, qx, qy, qz = pl.pallas_call(
        _autoencode_kernel,
        grid=(grid,),
        out_shape=out_shape,
        in_specs=_enc_specs(tb) + _dec_weight_specs(),
        out_specs=out_specs,
        compiler_params=_COMPILER_PARAMS,
    )(*_enc_operands(params, x), *_dec_operands(params))
    pose = _quat_to_aa(qw, qx, qy, qz)                         # (N, 21, 3)
    if flatten_pose:
        pose = pose.reshape(n, -1)
    return mu, pose


def vposer1_forward(params, encode=None, decode=None, autoencode=None,
                    flatten_pose=True):
    out = {}
    if autoencode is not None:
        mu, pose = vposer_autoencode(params, autoencode, flatten_pose=flatten_pose)
        out['pose'] = pose
        out['embedding'] = mu
        return out
    if encode is not None:
        out['embedding'] = vposer_encode(params, encode)
    if decode is not None:
        out['pose'] = vposer_decode_pose(params, decode, flatten_pose=flatten_pose)
    return out


# ----------------------------------------------------------------------------
# deterministic parameter init (synthetic; shapes from the module __init__)
# ----------------------------------------------------------------------------
def init_params(key):
    keys = jax.random.split(key, 16)

    def lin(k, fan_in, fan_out):
        kw, kb = jax.random.split(k)
        w = jax.random.normal(kw, (fan_in, fan_out), jnp.float32) / np.sqrt(fan_in)
        b = 0.01 * jax.random.normal(kb, (fan_out,), jnp.float32)
        return w, b.reshape(1, fan_out)

    def bn(k, dim):
        k0, k1, k2, k3 = jax.random.split(k, 4)
        return dict(
            gamma=1.0 + 0.1 * jax.random.normal(k0, (dim,), jnp.float32),
            beta=0.1 * jax.random.normal(k1, (dim,), jnp.float32),
            mean=0.1 * jax.random.normal(k2, (dim,), jnp.float32),
            var=0.5 + jnp.abs(jax.random.normal(k3, (dim,), jnp.float32)))

    p = {}
    p['bn1'] = bn(keys[0], N_FEATURES)
    p['bn2'] = bn(keys[1], NUM_NEURONS)
    p['enc_w1'], p['enc_b1'] = lin(keys[2], N_FEATURES, NUM_NEURONS)
    p['enc_w2'], p['enc_b2'] = lin(keys[3], NUM_NEURONS, NUM_NEURONS)
    p['enc_wmu'], p['enc_bmu'] = lin(keys[4], NUM_NEURONS, LATENT_D)
    # enc_logvar head omitted: q_z.scale is never returned by VPoser1.forward
    p['dec_w1'], p['dec_b1'] = lin(keys[5], LATENT_D, NUM_NEURONS)
    p['dec_w2'], p['dec_b2'] = lin(keys[6], NUM_NEURONS, NUM_NEURONS)
    p['dec_wo'], p['dec_bo'] = lin(keys[7], NUM_NEURONS, NUM_JOINTS * 6)
    return p


# ----------------------------------------------------------------------------
# plain-JAX reference (mirrors the PyTorch forward structure; uses the same
# bf16-operand / f32-accumulate matmul precision as the kernel so the
# comparison is tight — with f32 weights the same code matches PyTorch f32).
# ----------------------------------------------------------------------------
def _mm(a, w):
    return jnp.dot(a.astype(jnp.bfloat16), w.astype(jnp.bfloat16),
                   preferred_element_type=jnp.float32)


def _reference_autoencode(params, pin):
    n = pin.shape[0]
    x = pin.reshape(n, -1).astype(jnp.float32)
    bn1s, bn1b = _bn_affine(params['bn1'])
    bn2s, bn2b = _bn_affine(params['bn2'])
    h = x * bn1s + bn1b
    h = _leaky_relu(_mm(h, params['enc_w1']) + params['enc_b1'])
    h = h * bn2s + bn2b
    h = _leaky_relu(_mm(h, params['enc_w2']) + params['enc_b2'])
    mu = _mm(h, params['enc_wmu']) + params['enc_bmu']

    h = _leaky_relu(_mm(mu, params['dec_w1']) + params['dec_b1'])
    h = _leaky_relu(_mm(h, params['dec_w2']) + params['dec_b2'])
    dec = _mm(h, params['dec_wo']) + params['dec_bo']          # (n, 126) joint-major

    comp = dec.reshape(-1, 6)
    qw, qx, qy, qz = _rot6d_to_quat(comp[:, 0], comp[:, 2], comp[:, 4],
                                    comp[:, 1], comp[:, 3], comp[:, 5])
    aa = _quat_to_aa(qw, qx, qy, qz)                           # (n*21, 3)
    return mu, aa.reshape(n, -1)


# ----------------------------------------------------------------------------
if __name__ == "__main__":
    key = jax.random.PRNGKey(0)
    pkey, xkey = jax.random.split(key)
    params = init_params(pkey)

    batch = 8
    # Pin for autoencode: N x 1 x num_joints x 3 (axis-angle body pose)
    autoencode = 0.3 * jax.random.normal(
        xkey, (batch, 1, NUM_JOINTS, 3), jnp.float32)

    # fused autoencode path
    out = vposer1_forward(params, autoencode=autoencode, flatten_pose=True)
    out = jax.block_until_ready(out)
    assert out['embedding'].shape == (batch, LATENT_D)
    assert out['pose'].shape == (batch, NUM_JOINTS * 3)

    ref_mu, ref_pose = _reference_autoencode(params, autoencode)
    np.testing.assert_allclose(np.asarray(out['embedding']), np.asarray(ref_mu),
                               rtol=1e-2, atol=1e-2)
    np.testing.assert_allclose(np.asarray(out['pose']), np.asarray(ref_pose),
                               rtol=1e-2, atol=1e-2)

    # encode-only / decode-only paths
    enc_out = vposer1_forward(params, encode=autoencode)
    dec_out = vposer1_forward(params, decode=ref_mu, flatten_pose=True)
    jax.block_until_ready((enc_out, dec_out))
    np.testing.assert_allclose(np.asarray(enc_out['embedding']),
                               np.asarray(ref_mu), rtol=1e-2, atol=1e-2)
    np.testing.assert_allclose(np.asarray(dec_out['pose']),
                               np.asarray(ref_pose), rtol=1e-2, atol=1e-2)

    print("KERNEL_OK")
</pallas_src>

<mosaic_0001>
module attributes {stable_mosaic.version = 11 : i64} {
  func.func @_autoencode_kernel(%arg0: i32, %arg1: memref<8x63xf32, #tpu.memory_space<vmem>>, %arg2: memref<1x63xf32, #tpu.memory_space<vmem>>, %arg3: memref<1x63xf32, #tpu.memory_space<vmem>>, %arg4: memref<63x512xbf16, #tpu.memory_space<vmem>>, %arg5: memref<1x512xf32, #tpu.memory_space<vmem>>, %arg6: memref<1x512xf32, #tpu.memory_space<vmem>>, %arg7: memref<1x512xf32, #tpu.memory_space<vmem>>, %arg8: memref<512x512xbf16, #tpu.memory_space<vmem>>, %arg9: memref<1x512xf32, #tpu.memory_space<vmem>>, %arg10: memref<512x32xbf16, #tpu.memory_space<vmem>>, %arg11: memref<1x32xf32, #tpu.memory_space<vmem>>, %arg12: memref<32x512xbf16, #tpu.memory_space<vmem>>, %arg13: memref<1x512xf32, #tpu.memory_space<vmem>>, %arg14: memref<512x512xbf16, #tpu.memory_space<vmem>>, %arg15: memref<1x512xf32, #tpu.memory_space<vmem>>, %arg16: memref<6x512x21xbf16, #tpu.memory_space<vmem>>, %arg17: memref<6x1x21xf32, #tpu.memory_space<vmem>>, %arg18: memref<8x32xf32, #tpu.memory_space<vmem>>, %arg19: memref<8x21xf32, #tpu.memory_space<vmem>>, %arg20: memref<8x21xf32, #tpu.memory_space<vmem>>, %arg21: memref<8x21xf32, #tpu.memory_space<vmem>>, %arg22: memref<8x21xf32, #tpu.memory_space<vmem>>) attributes {dimension_semantics = [#tpu.dimension_semantics<parallel>], iteration_bounds = array<i64: 1>, scalar_prefetch = 0 : i64, scratch_operands = 0 : i64, tpu.core_type = #tpu.core_type<tc>, window_params = [{transform_indices = @transform_0, window_bounds = array<i64: 8, 63>}, {pipeline_mode = #tpu.pipeline_mode<synchronous>, transform_indices = @transform_1, window_bounds = array<i64: 1, 63>}, {pipeline_mode = #tpu.pipeline_mode<synchronous>, transform_indices = @transform_2, window_bounds = array<i64: 1, 63>}, {pipeline_mode = #tpu.pipeline_mode<synchronous>, transform_indices = @transform_3, window_bounds = array<i64: 63, 512>}, {pipeline_mode = #tpu.pipeline_mode<synchronous>, transform_indices = @transform_4, window_bounds = array<i64: 1, 512>}, {pipeline_mode = #tpu.pipeline_mode<synchronous>, transform_indices = @transform_5, window_bounds = array<i64: 1, 512>}, {pipeline_mode = #tpu.pipeline_mode<synchronous>, transform_indices = @transform_6, window_bounds = array<i64: 1, 512>}, {pipeline_mode = #tpu.pipeline_mode<synchronous>, transform_indices = @transform_7, window_bounds = array<i64: 512, 512>}, {pipeline_mode = #tpu.pipeline_mode<synchronous>, transform_indices = @transform_8, window_bounds = array<i64: 1, 512>}, {pipeline_mode = #tpu.pipeline_mode<synchronous>, transform_indices = @transform_9, window_bounds = array<i64: 512, 32>}, {pipeline_mode = #tpu.pipeline_mode<synchronous>, transform_indices = @transform_10, window_bounds = array<i64: 1, 32>}, {pipeline_mode = #tpu.pipeline_mode<synchronous>, transform_indices = @transform_11, window_bounds = array<i64: 32, 512>}, {pipeline_mode = #tpu.pipeline_mode<synchronous>, transform_indices = @transform_12, window_bounds = array<i64: 1, 512>}, {pipeline_mode = #tpu.pipeline_mode<synchronous>, transform_indices = @transform_13, window_bounds = array<i64: 512, 512>}, {pipeline_mode = #tpu.pipeline_mode<synchronous>, transform_indices = @transform_14, window_bounds = array<i64: 1, 512>}, {pipeline_mode = #tpu.pipeline_mode<synchronous>, transform_indices = @transform_15, window_bounds = array<i64: 6, 512, 21>}, {pipeline_mode = #tpu.pipeline_mode<synchronous>, transform_indices = @transform_16, window_bounds = array<i64: 6, 1, 21>}, {transform_indices = @transform_17, window_bounds = array<i64: 8, 32>}, {transform_indices = @transform_18, window_bounds = array<i64: 8, 21>}, {transform_indices = @transform_19, window_bounds = array<i64: 8, 21>}, {transform_indices = @transform_20, window_bounds = array<i64: 8, 21>}, {transform_indices = @transform_21, window_bounds = array<i64: 8, 21>}]} {
    %c0 = arith.constant 0 : index
    %c0_0 = arith.constant 0 : index
    %0 = vector.load %arg1[%c0, %c0_0] : memref<8x63xf32, #tpu.memory_space<vmem>>, vector<8x63xf32>
    %c0_1 = arith.constant 0 : index
    %c0_2 = arith.constant 0 : index
    %1 = vector.load %arg2[%c0_1, %c0_2] : memref<1x63xf32, #tpu.memory_space<vmem>>, vector<1x63xf32>
    %2 = vector.broadcast %1 : vector<1x63xf32> to vector<8x63xf32>
    %3 = arith.mulf %0, %2 : vector<8x63xf32>
    %c0_3 = arith.constant 0 : index
    %c0_4 = arith.constant 0 : index
    %4 = vector.load %arg3[%c0_3, %c0_4] : memref<1x63xf32, #tpu.memory_space<vmem>>, vector<1x63xf32>
    %5 = vector.broadcast %4 : vector<1x63xf32> to vector<8x63xf32>
    %6 = arith.addf %3, %5 : vector<8x63xf32>
    %7 = arith.truncf %6 : vector<8x63xf32> to vector<8x63xbf16>
    %c0_5 = arith.constant 0 : index
    %c0_6 = arith.constant 0 : index
    %8 = vector.load %arg4[%c0_5, %c0_6] : memref<63x512xbf16, #tpu.memory_space<vmem>>, vector<63x512xbf16>
    %cst = arith.constant dense<0.000000e+00> : vector<8x512xf32>
    %9 = tpu.matmul %7, %8, %cst {dimension_numbers = #tpu.dot_dimension_numbers<[1], [0], [0], [1], [0, 0, 1, 1], [], []>} : vector<8x63xbf16>, vector<63x512xbf16>, vector<8x512xf32> -> vector<8x512xf32>
    %c0_7 = arith.constant 0 : index
    %c0_8 = arith.constant 0 : index
    %10 = vector.load %arg5[%c0_7, %c0_8] : memref<1x512xf32, #tpu.memory_space<vmem>>, vector<1x512xf32>
    %11 = vector.broadcast %10 : vector<1x512xf32> to vector<8x512xf32>
    %12 = arith.addf %9, %11 : vector<8x512xf32>
    %cst_9 = arith.constant 0.000000e+00 : f32
    %13 = vector.broadcast %cst_9 : f32 to vector<8x512xf32>
    %14 = arith.cmpf oge, %12, %13 : vector<8x512xf32>
    %cst_10 = arith.constant 2.000000e-01 : f32
    %15 = vector.broadcast %cst_10 : f32 to vector<8x512xf32>
    %16 = arith.mulf %15, %12 : vector<8x512xf32>
    %17 = arith.select %14, %12, %16 : vector<8x512xi1>, vector<8x512xf32>
    %c0_11 = arith.constant 0 : index
    %c0_12 = arith.constant 0 : index
    %18 = vector.load %arg6[%c0_11, %c0_12] : memref<1x512xf32, #tpu.memory_space<vmem>>, vector<1x512xf32>
    %19 = vector.broadcast %18 : vector<1x512xf32> to vector<8x512xf32>
    %20 = arith.mulf %17, %19 : vector<8x512xf32>
    %c0_13 = arith.constant 0 : index
    %c0_14 = arith.constant 0 : index
    %21 = vector.load %arg7[%c0_13, %c0_14] : memref<1x512xf32, #tpu.memory_space<vmem>>, vector<1x512xf32>
    %22 = vector.broadcast %21 : vector<1x512xf32> to vector<8x512xf32>
    %23 = arith.addf %20, %22 : vector<8x512xf32>
    %24 = arith.truncf %23 : vector<8x512xf32> to vector<8x512xbf16>
    %c0_15 = arith.constant 0 : index
    %c0_16 = arith.constant 0 : index
    %25 = vector.load %arg8[%c0_15, %c0_16] : memref<512x512xbf16, #tpu.memory_space<vmem>>, vector<512x512xbf16>
    %cst_17 = arith.constant dense<0.000000e+00> : vector<8x512xf32>
    %26 = tpu.matmul %24, %25, %cst_17 {dimension_numbers = #tpu.dot_dimension_numbers<[1], [0], [0], [1], [0, 0, 1, 1], [], []>} : vector<8x512xbf16>, vector<512x512xbf16>, vector<8x512xf32> -> vector<8x512xf32>
    %c0_18 = arith.constant 0 : index
    %c0_19 = arith.constant 0 : index
    %27 = vector.load %arg9[%c0_18, %c0_19] : memref<1x512xf32, #tpu.memory_space<vmem>>, vector<1x512xf32>
    %28 = vector.broadcast %27 : vector<1x512xf32> to vector<8x512xf32>
    %29 = arith.addf %26, %28 : vector<8x512xf32>
    %cst_20 = arith.constant 0.000000e+00 : f32
    %30 = vector.broadcast %cst_20 : f32 to vector<8x512xf32>
    %31 = arith.cmpf oge, %29, %30 : vector<8x512xf32>
    %cst_21 = arith.constant 2.000000e-01 : f32
    %32 = vector.broadcast %cst_21 : f32 to vector<8x512xf32>
    %33 = arith.mulf %32, %29 : vector<8x512xf32>
    %34 = arith.select %31, %29, %33 : vector<8x512xi1>, vector<8x512xf32>
    %35 = arith.truncf %34 : vector<8x512xf32> to vector<8x512xbf16>
    %c0_22 = arith.constant 0 : index
    %c0_23 = arith.constant 0 : index
    %36 = vector.load %arg10[%c0_22, %c0_23] : memref<512x32xbf16, #tpu.memory_space<vmem>>, vector<512x32xbf16>
    %cst_24 = arith.constant dense<0.000000e+00> : vector<8x32xf32>
    %37 = tpu.matmul %35, %36, %cst_24 {dimension_numbers = #tpu.dot_dimension_numbers<[1], [0], [0], [1], [0, 0, 1, 1], [], []>} : vector<8x512xbf16>, vector<512x32xbf16>, vector<8x32xf32> -> vector<8x32xf32>
    %c0_25 = arith.constant 0 : index
    %c0_26 = arith.constant 0 : index
    %38 = vector.load %arg11[%c0_25, %c0_26] : memref<1x32xf32, #tpu.memory_space<vmem>>, vector<1x32xf32>
    %39 = vector.broadcast %38 : vector<1x32xf32> to vector<8x32xf32>
    %40 = arith.addf %37, %39 : vector<8x32xf32>
    %c0_27 = arith.constant 0 : index
    %c0_28 = arith.constant 0 : index
    %41 = vector.load %arg18[%c0_27, %c0_28] : memref<8x32xf32, #tpu.memory_space<vmem>>, vector<8x32xf32>
    tpu.vector_store %arg18[%c0_27, %c0_28], %40 {strides = array<i32>} : memref<8x32xf32, #tpu.memory_space<vmem>>, vector<8x32xf32>,
    %42 = arith.truncf %40 : vector<8x32xf32> to vector<8x32xbf16>
    %c0_29 = arith.constant 0 : index
    %c0_30 = arith.constant 0 : index
    %43 = vector.load %arg12[%c0_29, %c0_30] : memref<32x512xbf16, #tpu.memory_space<vmem>>, vector<32x512xbf16>
    %cst_31 = arith.constant dense<0.000000e+00> : vector<8x512xf32>
    %44 = tpu.matmul %42, %43, %cst_31 {dimension_numbers = #tpu.dot_dimension_numbers<[1], [0], [0], [1], [0, 0, 1, 1], [], []>} : vector<8x32xbf16>, vector<32x512xbf16>, vector<8x512xf32> -> vector<8x512xf32>
    %c0_32 = arith.constant 0 : index
    %c0_33 = arith.constant 0 : index
    %45 = vector.load %arg13[%c0_32, %c0_33] : memref<1x512xf32, #tpu.memory_space<vmem>>, vector<1x512xf32>
    %46 = vector.broadcast %45 : vector<1x512xf32> to vector<8x512xf32>
    %47 = arith.addf %44, %46 : vector<8x512xf32>
    %cst_34 = arith.constant 0.000000e+00 : f32
    %48 = vector.broadcast %cst_34 : f32 to vector<8x512xf32>
    %49 = arith.cmpf oge, %47, %48 : vector<8x512xf32>
    %cst_35 = arith.constant 2.000000e-01 : f32
    %50 = vector.broadcast %cst_35 : f32 to vector<8x512xf32>
    %51 = arith.mulf %50, %47 : vector<8x512xf32>
    %52 = arith.select %49, %47, %51 : vector<8x512xi1>, vector<8x512xf32>
    %53 = arith.truncf %52 : vector<8x512xf32> to vector<8x512xbf16>
    %c0_36 = arith.constant 0 : index
    %c0_37 = arith.constant 0 : index
    %54 = vector.load %arg14[%c0_36, %c0_37] : memref<512x512xbf16, #tpu.memory_space<vmem>>, vector<512x512xbf16>
    %cst_38 = arith.constant dense<0.000000e+00> : vector<8x512xf32>
    %55 = tpu.matmul %53, %54, %cst_38 {dimension_numbers = #tpu.dot_dimension_numbers<[1], [0], [0], [1], [0, 0, 1, 1], [], []>} : vector<8x512xbf16>, vector<512x512xbf16>, vector<8x512xf32> -> vector<8x512xf32>
    %c0_39 = arith.constant 0 : index
    %c0_40 = arith.constant 0 : index
    %56 = vector.load %arg15[%c0_39, %c0_40] : memref<1x512xf32, #tpu.memory_space<vmem>>, vector<1x512xf32>
    %57 = vector.broadcast %56 : vector<1x512xf32> to vector<8x512xf32>
    %58 = arith.addf %55, %57 : vector<8x512xf32>
    %cst_41 = arith.constant 0.000000e+00 : f32
    %59 = vector.broadcast %cst_41 : f32 to vector<8x512xf32>
    %60 = arith.cmpf oge, %58, %59 : vector<8x512xf32>
    %cst_42 = arith.constant 2.000000e-01 : f32
    %61 = vector.broadcast %cst_42 : f32 to vector<8x512xf32>
    %62 = arith.mulf %61, %58 : vector<8x512xf32>
    %63 = arith.select %60, %58, %62 : vector<8x512xi1>, vector<8x512xf32>
    %64 = arith.truncf %63 : vector<8x512xf32> to vector<8x512xbf16>
    %c0_43 = arith.constant 0 : index
    %c0_44 = arith.constant 0 : index
    %c0_45 = arith.constant 0 : index
    %65 = vector.load %arg16[%c0_43, %c0_44, %c0_45] : memref<6x512x21xbf16, #tpu.memory_space<vmem>>, vector<1x512x21xbf16>
    %66 = vector.shape_cast %65 : vector<1x512x21xbf16> to vector<512x21xbf16>
    %cst_46 = arith.constant dense<0.000000e+00> : vector<8x21xf32>
    %67 = tpu.matmul %64, %66, %cst_46 {dimension_numbers = #tpu.dot_dimension_numbers<[1], [0], [0], [1], [0, 0, 1, 1], [], []>} : vector<8x512xbf16>, vector<512x21xbf16>, vector<8x21xf32> -> vector<8x21xf32>
    %c0_47 = arith.constant 0 : index
    %c0_48 = arith.constant 0 : index
    %c0_49 = arith.constant 0 : index
    %68 = vector.load %arg17[%c0_47, %c0_48, %c0_49] : memref<6x1x21xf32, #tpu.memory_space<vmem>>, vector<1x1x21xf32>
    %69 = vector.shape_cast %68 : vector<1x1x21xf32> to vector<1x21xf32>
    %70 = vector.broadcast %69 : vector<1x21xf32> to vector<8x21xf32>
    %71 = arith.addf %67, %70 : vector<8x21xf32>
    %c1 = arith.constant 1 : index
    %c0_50 = arith.constant 0 : index
    %c0_51 = arith.constant 0 : index
    %72 = vector.load %arg16[%c1, %c0_50, %c0_51] : memref<6x512x21xbf16, #tpu.memory_space<vmem>>, vector<1x512x21xbf16>
    %73 = vector.shape_cast %72 : vector<1x512x21xbf16> to vector<512x21xbf16>
    %cst_52 = arith.constant dense<0.000000e+00> : vector<8x21xf32>
    %74 = tpu.matmul %64, %73, %cst_52 {dimension_numbers = #tpu.dot_dimension_numbers<[1], [0], [0], [1], [0, 0, 1, 1], [], []>} : vector<8x512xbf16>, vector<512x21xbf16>, vector<8x21xf32> -> vector<8x21xf32>
    %c1_53 = arith.constant 1 : index
    %c0_54 = arith.constant 0 : index
    %c0_55 = arith.constant 0 : index
    %75 = vector.load %arg17[%c1_53, %c0_54, %c0_55] : memref<6x1x21xf32, #tpu.memory_space<vmem>>, vector<1x1x21xf32>
    %76 = vector.shape_cast %75 : vector<1x1x21xf32> to vector<1x21xf32>
    %77 = vector.broadcast %76 : vector<1x21xf32> to vector<8x21xf32>
    %78 = arith.addf %74, %77 : vector<8x21xf32>
    %c2 = arith.constant 2 : index
    %c0_56 = arith.constant 0 : index
    %c0_57 = arith.constant 0 : index
    %79 = vector.load %arg16[%c2, %c0_56, %c0_57] : memref<6x512x21xbf16, #tpu.memory_space<vmem>>, vector<1x512x21xbf16>
    %80 = vector.shape_cast %79 : vector<1x512x21xbf16> to vector<512x21xbf16>
    %cst_58 = arith.constant dense<0.000000e+00> : vector<8x21xf32>
    %81 = tpu.matmul %64, %80, %cst_58 {dimension_numbers = #tpu.dot_dimension_numbers<[1], [0], [0], [1], [0, 0, 1, 1], [], []>} : vector<8x512xbf16>, vector<512x21xbf16>, vector<8x21xf32> -> vector<8x21xf32>
    %c2_59 = arith.constant 2 : index
    %c0_60 = arith.constant 0 : index
    %c0_61 = arith.constant 0 : index
    %82 = vector.load %arg17[%c2_59, %c0_60, %c0_61] : memref<6x1x21xf32, #tpu.memory_space<vmem>>, vector<1x1x21xf32>
    %83 = vector.shape_cast %82 : vector<1x1x21xf32> to vector<1x21xf32>
    %84 = vector.broadcast %83 : vector<1x21xf32> to vector<8x21xf32>
    %85 = arith.addf %81, %84 : vector<8x21xf32>
    %c3 = arith.constant 3 : index
    %c0_62 = arith.constant 0 : index
    %c0_63 = arith.constant 0 : index
    %86 = vector.load %arg16[%c3, %c0_62, %c0_63] : memref<6x512x21xbf16, #tpu.memory_space<vmem>>, vector<1x512x21xbf16>
    %87 = vector.shape_cast %86 : vector<1x512x21xbf16> to vector<512x21xbf16>
    %cst_64 = arith.constant dense<0.000000e+00> : vector<8x21xf32>
    %88 = tpu.matmul %64, %87, %cst_64 {dimension_numbers = #tpu.dot_dimension_numbers<[1], [0], [0], [1], [0, 0, 1, 1], [], []>} : vector<8x512xbf16>, vector<512x21xbf16>, vector<8x21xf32> -> vector<8x21xf32>
    %c3_65 = arith.constant 3 : index
    %c0_66 = arith.constant 0 : index
    %c0_67 = arith.constant 0 : index
    %89 = vector.load %arg17[%c3_65, %c0_66, %c0_67] : memref<6x1x21xf32, #tpu.memory_space<vmem>>, vector<1x1x21xf32>
    %90 = vector.shape_cast %89 : vector<1x1x21xf32> to vector<1x21xf32>
    %91 = vector.broadcast %90 : vector<1x21xf32> to vector<8x21xf32>
    %92 = arith.addf %88, %91 : vector<8x21xf32>
    %c4 = arith.constant 4 : index
    %c0_68 = arith.constant 0 : index
    %c0_69 = arith.constant 0 : index
    %93 = vector.load %arg16[%c4, %c0_68, %c0_69] : memref<6x512x21xbf16, #tpu.memory_space<vmem>>, vector<1x512x21xbf16>
    %94 = vector.shape_cast %93 : vector<1x512x21xbf16> to vector<512x21xbf16>
    %cst_70 = arith.constant dense<0.000000e+00> : vector<8x21xf32>
    %95 = tpu.matmul %64, %94, %cst_70 {dimension_numbers = #tpu.dot_dimension_numbers<[1], [0], [0], [1], [0, 0, 1, 1], [], []>} : vector<8x512xbf16>, vector<512x21xbf16>, vector<8x21xf32> -> vector<8x21xf32>
    %c4_71 = arith.constant 4 : index
    %c0_72 = arith.constant 0 : index
    %c0_73 = arith.constant 0 : index
    %96 = vector.load %arg17[%c4_71, %c0_72, %c0_73] : memref<6x1x21xf32, #tpu.memory_space<vmem>>, vector<1x1x21xf32>
    %97 = vector.shape_cast %96 : vector<1x1x21xf32> to vector<1x21xf32>
    %98 = vector.broadcast %97 : vector<1x21xf32> to vector<8x21xf32>
    %99 = arith.addf %95, %98 : vector<8x21xf32>
    %c5 = arith.constant 5 : index
    %c0_74 = arith.constant 0 : index
    %c0_75 = arith.constant 0 : index
    %100 = vector.load %arg16[%c5, %c0_74, %c0_75] : memref<6x512x21xbf16, #tpu.memory_space<vmem>>, vector<1x512x21xbf16>
    %101 = vector.shape_cast %100 : vector<1x512x21xbf16> to vector<512x21xbf16>
    %cst_76 = arith.constant dense<0.000000e+00> : vector<8x21xf32>
    %102 = tpu.matmul %64, %101, %cst_76 {dimension_numbers = #tpu.dot_dimension_numbers<[1], [0], [0], [1], [0, 0, 1, 1], [], []>} : vector<8x512xbf16>, vector<512x21xbf16>, vector<8x21xf32> -> vector<8x21xf32>
    %c5_77 = arith.constant 5 : index
    %c0_78 = arith.constant 0 : index
    %c0_79 = arith.constant 0 : index
    %103 = vector.load %arg17[%c5_77, %c0_78, %c0_79] : memref<6x1x21xf32, #tpu.memory_space<vmem>>, vector<1x1x21xf32>
    %104 = vector.shape_cast %103 : vector<1x1x21xf32> to vector<1x21xf32>
    %105 = vector.broadcast %104 : vector<1x21xf32> to vector<8x21xf32>
    %106 = arith.addf %102, %105 : vector<8x21xf32>
    %107 = arith.mulf %71, %71 : vector<8x21xf32>
    %108 = arith.mulf %85, %85 : vector<8x21xf32>
    %109 = arith.addf %107, %108 : vector<8x21xf32>
    %110 = arith.mulf %99, %99 : vector<8x21xf32>
    %111 = arith.addf %109, %110 : vector<8x21xf32>
    %cst_80 = arith.constant 9.99999996E-13 : f32
    %112 = vector.broadcast %cst_80 : f32 to vector<8x21xf32>
    %113 = arith.addf %111, %112 : vector<8x21xf32>
    %114 = math.rsqrt %113 : vector<8x21xf32>
    %115 = arith.mulf %71, %114 : vector<8x21xf32>
    %116 = arith.mulf %85, %114 : vector<8x21xf32>
    %117 = arith.mulf %99, %114 : vector<8x21xf32>
    %118 = arith.mulf %115, %78 : vector<8x21xf32>
    %119 = arith.mulf %116, %92 : vector<8x21xf32>
    %120 = arith.addf %118, %119 : vector<8x21xf32>
    %121 = arith.mulf %117, %106 : vector<8x21xf32>
    %122 = arith.addf %120, %121 : vector<8x21xf32>
    %123 = arith.mulf %122, %115 : vector<8x21xf32>
    %124 = arith.subf %78, %123 : vector<8x21xf32>
    %125 = arith.mulf %122, %116 : vector<8x21xf32>
    %126 = arith.subf %92, %125 : vector<8x21xf32>
    %127 = arith.mulf %122, %117 : vector<8x21xf32>
    %128 = arith.subf %106, %127 : vector<8x21xf32>
    %129 = arith.mulf %124, %124 : vector<8x21xf32>
    %130 = arith.mulf %126, %126 : vector<8x21xf32>
    %131 = arith.addf %129, %130 : vector<8x21xf32>
    %132 = arith.mulf %128, %128 : vector<8x21xf32>
    %133 = arith.addf %131, %132 : vector<8x21xf32>
    %cst_81 = arith.constant 9.99999996E-13 : f32
    %134 = vector.broadcast %cst_81 : f32 to vector<8x21xf32>
    %135 = arith.addf %133, %134 : vector<8x21xf32>
    %136 = math.rsqrt %135 : vector<8x21xf32>
    %137 = arith.mulf %124, %136 : vector<8x21xf32>
    %138 = arith.mulf %126, %136 : vector<8x21xf32>
    %139 = arith.mulf %128, %136 : vector<8x21xf32>
    %140 = arith.mulf %116, %139 : vector<8x21xf32>
    %141 = arith.mulf %117, %138 : vector<8x21xf32>
    %142 = arith.subf %140, %141 : vector<8x21xf32>
    %143 = arith.mulf %117, %137 : vector<8x21xf32>
    %144 = arith.mulf %115, %139 : vector<8x21xf32>
    %145 = arith.subf %143, %144 : vector<8x21xf32>
    %146 = arith.mulf %115, %138 : vector<8x21xf32>
    %147 = arith.mulf %116, %137 : vector<8x21xf32>
    %148 = arith.subf %146, %147 : vector<8x21xf32>
    %cst_82 = arith.constant 9.99999997E-7 : f32
    %149 = vector.broadcast %cst_82 : f32 to vector<8x21xf32>
    %150 = arith.cmpf olt, %148, %149 : vector<8x21xf32>
    %151 = arith.cmpf ogt, %115, %138 : vector<8x21xf32>
    %cst_83 = arith.constant 0.000000e+00 : f32
    %152 = vector.broadcast %cst_83 : f32 to vector<8x21xf32>
    %153 = arith.subf %152, %138 : vector<8x21xf32>
    %154 = arith.cmpf olt, %115, %153 : vector<8x21xf32>
    %cst_84 = arith.constant 1.000000e+00 : f32
    %155 = vector.broadcast %cst_84 : f32 to vector<8x21xf32>
    %156 = arith.addf %155, %115 : vector<8x21xf32>
    %157 = arith.subf %156, %138 : vector<8x21xf32>
    %158 = arith.subf %157, %148 : vector<8x21xf32>
    %cst_85 = arith.constant 1.000000e+00 : f32
    %159 = vector.broadcast %cst_85 : f32 to vector<8x21xf32>
    %160 = arith.subf %159, %115 : vector<8x21xf32>
    %161 = arith.addf %160, %138 : vector<8x21xf32>
    %162 = arith.subf %161, %148 : vector<8x21xf32>
    %cst_86 = arith.constant 1.000000e+00 : f32
    %163 = vector.broadcast %cst_86 : f32 to vector<8x21xf32>
    %164 = arith.subf %163, %115 : vector<8x21xf32>
    %165 = arith.subf %164, %138 : vector<8x21xf32>
    %166 = arith.addf %165, %148 : vector<8x21xf32>
    %cst_87 = arith.constant 1.000000e+00 : f32
    %167 = vector.broadcast %cst_87 : f32 to vector<8x21xf32>
    %168 = arith.addf %167, %115 : vector<8x21xf32>
    %169 = arith.addf %168, %138 : vector<8x21xf32>
    %170 = arith.addf %169, %148 : vector<8x21xf32>
    %171 = arith.subf %139, %145 : vector<8x21xf32>
    %172 = arith.addf %116, %137 : vector<8x21xf32>
    %173 = arith.addf %142, %117 : vector<8x21xf32>
    %174 = arith.subf %142, %117 : vector<8x21xf32>
    %175 = arith.addf %116, %137 : vector<8x21xf32>
    %176 = arith.addf %139, %145 : vector<8x21xf32>
    %177 = arith.subf %116, %137 : vector<8x21xf32>
    %178 = arith.addf %142, %117 : vector<8x21xf32>
    %179 = arith.addf %139, %145 : vector<8x21xf32>
    %180 = arith.subf %139, %145 : vector<8x21xf32>
    %181 = arith.subf %142, %117 : vector<8x21xf32>
    %182 = arith.subf %116, %137 : vector<8x21xf32>
    %183 = arith.andi %150, %151 : vector<8x21xi1>
    %cst_88 = arith.constant 1.000000e+00 : f32
    %cst_89 = arith.constant 0.000000e+00 : f32
    %184 = vector.broadcast %cst_88 : f32 to vector<8x21xf32>
    %185 = vector.broadcast %cst_89 : f32 to vector<8x21xf32>
    %186 = arith.select %183, %184, %185 : vector<8x21xi1>, vector<8x21xf32>
    %cst_90 = arith.constant dense<true> : vector<8x21xi1>
    %187 = arith.xori %151, %cst_90 : vector<8x21xi1>
    %188 = arith.andi %150, %187 : vector<8x21xi1>
    %cst_91 = arith.constant 1.000000e+00 : f32
    %cst_92 = arith.constant 0.000000e+00 : f32
    %189 = vector.broadcast %cst_91 : f32 to vector<8x21xf32>
    %190 = vector.broadcast %cst_92 : f32 to vector<8x21xf32>
    %191 = arith.select %188, %189, %190 : vector<8x21xi1>, vector<8x21xf32>
    %cst_93 = arith.constant dense<true> : vector<8x21xi1>
    %192 = arith.xori %150, %cst_93 : vector<8x21xi1>
    %193 = arith.andi %192, %154 : vector<8x21xi1>
    %cst_94 = arith.constant 1.000000e+00 : f32
    %cst_95 = arith.constant 0.000000e+00 : f32
    %194 = vector.broadcast %cst_94 : f32 to vector<8x21xf32>
    %195 = vector.broadcast %cst_95 : f32 to vector<8x21xf32>
    %196 = arith.select %193, %194, %195 : vector<8x21xi1>, vector<8x21xf32>
    %cst_96 = arith.constant dense<true> : vector<8x21xi1>
    %197 = arith.xori %150, %cst_96 : vector<8x21xi1>
    %cst_97 = arith.constant dense<true> : vector<8x21xi1>
    %198 = arith.xori %154, %cst_97 : vector<8x21xi1>
    %199 = arith.andi %197, %198 : vector<8x21xi1>
    %cst_98 = arith.constant 1.000000e+00 : f32
    %cst_99 = arith.constant 0.000000e+00 : f32
    %200 = vector.broadcast %cst_98 : f32 to vector<8x21xf32>
    %201 = vector.broadcast %cst_99 : f32 to vector<8x21xf32>
    %202 = arith.select %199, %200, %201 : vector<8x21xi1>, vector<8x21xf32>
    %203 = arith.mulf %158, %186 : vector<8x21xf32>
    %204 = arith.mulf %162, %191 : vector<8x21xf32>
    %205 = arith.addf %203, %204 : vector<8x21xf32>
    %206 = arith.mulf %166, %196 : vector<8x21xf32>
    %207 = arith.addf %205, %206 : vector<8x21xf32>
    %208 = arith.mulf %170, %202 : vector<8x21xf32>
    %209 = arith.addf %207, %208 : vector<8x21xf32>
    %210 = math.rsqrt %209 : vector<8x21xf32>
    %cst_100 = arith.constant 5.000000e-01 : f32
    %211 = vector.broadcast %cst_100 : f32 to vector<8x21xf32>
    %212 = arith.mulf %211, %210 : vector<8x21xf32>
    %213 = arith.mulf %171, %186 : vector<8x21xf32>
    %214 = arith.mulf %174, %191 : vector<8x21xf32>
    %215 = arith.addf %213, %214 : vector<8x21xf32>
    %216 = arith.mulf %177, %196 : vector<8x21xf32>
    %217 = arith.addf %215, %216 : vector<8x21xf32>
    %218 = arith.mulf %170, %202 : vector<8x21xf32>
    %219 = arith.addf %217, %218 : vector<8x21xf32>
    %220 = arith.mulf %219, %212 : vector<8x21xf32>
    %221 = arith.mulf %158, %186 : vector<8x21xf32>
    %222 = arith.mulf %175, %191 : vector<8x21xf32>
    %223 = arith.addf %221, %222 : vector<8x21xf32>
    %224 = arith.mulf %178, %196 : vector<8x21xf32>
    %225 = arith.addf %223, %224 : vector<8x21xf32>
    %226 = arith.mulf %180, %202 : vector<8x21xf32>
    %227 = arith.addf %225, %226 : vector<8x21xf32>
    %228 = arith.mulf %227, %212 : vector<8x21xf32>
    %229 = arith.mulf %172, %186 : vector<8x21xf32>
    %230 = arith.mulf %162, %191 : vector<8x21xf32>
    %231 = arith.addf %229, %230 : vector<8x21xf32>
    %232 = arith.mulf %179, %196 : vector<8x21xf32>
    %233 = arith.addf %231, %232 : vector<8x21xf32>
    %234 = arith.mulf %181, %202 : vector<8x21xf32>
    %235 = arith.addf %233, %234 : vector<8x21xf32>
    %236 = arith.mulf %235, %212 : vector<8x21xf32>
    %237 = arith.mulf %173, %186 : vector<8x21xf32>
    %238 = arith.mulf %176, %191 : vector<8x21xf32>
    %239 = arith.addf %237, %238 : vector<8x21xf32>
    %240 = arith.mulf %166, %196 : vector<8x21xf32>
    %241 = arith.addf %239, %240 : vector<8x21xf32>
    %242 = arith.mulf %182, %202 : vector<8x21xf32>
    %243 = arith.addf %241, %242 : vector<8x21xf32>
    %244 = arith.mulf %243, %212 : vector<8x21xf32>
    %c0_101 = arith.constant 0 : index
    %c0_102 = arith.constant 0 : index
    %245 = vector.load %arg19[%c0_101, %c0_102] : memref<8x21xf32, #tpu.memory_space<vmem>>, vector<8x21xf32>
    tpu.vector_store %arg19[%c0_101, %c0_102], %220 {strides = array<i32>} : memref<8x21xf32, #tpu.memory_space<vmem>>, vector<8x21xf32>,
    %c0_103 = arith.constant 0 : index
    %c0_104 = arith.constant 0 : index
    %246 = vector.load %arg20[%c0_103, %c0_104] : memref<8x21xf32, #tpu.memory_space<vmem>>, vector<8x21xf32>
    tpu.vector_store %arg20[%c0_103, %c0_104], %228 {strides = array<i32>} : memref<8x21xf32, #tpu.memory_space<vmem>>, vector<8x21xf32>,
    %c0_105 = arith.constant 0 : index
    %c0_106 = arith.constant 0 : index
    %247 = vector.load %arg21[%c0_105, %c0_106] : memref<8x21xf32, #tpu.memory_space<vmem>>, vector<8x21xf32>
    tpu.vector_store %arg21[%c0_105, %c0_106], %236 {strides = array<i32>} : memref<8x21xf32, #tpu.memory_space<vmem>>, vector<8x21xf32>,
    %c0_107 = arith.constant 0 : index
    %c0_108 = arith.constant 0 : index
    %248 = vector.load %arg22[%c0_107, %c0_108] : memref<8x21xf32, #tpu.memory_space<vmem>>, vector<8x21xf32>
    tpu.vector_store %arg22[%c0_107, %c0_108], %244 {strides = array<i32>} : memref<8x21xf32, #tpu.memory_space<vmem>>, vector<8x21xf32>,
    return
  }
  func.func @transform_0(%arg0: i32) -> (i32, i32) {
    %c0_i32 = arith.constant 0 : i32
    %c0_i32_0 = arith.constant 0 : i32
    return %arg0, %c0_i32 : i32, i32
  }
  func.func @transform_1(%arg0: i32) -> (i32, i32) {
    %c0_i32 = arith.constant 0 : i32
    %c0_i32_0 = arith.constant 0 : i32
    %c0_i32_1 = arith.constant 0 : i32
    return %c0_i32, %c0_i32_0 : i32, i32
  }
  func.func @transform_2(%arg0: i32) -> (i32, i32) {
    %c0_i32 = arith.constant 0 : i32
    %c0_i32_0 = arith.constant 0 : i32
    %c0_i32_1 = arith.constant 0 : i32
    return %c0_i32, %c0_i32_0 : i32, i32
  }
  func.func @transform_3(%arg0: i32) -> (i32, i32) {
    %c0_i32 = arith.constant 0 : i32
    %c0_i32_0 = arith.constant 0 : i32
    %c0_i32_1 = arith.constant 0 : i32
    return %c0_i32, %c0_i32_0 : i32, i32
  }
  func.func @transform_4(%arg0: i32) -> (i32, i32) {
    %c0_i32 = arith.constant 0 : i32
    %c0_i32_0 = arith.constant 0 : i32
    %c0_i32_1 = arith.constant 0 : i32
    return %c0_i32, %c0_i32_0 : i32, i32
  }
  func.func @transform_5(%arg0: i32) -> (i32, i32) {
    %c0_i32 = arith.constant 0 : i32
    %c0_i32_0 = arith.constant 0 : i32
    %c0_i32_1 = arith.constant 0 : i32
    return %c0_i32, %c0_i32_0 : i32, i32
  }
  func.func @transform_6(%arg0: i32) -> (i32, i32) {
    %c0_i32 = arith.constant 0 : i32
    %c0_i32_0 = arith.constant 0 : i32
    %c0_i32_1 = arith.constant 0 : i32
    return %c0_i32, %c0_i32_0 : i32, i32
  }
  func.func @transform_7(%arg0: i32) -> (i32, i32) {
    %c0_i32 = arith.constant 0 : i32
    %c0_i32_0 = arith.constant 0 : i32
    %c0_i32_1 = arith.constant 0 : i32
    return %c0_i32, %c0_i32_0 : i32, i32
  }
  func.func @transform_8(%arg0: i32) -> (i32, i32) {
    %c0_i32 = arith.constant 0 : i32
    %c0_i32_0 = arith.constant 0 : i32
    %c0_i32_1 = arith.constant 0 : i32
    return %c0_i32, %c0_i32_0 : i32, i32
  }
  func.func @transform_9(%arg0: i32) -> (i32, i32) {
    %c0_i32 = arith.constant 0 : i32
    %c0_i32_0 = arith.constant 0 : i32
    %c0_i32_1 = arith.constant 0 : i32
    return %c0_i32, %c0_i32_0 : i32, i32
  }
  func.func @transform_10(%arg0: i32) -> (i32, i32) {
    %c0_i32 = arith.constant 0 : i32
    %c0_i32_0 = arith.constant 0 : i32
    %c0_i32_1 = arith.constant 0 : i32
    return %c0_i32, %c0_i32_0 : i32, i32
  }
  func.func @transform_11(%arg0: i32) -> (i32, i32) {
    %c0_i32 = arith.constant 0 : i32
    %c0_i32_0 = arith.constant 0 : i32
    %c0_i32_1 = arith.constant 0 : i32
    return %c0_i32, %c0_i32_0 : i32, i32
  }
  func.func @transform_12(%arg0: i32) -> (i32, i32) {
    %c0_i32 = arith.constant 0 : i32
    %c0_i32_0 = arith.constant 0 : i32
    %c0_i32_1 = arith.constant 0 : i32
    return %c0_i32, %c0_i32_0 : i32, i32
  }
  func.func @transform_13(%arg0: i32) -> (i32, i32) {
    %c0_i32 = arith.constant 0 : i32
    %c0_i32_0 = arith.constant 0 : i32
    %c0_i32_1 = arith.constant 0 : i32
    return %c0_i32, %c0_i32_0 : i32, i32
  }
  func.func @transform_14(%arg0: i32) -> (i32, i32) {
    %c0_i32 = arith.constant 0 : i32
    %c0_i32_0 = arith.constant 0 : i32
    %c0_i32_1 = arith.constant 0 : i32
    return %c0_i32, %c0_i32_0 : i32, i32
  }
  func.func @transform_15(%arg0: i32) -> (i32, i32, i32) {
    %c0_i32 = arith.constant 0 : i32
    %c0_i32_0 = arith.constant 0 : i32
    %c0_i32_1 = arith.constant 0 : i32
    %c0_i32_2 = arith.constant 0 : i32
    return %c0_i32, %c0_i32_0, %c0_i32_1 : i32, i32, i32
  }
  func.func @transform_16(%arg0: i32) -> (i32, i32, i32) {
    %c0_i32 = arith.constant 0 : i32
    %c0_i32_0 = arith.constant 0 : i32
    %c0_i32_1 = arith.constant 0 : i32
    %c0_i32_2 = arith.constant 0 : i32
    return %c0_i32, %c0_i32_0, %c0_i32_1 : i32, i32, i32
  }
  func.func @transform_17(%arg0: i32) -> (i32, i32) {
    %c0_i32 = arith.constant 0 : i32
    %c0_i32_0 = arith.constant 0 : i32
    return %arg0, %c0_i32 : i32, i32
  }
  func.func @transform_18(%arg0: i32) -> (i32, i32) {
    %c0_i32 = arith.constant 0 : i32
    %c0_i32_0 = arith.constant 0 : i32
    return %arg0, %c0_i32 : i32, i32
  }
  func.func @transform_19(%arg0: i32) -> (i32, i32) {
    %c0_i32 = arith.constant 0 : i32
    %c0_i32_0 = arith.constant 0 : i32
    return %arg0, %c0_i32 : i32, i32
  }
  func.func @transform_20(%arg0: i32) -> (i32, i32) {
    %c0_i32 = arith.constant 0 : i32
    %c0_i32_0 = arith.constant 0 : i32
    return %arg0, %c0_i32 : i32, i32
  }
  func.func @transform_21(%arg0: i32) -> (i32, i32) {
    %c0_i32 = arith.constant 0 : i32
    %c0_i32_0 = arith.constant 0 : i32
    return %arg0, %c0_i32 : i32, i32
  }
}

</mosaic_0001>

<llo_original>
// kernel: vposer_autoencode.1
$region0: #{vposer_autoencode.1}
  #allocation0 [shape = 'u32[]', space=smem, size = 0x4, offset = 0x4, fixed_abs, tag = 'smem constant byte address 0x4 - core index']
  #allocation1 [shape = 'u32[144,128]{1,0:T(1,128)}', space=vmem, size = 0x12000, scoped, tag = 'internal scratch']
  %s0 = inlined_call_operand.vmem [shape: f32[8,63], index: 0, kind: input, shape index: {}]
  %s1 = inlined_call_operand.vmem [shape: f32[1,63], index: 1, kind: input, shape index: {}]
  %s2 = inlined_call_operand.vmem [shape: f32[1,63], index: 2, kind: input, shape index: {}]
  %s3 = inlined_call_operand.vmem [shape: bf16[63,512], index: 3, kind: input, shape index: {}]
  %s4 = inlined_call_operand.vmem [shape: f32[1,512], index: 4, kind: input, shape index: {}]
  %s5 = inlined_call_operand.vmem [shape: f32[1,512], index: 5, kind: input, shape index: {}]
  %s6 = inlined_call_operand.vmem [shape: f32[1,512], index: 6, kind: input, shape index: {}]
  %s7 = inlined_call_operand.vmem [shape: bf16[512,512], index: 7, kind: input, shape index: {}]
  %s8 = inlined_call_operand.vmem [shape: f32[1,512], index: 8, kind: input, shape index: {}]
  %s9 = inlined_call_operand.vmem [shape: bf16[512,32], index: 9, kind: input, shape index: {}]
  %s10 = inlined_call_operand.vmem [shape: f32[1,32], index: 10, kind: input, shape index: {}]
  %s11 = inlined_call_operand.vmem [shape: bf16[32,512], index: 11, kind: input, shape index: {}]
  %s12 = inlined_call_operand.vmem [shape: f32[1,512], index: 12, kind: input, shape index: {}]
  %s13 = inlined_call_operand.vmem [shape: bf16[512,512], index: 13, kind: input, shape index: {}]
  %s14 = inlined_call_operand.vmem [shape: f32[1,512], index: 14, kind: input, shape index: {}]
  %s15 = inlined_call_operand.vmem [shape: bf16[6,512,21], index: 15, kind: input, shape index: {}]
  %s16 = inlined_call_operand.vmem [shape: f32[6,1,21], index: 16, kind: input, shape index: {}]
  %s17 = inlined_call_operand.hbm [shape: f32[8,32], index: 17, kind: output, shape index: {0}]
  %s18 = inlined_call_operand.vmem [shape: f32[8,21], index: 18, kind: output, shape index: {1}]
  %s19 = inlined_call_operand.vmem [shape: f32[8,21], index: 19, kind: output, shape index: {2}]
  %s20 = inlined_call_operand.vmem [shape: f32[8,21], index: 20, kind: output, shape index: {3}]
  %s21 = inlined_call_operand.vmem [shape: f32[8,21], index: 21, kind: output, shape index: {4}]
  %22 = xla_tuple %s17, %s18, %s19, %s20, %s21
  %s23 = sld [smem:[#allocation0]]
  $region110: #{vposer_autoencode.1} parent=0
    _
  %s25 = ssub.s32 1, %s23
  %s26 = scalar_select 0, %s25, %s23
  $region1: #{vposer_autoencode.1} parent=0
    #allocation2 [shape = 'u8[4096]{0}', space=vmem, size = 0x1000, scoped, tag = 'output window, operand 0, single buffered']
    #allocation3 [shape = 's32[1]{0}', space=sflag, size = 0x4, scoped, tag = 'scoped memory for vposer_autoencode.1']
    %27 = vsyncpa [#allocation3], 0
    // Predicated region
    $region2: #{vposer_autoencode.1} parent=1 // pred_check
      _
    $region3: #{vposer_autoencode.1} parent=1 // pred_check_branch
      %29 = sbr.rel (0) target = $region5
    $region4: #{vposer_autoencode.1} parent=1 // pred_region
      _
    $region5: #{vposer_autoencode.1} parent=1 // pred_fallthru
      _
    // Predicated region
    $region6: #{vposer_autoencode.1} parent=1 // pred_check
      _
    $region7: #{vposer_autoencode.1} parent=1 // pred_check_branch
      %31 = sbr.rel (0) target = $region9
    $region8: #{vposer_autoencode.1} parent=1 // pred_region
      _
    $region9: #{vposer_autoencode.1} parent=1 // pred_fallthru
      _
    // Predicated region
    $region10: #{vposer_autoencode.1} parent=1 // pred_check
      _
    $region11: #{vposer_autoencode.1} parent=1 // pred_check_branch
      %33 = sbr.rel (0) target = $region13
    $region12: #{vposer_autoencode.1} parent=1 // pred_region
      _
    $region13: #{vposer_autoencode.1} parent=1 // pred_fallthru
      _
    // Predicated region
    $region14: #{vposer_autoencode.1} parent=1 // pred_check
      _
    $region15: #{vposer_autoencode.1} parent=1 // pred_check_branch
      %35 = sbr.rel (0) target = $region17
    $region16: #{vposer_autoencode.1} parent=1 // pred_region
      _
    $region17: #{vposer_autoencode.1} parent=1 // pred_fallthru
      _
    // Predicated region
    $region18: #{vposer_autoencode.1} parent=1 // pred_check
      _
    $region19: #{vposer_autoencode.1} parent=1 // pred_check_branch
      %37 = sbr.rel (0) target = $region21
    $region20: #{vposer_autoencode.1} parent=1 // pred_region
      _
    $region21: #{vposer_autoencode.1} parent=1 // pred_fallthru
      _
    // Predicated region
    $region22: #{vposer_autoencode.1} parent=1 // pred_check
      _
    $region23: #{vposer_autoencode.1} parent=1 // pred_check_branch
      %39 = sbr.rel (0) target = $region25
    $region24: #{vposer_autoencode.1} parent=1 // pred_region
      _
    $region25: #{vposer_autoencode.1} parent=1 // pred_fallthru
      _
    // Predicated region
    $region26: #{vposer_autoencode.1} parent=1 // pred_check
      _
    $region27: #{vposer_autoencode.1} parent=1 // pred_check_branch
      %41 = sbr.rel (0) target = $region29
    $region28: #{vposer_autoencode.1} parent=1 // pred_region
      _
    $region29: #{vposer_autoencode.1} parent=1 // pred_fallthru
      _
    // Predicated region
    $region30: #{vposer_autoencode.1} parent=1 // pred_check
      _
    $region31: #{vposer_autoencode.1} parent=1 // pred_check_branch
      %43 = sbr.rel (0) target = $region33
    $region32: #{vposer_autoencode.1} parent=1 // pred_region
      _
    $region33: #{vposer_autoencode.1} parent=1 // pred_fallthru
      _
    // Predicated region
    $region34: #{vposer_autoencode.1} parent=1 // pred_check
      _
    $region35: #{vposer_autoencode.1} parent=1 // pred_check_branch
      %45 = sbr.rel (0) target = $region37
    $region36: #{vposer_autoencode.1} parent=1 // pred_region
      _
    $region37: #{vposer_autoencode.1} parent=1 // pred_fallthru
      _
    // Predicated region
    $region38: #{vposer_autoencode.1} parent=1 // pred_check
      _
    $region39: #{vposer_autoencode.1} parent=1 // pred_check_branch
      %47 = sbr.rel (0) target = $region41
    $region40: #{vposer_autoencode.1} parent=1 // pred_region
      _
    $region41: #{vposer_autoencode.1} parent=1 // pred_fallthru
      _
    // Predicated region
    $region42: #{vposer_autoencode.1} parent=1 // pred_check
      _
    $region43: #{vposer_autoencode.1} parent=1 // pred_check_branch
      %49 = sbr.rel (0) target = $region45
    $region44: #{vposer_autoencode.1} parent=1 // pred_region
      _
    $region45: #{vposer_autoencode.1} parent=1 // pred_fallthru
      _
    // Predicated region
    $region46: #{vposer_autoencode.1} parent=1 // pred_check
      _
    $region47: #{vposer_autoencode.1} parent=1 // pred_check_branch
      %51 = sbr.rel (0) target = $region49
    $region48: #{vposer_autoencode.1} parent=1 // pred_region
      _
    $region49: #{vposer_autoencode.1} parent=1 // pred_fallthru
      _
    // Predicated region
    $region50: #{vposer_autoencode.1} parent=1 // pred_check
      _
    $region51: #{vposer_autoencode.1} parent=1 // pred_check_branch
      %53 = sbr.rel (0) target = $region53
    $region52: #{vposer_autoencode.1} parent=1 // pred_region
      _
    $region53: #{vposer_autoencode.1} parent=1 // pred_fallthru
      _
    // Predicated region
    $region54: #{vposer_autoencode.1} parent=1 // pred_check
      _
    $region55: #{vposer_autoencode.1} parent=1 // pred_check_branch
      %55 = sbr.rel (0) target = $region57
    $region56: #{vposer_autoencode.1} parent=1 // pred_region
      _
    $region57: #{vposer_autoencode.1} parent=1 // pred_fallthru
      _
    // Predicated region
    $region58: #{vposer_autoencode.1} parent=1 // pred_check
      _
    $region59: #{vposer_autoencode.1} parent=1 // pred_check_branch
      %57 = sbr.rel (0) target = $region61
    $region60: #{vposer_autoencode.1} parent=1 // pred_region
      _
    $region61: #{vposer_autoencode.1} parent=1 // pred_fallthru
      _
    // Predicated region
    $region62: #{vposer_autoencode.1} parent=1 // pred_check
      _
    $region63: #{vposer_autoencode.1} parent=1 // pred_check_branch
      %59 = sbr.rel (0) target = $region65
    $region64: #{vposer_autoencode.1} parent=1 // pred_region
      _
    $region65: #{vposer_autoencode.1} parent=1 // pred_fallthru
      _
    // Predicated region
    $region66: #{vposer_autoencode.1} parent=1 // pred_check
      _
    $region67: #{vposer_autoencode.1} parent=1 // pred_check_branch
      %61 = sbr.rel (0) target = $region69
    $region68: #{vposer_autoencode.1} parent=1 // pred_region
      _
    $region69: #{vposer_autoencode.1} parent=1 // pred_fallthru
      _
    %v63 = vld [vmem:[%s0] sm:$0xff]
    %v64 = vld [vmem:[%s1] sm:$0x1]
    %v66 = vlaneseq
    %v67 = vshrl.u32 %v66, 7
    %v68 = vsub.s32 0, %v67
    %v69 = vrot.slane %v64, %v68
    %v71 = vmul.f32 %v63, %v69
    %v72 = vld [vmem:[%s2] sm:$0x1]
    %v74 = vlaneseq
    %v75 = vshrl.u32 %v74, 7
    %v76 = vsub.s32 0, %v75
    %v77 = vrot.slane %v72, %v76
    %v79 = vadd.f32 %v71, %v77
    %v80 = vpack.c.bf16 %v79, %v79
    %v81 = vld [vmem:[%s3] sm:$0xff]
    %v82 = vld [vmem:[%s3 + $0x8] sm:$0xff]
    %v83 = vld [vmem:[%s3 + $0x10] sm:$0xff]
    %v84 = vld [vmem:[%s3 + $0x18] sm:$0xff]
    %v85 = vld [vmem:[%s3 + $0x20] sm:$0xff]
    %v86 = vld [vmem:[%s3 + $0x28] sm:$0xff]
    %v87 = vld [vmem:[%s3 + $0x30] sm:$0xff]
    %v88 = vld [vmem:[%s3 + $0x38] sm:$0xff]
    %v89 = vld [vmem:[%s3 + $0x40] sm:$0xff]
    %v90 = vld [vmem:[%s3 + $0x48] sm:$0xff]
    %v91 = vld [vmem:[%s3 + $0x50] sm:$0xff]
    %v92 = vld [vmem:[%s3 + $0x58] sm:$0xff]
    %v93 = vld [vmem:[%s3 + $0x60] sm:$0xff]
    %v94 = vld [vmem:[%s3 + $0x68] sm:$0xff]
    %v95 = vld [vmem:[%s3 + $0x70] sm:$0xff]
    %v96 = vld [vmem:[%s3 + $0x78] sm:$0xff]
    %v97 = vld [vmem:[%s4] sm:$0xf]
    %v99 = vlaneseq
    %v100 = vshrl.u32 %v99, 7
    %v101 = vsub.s32 0, %v100
    %v102 = vrot.slane %v97, %v101
    %v103 = vlaneseq
    %v104 = vshrl.u32 %v103, 7
    %v105 = vsub.s32 1, %v104
    %v106 = vrot.slane %v97, %v105
    %v107 = vlaneseq
    %v108 = vshrl.u32 %v107, 7
    %v109 = vsub.s32 2, %v108
    %v110 = vrot.slane %v97, %v109
    %v111 = vlaneseq
    %v112 = vshrl.u32 %v111, 7
    %v113 = vsub.s32 3, %v112
    %v114 = vrot.slane %v97, %v113
    %v135 = vunpack.c.l.b16 %v81
    %v136 = vunpack.c.h.b16 %v81
    %v137 = vunpack.c.l.b16 %v82
    %v138 = vunpack.c.h.b16 %v82
    %v139 = vunpack.c.l.b16 %v83
    %v140 = vunpack.c.h.b16 %v83
    %v141 = vunpack.c.l.b16 %v84
    %v142 = vunpack.c.h.b16 %v84
    %v143 = vunpack.c.l.b16 %v85
    %v144 = vunpack.c.h.b16 %v85
    %v145 = vunpack.c.l.b16 %v86
    %v146 = vunpack.c.h.b16 %v86
    %v147 = vunpack.c.l.b16 %v87
    %v148 = vunpack.c.h.b16 %v87
    %v149 = vunpack.c.l.b16 %v88
    %v150 = vunpack.c.h.b16 %v88
    %v151 = vunpack.c.l.b16 %v89
    %v152 = vunpack.c.h.b16 %v89
    %v153 = vunpack.c.l.b16 %v90
    %v154 = vunpack.c.h.b16 %v90
    %v155 = vunpack.c.l.b16 %v91
    %v156 = vunpack.c.h.b16 %v91
    %v157 = vunpack.c.l.b16 %v92
    %v158 = vunpack.c.h.b16 %v92
    %v159 = vunpack.c.l.b16 %v93
    %v160 = vunpack.c.h.b16 %v93
    %v161 = vunpack.c.l.b16 %v94
    %v162 = vunpack.c.h.b16 %v94
    %v163 = vunpack.c.l.b16 %v95
    %v164 = vunpack.c.h.b16 %v95
    %v165 = vunpack.c.l.b16 %v96
    %v166 = vunpack.c.h.b16 %v96
    %v167 = vpack.c.b16 %v139, %v135
    %v168 = vpack.c.b16 %v140, %v136
    %v169 = vpack.c.b16 %v141, %v137
    %v170 = vpack.c.b16 %v142, %v138
    %v171 = vpack.c.b16 %v147, %v143
    %v172 = vpack.c.b16 %v148, %v144
    %v173 = vpack.c.b16 %v149, %v145
    %v174 = vpack.c.b16 %v150, %v146
    %v175 = vpack.c.b16 %v155, %v151
    %v176 = vpack.c.b16 %v156, %v152
    %v177 = vpack.c.b16 %v157, %v153
    %v178 = vpack.c.b16 %v158, %v154
    %v179 = vpack.c.b16 %v163, %v159
    %v180 = vpack.c.b16 %v164, %v160
    %v181 = vpack.c.b16 %v165, %v161
    %v182 = vpack.c.b16 %v166, %v162
    %vm195 = vcmask 515072
    %v197 = vsel %vm195, %v80, 0
    %vm199 = vcmask 1046528
    %vm200 = vcmask 1047552
    %v201 = vsel %vm199, 4294967295, 65535
    %v202 = vsel %vm200, %v201, 0
    %v204 = vand.u32 %v179, %v202
    %v207 = vand.u32 %v180, %v202
    %v210 = vand.u32 %v181, %v202
    %v213 = vand.u32 %v182, %v202
    %215 = vmatprep.subr.bf16.mxu0 %v168
    %216 = vmatpush1.bf16.msra.mxu0 %v167
    %217 = vmatprep.subr.bf16.mxu0 %v172
    %218 = vmatpush1.bf16.msra.mxu0 %v171
    %219 = vmatprep.subr.bf16.mxu0 %v176
    %220 = vmatpush1.bf16.msra.mxu0 %v175
    %221 = vmatprep.subr.bf16.mxu0 %v207
    %222 = vmatpush1.bf16.msra.mxu0 %v204
    %223 = vmatprep.subr.bf16.mxu0 0
    %224 = vmatpush1.bf16.msra.mxu0 0
    %225 = vmatprep.subr.bf16.mxu0 0
    %226 = vmatpush1.bf16.msra.mxu0 0
    %227 = vmatprep.subr.bf16.mxu0 0
    %228 = vmatpush1.bf16.msra.mxu0 0
    %229 = vmatprep.subr.bf16.mxu0 0
    %230 = vmatpush1.bf16.msra.mxu0 0
    %231 = vmatprep.subr.bf16.mxu0 0
    %232 = vmatpush1.bf16.msra.mxu0 0
    %233 = vmatprep.subr.bf16.mxu0 0
    %234 = vmatpush1.bf16.msra.mxu0 0
    %235 = vmatprep.subr.bf16.mxu0 0
    %236 = vmatpush1.bf16.msra.mxu0 0
    %237 = vmatprep.subr.bf16.mxu0 0
    %238 = vmatpush1.bf16.msra.mxu0 0
    %239 = vmatprep.subr.bf16.mxu0 0
    %240 = vmatpush1.bf16.msra.mxu0 0
    %241 = vmatprep.subr.bf16.mxu0 0
    %242 = vmatpush1.bf16.msra.mxu0 0
    %243 = vmatprep.subr.bf16.mxu0 0
    %244 = vmatpush1.bf16.msra.mxu0 0
    %245 = vmatprep.subr.bf16.mxu0 0
    %246 = vmatpush1.bf16.msra.mxu0 0
    %247 = vmatprep.mubr.bf16.mxu0 0
    %248 = vmatmul.mubr.bf16.gmra.mrb[0].mxu0 %v197
    %v249 = vpop.f32.mrb[0].mxu0
    %v250 = vadd.f32 %v102, %v249
    %v251 = vpop.f32.mrb[0].mxu0
    %v252 = vadd.f32 %v106, %v251
    %v253 = vpop.f32.mrb[0].mxu0
    %v254 = vpop.f32.mrb[0].mxu0
    %255 = vdwg.mxu0
    %256 = vmatprep.subr.bf16.mxu0 %v170
    %257 = vmatpush1.bf16.msra.mxu0 %v169
    %258 = vmatprep.subr.bf16.mxu0 %v174
    %259 = vmatpush1.bf16.msra.mxu0 %v173
    %260 = vmatprep.subr.bf16.mxu0 %v178
    %261 = vmatpush1.bf16.msra.mxu0 %v177
    %262 = vmatprep.subr.bf16.mxu0 %v213
    %263 = vmatpush1.bf16.msra.mxu0 %v210
    %264 = vmatprep.subr.bf16.mxu0 0
    %265 = vmatpush1.bf16.msra.mxu0 0
    %266 = vmatprep.subr.bf16.mxu0 0
    %267 = vmatpush1.bf16.msra.mxu0 0
    %268 = vmatprep.subr.bf16.mxu0 0
    %269 = vmatpush1.bf16.msra.mxu0 0
    %270 = vmatprep.subr.bf16.mxu0 0
    %271 = vmatpush1.bf16.msra.mxu0 0
    %272 = vmatprep.subr.bf16.mxu0 0
    %273 = vmatpush1.bf16.msra.mxu0 0
    %274 = vmatprep.subr.bf16.mxu0 0
    %275 = vmatpush1.bf16.msra.mxu0 0
    %276 = vmatprep.subr.bf16.mxu0 0
    %277 = vmatpush1.bf16.msra.mxu0 0
    %278 = vmatprep.subr.bf16.mxu0 0
    %279 = vmatpush1.bf16.msra.mxu0 0
    %280 = vmatprep.subr.bf16.mxu0 0
    %281 = vmatpush1.bf16.msra.mxu0 0
    %282 = vmatprep.subr.bf16.mxu0 0
    %283 = vmatpush1.bf16.msra.mxu0 0
    %284 = vmatprep.subr.bf16.mxu0 0
    %285 = vmatpush1.bf16.msra.mxu0 0
    %286 = vmatprep.subr.bf16.mxu0 0
    %287 = vmatpush1.bf16.msra.mxu0 0
    %288 = vmatprep.mubr.bf16.mxu0 0
    %289 = vmatmul.mubr.bf16.gmra.mrb[0].mxu0 %v197
    %v290 = vpop.f32.mrb[0].mxu0
    %v291 = vadd.f32 %v110, %v290
    %v292 = vpop.f32.mrb[0].mxu0
    %v293 = vadd.f32 %v114, %v292
    %v294 = vpop.f32.mrb[0].mxu0
    %v295 = vpop.f32.mrb[0].mxu0
    %296 = vdwg.mxu0
    %vm297 = vcmp.ge.f32.partialorder %v250, 0.0
    %vm298 = vcmp.ge.f32.partialorder %v252, 0.0
    %vm299 = vcmp.ge.f32.partialorder %v291, 0.0
    %vm300 = vcmp.ge.f32.partialorder %v293, 0.0
    %v301 = vmul.f32 %v250, 0.2
    %v302 = vmul.f32 %v252, 0.2
    %v303 = vmul.f32 %v291, 0.2
    %v304 = vmul.f32 %v293, 0.2
    %v305 = vsel %vm297, %v250, %v301
    %v306 = vsel %vm298, %v252, %v302
    %v307 = vsel %vm299, %v291, %v303
    %v308 = vsel %vm300, %v293, %v304
    %v309 = vld [vmem:[%s5] sm:$0xf]
    %v311 = vlaneseq
    %v312 = vshrl.u32 %v311, 7
    %v313 = vsub.s32 0, %v312
    %v314 = vrot.slane %v309, %v313
    %v315 = vlaneseq
    %v316 = vshrl.u32 %v315, 7
    %v317 = vsub.s32 1, %v316
    %v318 = vrot.slane %v309, %v317
    %v319 = vlaneseq
    %v320 = vshrl.u32 %v319, 7
    %v321 = vsub.s32 2, %v320
    %v322 = vrot.slane %v309, %v321
    %v323 = vlaneseq
    %v324 = vshrl.u32 %v323, 7
    %v325 = vsub.s32 3, %v324
    %v326 = vrot.slane %v309, %v325
    %v331 = vmul.f32 %v305, %v314
    %v332 = vmul.f32 %v306, %v318
    %v333 = vmul.f32 %v307, %v322
    %v334 = vmul.f32 %v308, %v326
    %v335 = vld [vmem:[%s6] sm:$0xf]
    %v337 = vlaneseq
    %v338 = vshrl.u32 %v337, 7
    %v339 = vsub.s32 0, %v338
    %v340 = vrot.slane %v335, %v339
    %v341 = vlaneseq
    %v342 = vshrl.u32 %v341, 7
    %v343 = vsub.s32 1, %v342
    %v344 = vrot.slane %v335, %v343
    %v345 = vlaneseq
    %v346 = vshrl.u32 %v345, 7
    %v347 = vsub.s32 2, %v346
    %v348 = vrot.slane %v335, %v347
    %v349 = vlaneseq
    %v350 = vshrl.u32 %v349, 7
    %v351 = vsub.s32 3, %v350
    %v352 = vrot.slane %v335, %v351
    %v357 = vadd.f32 %v331, %v340
    %v358 = vadd.f32 %v332, %v344
    %v359 = vadd.f32 %v333, %v348
    %v360 = vadd.f32 %v334, %v352
    %v361 = vpack.c.bf16 %v357, %v357
    %v362 = vpack.c.bf16 %v358, %v358
    %v363 = vpack.c.bf16 %v359, %v359
    %v364 = vpack.c.bf16 %v360, %v360
    %v365 = vld [vmem:[%s7] sm:$0xff]
    %v366 = vld [vmem:[%s7 + $0x8] sm:$0xff]
    %v367 = vld [vmem:[%s7 + $0x10] sm:$0xff]
    %v368 = vld [vmem:[%s7 + $0x18] sm:$0xff]
    %v369 = vld [vmem:[%s7 + $0x20] sm:$0xff]
    %v370 = vld [vmem:[%s7 + $0x28] sm:$0xff]
    %v371 = vld [vmem:[%s7 + $0x30] sm:$0xff]
    %v372 = vld [vmem:[%s7 + $0x38] sm:$0xff]
    %v373 = vld [vmem:[%s7 + $0x40] sm:$0xff]
    %v374 = vld [vmem:[%s7 + $0x48] sm:$0xff]
    %v375 = vld [vmem:[%s7 + $0x50] sm:$0xff]
    %v376 = vld [vmem:[%s7 + $0x58] sm:$0xff]
    %v377 = vld [vmem:[%s7 + $0x60] sm:$0xff]
    %v378 = vld [vmem:[%s7 + $0x68] sm:$0xff]
    %v379 = vld [vmem:[%s7 + $0x70] sm:$0xff]
    %v380 = vld [vmem:[%s7 + $0x78] sm:$0xff]
    %v381 = vld [vmem:[%s7 + $0x80] sm:$0xff]
    %v382 = vld [vmem:[%s7 + $0x88] sm:$0xff]
    %v383 = vld [vmem:[%s7 + $0x90] sm:$0xff]
    %v384 = vld [vmem:[%s7 + $0x98] sm:$0xff]
    %v385 = vld [vmem:[%s7 + $0xa0] sm:$0xff]
    %v386 = vld [vmem:[%s7 + $0xa8] sm:$0xff]
    %v387 = vld [vmem:[%s7 + $0xb0] sm:$0xff]
    %v388 = vld [vmem:[%s7 + $0xb8] sm:$0xff]
    %v389 = vld [vmem:[%s7 + $0xc0] sm:$0xff]
    %v390 = vld [vmem:[%s7 + $0xc8] sm:$0xff]
    %v391 = vld [vmem:[%s7 + $0xd0] sm:$0xff]
    %v392 = vld [vmem:[%s7 + $0xd8] sm:$0xff]
    %v393 = vld [vmem:[%s7 + $0xe0] sm:$0xff]
    %v394 = vld [vmem:[%s7 + $0xe8] sm:$0xff]
    %v395 = vld [vmem:[%s7 + $0xf0] sm:$0xff]
    %v396 = vld [vmem:[%s7 + $0xf8] sm:$0xff]
    %v397 = vld [vmem:[%s7 + $0x100] sm:$0xff]
    %v398 = vld [vmem:[%s7 + $0x108] sm:$0xff]
    %v399 = vld [vmem:[%s7 + $0x110] sm:$0xff]
    %v400 = vld [vmem:[%s7 + $0x118] sm:$0xff]
    %v401 = vld [vmem:[%s7 + $0x120] sm:$0xff]
    %v402 = vld [vmem:[%s7 + $0x128] sm:$0xff]
    %v403 = vld [vmem:[%s7 + $0x130] sm:$0xff]
    %v404 = vld [vmem:[%s7 + $0x138] sm:$0xff]
    %v405 = vld [vmem:[%s7 + $0x140] sm:$0xff]
    %v406 = vld [vmem:[%s7 + $0x148] sm:$0xff]
    %v407 = vld [vmem:[%s7 + $0x150] sm:$0xff]
    %v408 = vld [vmem:[%s7 + $0x158] sm:$0xff]
    %v409 = vld [vmem:[%s7 + $0x160] sm:$0xff]
    %v410 = vld [vmem:[%s7 + $0x168] sm:$0xff]
    %v411 = vld [vmem:[%s7 + $0x170] sm:$0xff]
    %v412 = vld [vmem:[%s7 + $0x178] sm:$0xff]
    %v413 = vld [vmem:[%s7 + $0x180] sm:$0xff]
    %v414 = vld [vmem:[%s7 + $0x188] sm:$0xff]
    %v415 = vld [vmem:[%s7 + $0x190] sm:$0xff]
    %v416 = vld [vmem:[%s7 + $0x198] sm:$0xff]
    %v417 = vld [vmem:[%s7 + $0x1a0] sm:$0xff]
    %v418 = vld [vmem:[%s7 + $0x1a8] sm:$0xff]
    %v419 = vld [vmem:[%s7 + $0x1b0] sm:$0xff]
    %v420 = vld [vmem:[%s7 + $0x1b8] sm:$0xff]
    %v421 = vld [vmem:[%s7 + $0x1c0] sm:$0xff]
    %v422 = vld [vmem:[%s7 + $0x1c8] sm:$0xff]
    %v423 = vld [vmem:[%s7 + $0x1d0] sm:$0xff]
    %v424 = vld [vmem:[%s7 + $0x1d8] sm:$0xff]
    %v425 = vld [vmem:[%s7 + $0x1e0] sm:$0xff]
    %v426 = vld [vmem:[%s7 + $0x1e8] sm:$0xff]
    %v427 = vld [vmem:[%s7 + $0x1f0] sm:$0xff]
    %v428 = vld [vmem:[%s7 + $0x1f8] sm:$0xff]
    %v429 = vld [vmem:[%s7 + $0x200] sm:$0xff]
    %v430 = vld [vmem:[%s7 + $0x208] sm:$0xff]
    %v431 = vld [vmem:[%s7 + $0x210] sm:$0xff]
    %v432 = vld [vmem:[%s7 + $0x218] sm:$0xff]
    %v433 = vld [vmem:[%s7 + $0x220] sm:$0xff]
    %v434 = vld [vmem:[%s7 + $0x228] sm:$0xff]
    %v435 = vld [vmem:[%s7 + $0x230] sm:$0xff]
    %v436 = vld [vmem:[%s7 + $0x238] sm:$0xff]
    %v437 = vld [vmem:[%s7 + $0x240] sm:$0xff]
    %v438 = vld [vmem:[%s7 + $0x248] sm:$0xff]
    %v439 = vld [vmem:[%s7 + $0x250] sm:$0xff]
    %v440 = vld [vmem:[%s7 + $0x258] sm:$0xff]
    %v441 = vld [vmem:[%s7 + $0x260] sm:$0xff]
    %v442 = vld [vmem:[%s7 + $0x268] sm:$0xff]
    %v443 = vld [vmem:[%s7 + $0x270] sm:$0xff]
    %v444 = vld [vmem:[%s7 + $0x278] sm:$0xff]
    %v445 = vld [vmem:[%s7 + $0x280] sm:$0xff]
    %v446 = vld [vmem:[%s7 + $0x288] sm:$0xff]
    %v447 = vld [vmem:[%s7 + $0x290] sm:$0xff]
    %v448 = vld [vmem:[%s7 + $0x298] sm:$0xff]
    %v449 = vld [vmem:[%s7 + $0x2a0] sm:$0xff]
    %v450 = vld [vmem:[%s7 + $0x2a8] sm:$0xff]
    %v451 = vld [vmem:[%s7 + $0x2b0] sm:$0xff]
    %v452 = vld [vmem:[%s7 + $0x2b8] sm:$0xff]
    %v453 = vld [vmem:[%s7 + $0x2c0] sm:$0xff]
    %v454 = vld [vmem:[%s7 + $0x2c8] sm:$0xff]
    %v455 = vld [vmem:[%s7 + $0x2d0] sm:$0xff]
    %v456 = vld [vmem:[%s7 + $0x2d8] sm:$0xff]
    %v457 = vld [vmem:[%s7 + $0x2e0] sm:$0xff]
    %v458 = vld [vmem:[%s7 + $0x2e8] sm:$0xff]
    %v459 = vld [vmem:[%s7 + $0x2f0] sm:$0xff]
    %v460 = vld [vmem:[%s7 + $0x2f8] sm:$0xff]
    %v461 = vld [vmem:[%s7 + $0x300] sm:$0xff]
    %v462 = vld [vmem:[%s7 + $0x308] sm:$0xff]
    %v463 = vld [vmem:[%s7 + $0x310] sm:$0xff]
    %v464 = vld [vmem:[%s7 + $0x318] sm:$0xff]
    %v465 = vld [vmem:[%s7 + $0x320] sm:$0xff]
    %v466 = vld [vmem:[%s7 + $0x328] sm:$0xff]
    %v467 = vld [vmem:[%s7 + $0x330] sm:$0xff]
    %v468 = vld [vmem:[%s7 + $0x338] sm:$0xff]
    %v469 = vld [vmem:[%s7 + $0x340] sm:$0xff]
    %v470 = vld [vmem:[%s7 + $0x348] sm:$0xff]
    %v471 = vld [vmem:[%s7 + $0x350] sm:$0xff]
    %v472 = vld [vmem:[%s7 + $0x358] sm:$0xff]
    %v473 = vld [vmem:[%s7 + $0x360] sm:$0xff]
    %v474 = vld [vmem:[%s7 + $0x368] sm:$0xff]
    %v475 = vld [vmem:[%s7 + $0x370] sm:$0xff]
    %v476 = vld [vmem:[%s7 + $0x378] sm:$0xff]
    %v477 = vld [vmem:[%s7 + $0x380] sm:$0xff]
    %v478 = vld [vmem:[%s7 + $0x388] sm:$0xff]
    %v479 = vld [vmem:[%s7 + $0x390] sm:$0xff]
    %v480 = vld [vmem:[%s7 + $0x398] sm:$0xff]
    %v481 = vld [vmem:[%s7 + $0x3a0] sm:$0xff]
    %v482 = vld [vmem:[%s7 + $0x3a8] sm:$0xff]
    %v483 = vld [vmem:[%s7 + $0x3b0] sm:$0xff]
    %v484 = vld [vmem:[%s7 + $0x3b8] sm:$0xff]
    %v485 = vld [vmem:[%s7 + $0x3c0] sm:$0xff]
    %v486 = vld [vmem:[%s7 + $0x3c8] sm:$0xff]
    %v487 = vld [vmem:[%s7 + $0x3d0] sm:$0xff]
    %v488 = vld [vmem:[%s7 + $0x3d8] sm:$0xff]
    %v489 = vld [vmem:[%s7 + $0x3e0] sm:$0xff]
    %v490 = vld [vmem:[%s7 + $0x3e8] sm:$0xff]
    %v491 = vld [vmem:[%s7 + $0x3f0] sm:$0xff]
    %v492 = vld [vmem:[%s7 + $0x3f8] sm:$0xff]
    %v493 = vld [vmem:[%s8] sm:$0xf]
    %v495 = vlaneseq
    %v496 = vshrl.u32 %v495, 7
    %v497 = vsub.s32 0, %v496
    %v498 = vrot.slane %v493, %v497
    %v499 = vlaneseq
    %v500 = vshrl.u32 %v499, 7
    %v501 = vsub.s32 1, %v500
    %v502 = vrot.slane %v493, %v501
    %v503 = vlaneseq
    %v504 = vshrl.u32 %v503, 7
    %v505 = vsub.s32 2, %v504
    %v506 = vrot.slane %v493, %v505
    %v507 = vlaneseq
    %v508 = vshrl.u32 %v507, 7
    %v509 = vsub.s32 3, %v508
    %v510 = vrot.slane %v493, %v509
    %v643 = vunpack.c.l.b16 %v365
    %v644 = vunpack.c.h.b16 %v365
    %v645 = vunpack.c.l.b16 %v366
    %v646 = vunpack.c.h.b16 %v366
    %v647 = vunpack.c.l.b16 %v367
    %v648 = vunpack.c.h.b16 %v367
    %v649 = vunpack.c.l.b16 %v368
    %v650 = vunpack.c.h.b16 %v368
    %v651 = vunpack.c.l.b16 %v369
    %v652 = vunpack.c.h.b16 %v369
    %v653 = vunpack.c.l.b16 %v370
    %v654 = vunpack.c.h.b16 %v370
    %v655 = vunpack.c.l.b16 %v371
    %v656 = vunpack.c.h.b16 %v371
    %v657 = vunpack.c.l.b16 %v372
    %v658 = vunpack.c.h.b16 %v372
    %v659 = vunpack.c.l.b16 %v373
    %v660 = vunpack.c.h.b16 %v373
    %v661 = vunpack.c.l.b16 %v374
    %v662 = vunpack.c.h.b16 %v374
    %v663 = vunpack.c.l.b16 %v375
    %v664 = vunpack.c.h.b16 %v375
    %v665 = vunpack.c.l.b16 %v376
    %v666 = vunpack.c.h.b16 %v376
    %v667 = vunpack.c.l.b16 %v377
    %v668 = vunpack.c.h.b16 %v377
    %v669 = vunpack.c.l.b16 %v378
    %v670 = vunpack.c.h.b16 %v378
    %v671 = vunpack.c.l.b16 %v379
    %v672 = vunpack.c.h.b16 %v379
    %v673 = vunpack.c.l.b16 %v380
    %v674 = vunpack.c.h.b16 %v380
    %v675 = vunpack.c.l.b16 %v381
    %v676 = vunpack.c.h.b16 %v381
    %v677 = vunpack.c.l.b16 %v382
    %v678 = vunpack.c.h.b16 %v382
    %v679 = vunpack.c.l.b16 %v383
    %v680 = vunpack.c.h.b16 %v383
    %v681 = vunpack.c.l.b16 %v384
    %v682 = vunpack.c.h.b16 %v384
    %v683 = vunpack.c.l.b16 %v385
    %v684 = vunpack.c.h.b16 %v385
    %v685 = vunpack.c.l.b16 %v386
    %v686 = vunpack.c.h.b16 %v386
    %v687 = vunpack.c.l.b16 %v387
    %v688 = vunpack.c.h.b16 %v387
    %v689 = vunpack.c.l.b16 %v388
    %v690 = vunpack.c.h.b16 %v388
    %v691 = vunpack.c.l.b16 %v389
    %v692 = vunpack.c.h.b16 %v389
    %v693 = vunpack.c.l.b16 %v390
    %v694 = vunpack.c.h.b16 %v390
    %v695 = vunpack.c.l.b16 %v391
    %v696 = vunpack.c.h.b16 %v391
    %v697 = vunpack.c.l.b16 %v392
    %v698 = vunpack.c.h.b16 %v392
    %v699 = vunpack.c.l.b16 %v393
    %v700 = vunpack.c.h.b16 %v393
    %v701 = vunpack.c.l.b16 %v394
    %v702 = vunpack.c.h.b16 %v394
    %v703 = vunpack.c.l.b16 %v395
    %v704 = vunpack.c.h.b16 %v395
    %v705 = vunpack.c.l.b16 %v396
    %v706 = vunpack.c.h.b16 %v396
    %v707 = vunpack.c.l.b16 %v397
    %v708 = vunpack.c.h.b16 %v397
    %v709 = vunpack.c.l.b16 %v398
    %v710 = vunpack.c.h.b16 %v398
    %v711 = vunpack.c.l.b16 %v399
    %v712 = vunpack.c.h.b16 %v399
    %v713 = vunpack.c.l.b16 %v400
    %v714 = vunpack.c.h.b16 %v400
    %v715 = vunpack.c.l.b16 %v401
    %v716 = vunpack.c.h.b16 %v401
    %v717 = vunpack.c.l.b16 %v402
    %v718 = vunpack.c.h.b16 %v402
    %v719 = vunpack.c.l.b16 %v403
    %v720 = vunpack.c.h.b16 %v403
    %v721 = vunpack.c.l.b16 %v404
    %v722 = vunpack.c.h.b16 %v404
    %v723 = vunpack.c.l.b16 %v405
    %v724 = vunpack.c.h.b16 %v405
    %v725 = vunpack.c.l.b16 %v406
    %v726 = vunpack.c.h.b16 %v406
    %v727 = vunpack.c.l.b16 %v407
    %v728 = vunpack.c.h.b16 %v407
    %v729 = vunpack.c.l.b16 %v408
    %v730 = vunpack.c.h.b16 %v408
    %v731 = vunpack.c.l.b16 %v409
    %v732 = vunpack.c.h.b16 %v409
    %v733 = vunpack.c.l.b16 %v410
    %v734 = vunpack.c.h.b16 %v410
    %v735 = vunpack.c.l.b16 %v411
    %v736 = vunpack.c.h.b16 %v411
    %v737 = vunpack.c.l.b16 %v412
    %v738 = vunpack.c.h.b16 %v412
    %v739 = vunpack.c.l.b16 %v413
    %v740 = vunpack.c.h.b16 %v413
    %v741 = vunpack.c.l.b16 %v414
    %v742 = vunpack.c.h.b16 %v414
    %v743 = vunpack.c.l.b16 %v415
    %v744 = vunpack.c.h.b16 %v415
    %v745 = vunpack.c.l.b16 %v416
    %v746 = vunpack.c.h.b16 %v416
    %v747 = vunpack.c.l.b16 %v417
    %v748 = vunpack.c.h.b16 %v417
    %v749 = vunpack.c.l.b16 %v418
    %v750 = vunpack.c.h.b16 %v418
    %v751 = vunpack.c.l.b16 %v419
    %v752 = vunpack.c.h.b16 %v419
    %v753 = vunpack.c.l.b16 %v420
    %v754 = vunpack.c.h.b16 %v420
    %v755 = vunpack.c.l.b16 %v421
    %v756 = vunpack.c.h.b16 %v421
    %v757 = vunpack.c.l.b16 %v422
    %v758 = vunpack.c.h.b16 %v422
    %v759 = vunpack.c.l.b16 %v423
    %v760 = vunpack.c.h.b16 %v423
    %v761 = vunpack.c.l.b16 %v424
    %v762 = vunpack.c.h.b16 %v424
    %v763 = vunpack.c.l.b16 %v425
    %v764 = vunpack.c.h.b16 %v425
    %v765 = vunpack.c.l.b16 %v426
    %v766 = vunpack.c.h.b16 %v426
    %v767 = vunpack.c.l.b16 %v427
    %v768 = vunpack.c.h.b16 %v427
    %v769 = vunpack.c.l.b16 %v428
    %v770 = vunpack.c.h.b16 %v428
    %v771 = vunpack.c.l.b16 %v429
    %v772 = vunpack.c.h.b16 %v429
    %v773 = vunpack.c.l.b16 %v430
    %v774 = vunpack.c.h.b16 %v430
    %v775 = vunpack.c.l.b16 %v431
    %v776 = vunpack.c.h.b16 %v431
    %v777 = vunpack.c.l.b16 %v432
    %v778 = vunpack.c.h.b16 %v432
    %v779 = vunpack.c.l.b16 %v433
    %v780 = vunpack.c.h.b16 %v433
    %v781 = vunpack.c.l.b16 %v434
    %v782 = vunpack.c.h.b16 %v434
    %v783 = vunpack.c.l.b16 %v435
    %v784 = vunpack.c.h.b16 %v435
    %v785 = vunpack.c.l.b16 %v436
    %v786 = vunpack.c.h.b16 %v436
    %v787 = vunpack.c.l.b16 %v437
    %v788 = vunpack.c.h.b16 %v437
    %v789 = vunpack.c.l.b16 %v438
    %v790 = vunpack.c.h.b16 %v438
    %v791 = vunpack.c.l.b16 %v439
    %v792 = vunpack.c.h.b16 %v439
    %v793 = vunpack.c.l.b16 %v440
    %v794 = vunpack.c.h.b16 %v440
    %v795 = vunpack.c.l.b16 %v441
    %v796 = vunpack.c.h.b16 %v441
    %v797 = vunpack.c.l.b16 %v442
    %v798 = vunpack.c.h.b16 %v442
    %v799 = vunpack.c.l.b16 %v443
    %v800 = vunpack.c.h.b16 %v443
    %v801 = vunpack.c.l.b16 %v444
    %v802 = vunpack.c.h.b16 %v444
    %v803 = vunpack.c.l.b16 %v445
    %v804 = vunpack.c.h.b16 %v445
    %v805 = vunpack.c.l.b16 %v446
    %v806 = vunpack.c.h.b16 %v446
    %v807 = vunpack.c.l.b16 %v447
    %v808 = vunpack.c.h.b16 %v447
    %v809 = vunpack.c.l.b16 %v448
    %v810 = vunpack.c.h.b16 %v448
    %v811 = vunpack.c.l.b16 %v449
    %v812 = vunpack.c.h.b16 %v449
    %v813 = vunpack.c.l.b16 %v450
    %v814 = vunpack.c.h.b16 %v450
    %v815 = vunpack.c.l.b16 %v451
    %v816 = vunpack.c.h.b16 %v451
    %v817 = vunpack.c.l.b16 %v452
    %v818 = vunpack.c.h.b16 %v452
    %v819 = vunpack.c.l.b16 %v453
    %v820 = vunpack.c.h.b16 %v453
    %v821 = vunpack.c.l.b16 %v454
    %v822 = vunpack.c.h.b16 %v454
    %v823 = vunpack.c.l.b16 %v455
    %v824 = vunpack.c.h.b16 %v455
    %v825 = vunpack.c.l.b16 %v456
    %v826 = vunpack.c.h.b16 %v456
    %v827 = vunpack.c.l.b16 %v457
    %v828 = vunpack.c.h.b16 %v457
    %v829 = vunpack.c.l.b16 %v458
    %v830 = vunpack.c.h.b16 %v458
    %v831 = vunpack.c.l.b16 %v459
    %v832 = vunpack.c.h.b16 %v459
    %v833 = vunpack.c.l.b16 %v460
    %v834 = vunpack.c.h.b16 %v460
    %v835 = vunpack.c.l.b16 %v461
    %v836 = vunpack.c.h.b16 %v461
    %v837 = vunpack.c.l.b16 %v462
    %v838 = vunpack.c.h.b16 %v462
    %v839 = vunpack.c.l.b16 %v463
    %v840 = vunpack.c.h.b16 %v463
    %v841 = vunpack.c.l.b16 %v464
    %v842 = vunpack.c.h.b16 %v464
    %v843 = vunpack.c.l.b16 %v465
    %v844 = vunpack.c.h.b16 %v465
    %v845 = vunpack.c.l.b16 %v466
    %v846 = vunpack.c.h.b16 %v466
    %v847 = vunpack.c.l.b16 %v467
    %v848 = vunpack.c.h.b16 %v467
    %v849 = vunpack.c.l.b16 %v468
    %v850 = vunpack.c.h.b16 %v468
    %v851 = vunpack.c.l.b16 %v469
    %v852 = vunpack.c.h.b16 %v469
    %v853 = vunpack.c.l.b16 %v470
    %v854 = vunpack.c.h.b16 %v470
    %v855 = vunpack.c.l.b16 %v471
    %v856 = vunpack.c.h.b16 %v471
    %v857 = vunpack.c.l.b16 %v472
    %v858 = vunpack.c.h.b16 %v472
    %v859 = vunpack.c.l.b16 %v473
    %v860 = vunpack.c.h.b16 %v473
    %v861 = vunpack.c.l.b16 %v474
    %v862 = vunpack.c.h.b16 %v474
    %v863 = vunpack.c.l.b16 %v475
    %v864 = vunpack.c.h.b16 %v475
    %v865 = vunpack.c.l.b16 %v476
    %v866 = vunpack.c.h.b16 %v476
    %v867 = vunpack.c.l.b16 %v477
    %v868 = vunpack.c.h.b16 %v477
    %v869 = vunpack.c.l.b16 %v478
    %v870 = vunpack.c.h.b16 %v478
    %v871 = vunpack.c.l.b16 %v479
    %v872 = vunpack.c.h.b16 %v479
    %v873 = vunpack.c.l.b16 %v480
    %v874 = vunpack.c.h.b16 %v480
    %v875 = vunpack.c.l.b16 %v481
    %v876 = vunpack.c.h.b16 %v481
    %v877 = vunpack.c.l.b16 %v482
    %v878 = vunpack.c.h.b16 %v482
    %v879 = vunpack.c.l.b16 %v483
    %v880 = vunpack.c.h.b16 %v483
    %v881 = vunpack.c.l.b16 %v484
    %v882 = vunpack.c.h.b16 %v484
    %v883 = vunpack.c.l.b16 %v485
    %v884 = vunpack.c.h.b16 %v485
    %v885 = vunpack.c.l.b16 %v486
    %v886 = vunpack.c.h.b16 %v486
    %v887 = vunpack.c.l.b16 %v487
    %v888 = vunpack.c.h.b16 %v487
    %v889 = vunpack.c.l.b16 %v488
    %v890 = vunpack.c.h.b16 %v488
    %v891 = vunpack.c.l.b16 %v489
    %v892 = vunpack.c.h.b16 %v489
    %v893 = vunpack.c.l.b16 %v490
    %v894 = vunpack.c.h.b16 %v490
    %v895 = vunpack.c.l.b16 %v491
    %v896 = vunpack.c.h.b16 %v491
    %v897 = vunpack.c.l.b16 %v492
    %v898 = vunpack.c.h.b16 %v492
    %v899 = vpack.c.b16 %v647, %v643
    %v900 = vpack.c.b16 %v648, %v644
    %v901 = vpack.c.b16 %v649, %v645
    %v902 = vpack.c.b16 %v650, %v646
    %v903 = vpack.c.b16 %v655, %v651
    %v904 = vpack.c.b16 %v656, %v652
    %v905 = vpack.c.b16 %v657, %v653
    %v906 = vpack.c.b16 %v658, %v654
    %v907 = vpack.c.b16 %v663, %v659
    %v908 = vpack.c.b16 %v664, %v660
    %v909 = vpack.c.b16 %v665, %v661
    %v910 = vpack.c.b16 %v666, %v662
    %v911 = vpack.c.b16 %v671, %v667
    %v912 = vpack.c.b16 %v672, %v668
    %v913 = vpack.c.b16 %v673, %v669
    %v914 = vpack.c.b16 %v674, %v670
    %v915 = vpack.c.b16 %v679, %v675
    %v916 = vpack.c.b16 %v680, %v676
    %v917 = vpack.c.b16 %v681, %v677
    %v918 = vpack.c.b16 %v682, %v678
    %v919 = vpack.c.b16 %v687, %v683
    %v920 = vpack.c.b16 %v688, %v684
    %v921 = vpack.c.b16 %v689, %v685
    %v922 = vpack.c.b16 %v690, %v686
    %v923 = vpack.c.b16 %v695, %v691
    %v924 = vpack.c.b16 %v696, %v692
    %v925 = vpack.c.b16 %v697, %v693
    %v926 = vpack.c.b16 %v698, %v694
    %v927 = vpack.c.b16 %v703, %v699
    %v928 = vpack.c.b16 %v704, %v700
    %v929 = vpack.c.b16 %v705, %v701
    %v930 = vpack.c.b16 %v706, %v702
    %v931 = vpack.c.b16 %v711, %v707
    %v932 = vpack.c.b16 %v712, %v708
    %v933 = vpack.c.b16 %v713, %v709
    %v934 = vpack.c.b16 %v714, %v710
    %v935 = vpack.c.b16 %v719, %v715
    %v936 = vpack.c.b16 %v720, %v716
    %v937 = vpack.c.b16 %v721, %v717
    %v938 = vpack.c.b16 %v722, %v718
    %v939 = vpack.c.b16 %v727, %v723
    %v940 = vpack.c.b16 %v728, %v724
    %v941 = vpack.c.b16 %v729, %v725
    %v942 = vpack.c.b16 %v730, %v726
    %v943 = vpack.c.b16 %v735, %v731
    %v944 = vpack.c.b16 %v736, %v732
    %v945 = vpack.c.b16 %v737, %v733
    %v946 = vpack.c.b16 %v738, %v734
    %v947 = vpack.c.b16 %v743, %v739
    %v948 = vpack.c.b16 %v744, %v740
    %v949 = vpack.c.b16 %v745, %v741
    %v950 = vpack.c.b16 %v746, %v742
    %v951 = vpack.c.b16 %v751, %v747
    %v952 = vpack.c.b16 %v752, %v748
    %v953 = vpack.c.b16 %v753, %v749
    %v954 = vpack.c.b16 %v754, %v750
    %v955 = vpack.c.b16 %v759, %v755
    %v956 = vpack.c.b16 %v760, %v756
    %v957 = vpack.c.b16 %v761, %v757
    %v958 = vpack.c.b16 %v762, %v758
    %v959 = vpack.c.b16 %v767, %v763
    %v960 = vpack.c.b16 %v768, %v764
    %v961 = vpack.c.b16 %v769, %v765
    %v962 = vpack.c.b16 %v770, %v766
    %v963 = vpack.c.b16 %v775, %v771
    %v964 = vpack.c.b16 %v776, %v772
    %v965 = vpack.c.b16 %v777, %v773
    %v966 = vpack.c.b16 %v778, %v774
    %v967 = vpack.c.b16 %v783, %v779
    %v968 = vpack.c.b16 %v784, %v780
    %v969 = vpack.c.b16 %v785, %v781
    %v970 = vpack.c.b16 %v786, %v782
    %v971 = vpack.c.b16 %v791, %v787
    %v972 = vpack.c.b16 %v792, %v788
    %v973 = vpack.c.b16 %v793, %v789
    %v974 = vpack.c.b16 %v794, %v790
    %v975 = vpack.c.b16 %v799, %v795
    %v976 = vpack.c.b16 %v800, %v796
    %v977 = vpack.c.b16 %v801, %v797
    %v978 = vpack.c.b16 %v802, %v798
    %v979 = vpack.c.b16 %v807, %v803
    %v980 = vpack.c.b16 %v808, %v804
    %v981 = vpack.c.b16 %v809, %v805
    %v982 = vpack.c.b16 %v810, %v806
    %v983 = vpack.c.b16 %v815, %v811
    %v984 = vpack.c.b16 %v816, %v812
    %v985 = vpack.c.b16 %v817, %v813
    %v986 = vpack.c.b16 %v818, %v814
    %v987 = vpack.c.b16 %v823, %v819
    %v988 = vpack.c.b16 %v824, %v820
    %v989 = vpack.c.b16 %v825, %v821
    %v990 = vpack.c.b16 %v826, %v822
    %v991 = vpack.c.b16 %v831, %v827
    %v992 = vpack.c.b16 %v832, %v828
    %v993 = vpack.c.b16 %v833, %v829
    %v994 = vpack.c.b16 %v834, %v830
    %v995 = vpack.c.b16 %v839, %v835
    %v996 = vpack.c.b16 %v840, %v836
    %v997 = vpack.c.b16 %v841, %v837
    %v998 = vpack.c.b16 %v842, %v838
    %v999 = vpack.c.b16 %v847, %v843
    %v1000 = vpack.c.b16 %v848, %v844
    %v1001 = vpack.c.b16 %v849, %v845
    %v1002 = vpack.c.b16 %v850, %v846
    %v1003 = vpack.c.b16 %v855, %v851
    %v1004 = vpack.c.b16 %v856, %v852
    %v1005 = vpack.c.b16 %v857, %v853
    %v1006 = vpack.c.b16 %v858, %v854
    %v1007 = vpack.c.b16 %v863, %v859
    %v1008 = vpack.c.b16 %v864, %v860
    %v1009 = vpack.c.b16 %v865, %v861
    %v1010 = vpack.c.b16 %v866, %v862
    %v1011 = vpack.c.b16 %v871, %v867
    %v1012 = vpack.c.b16 %v872, %v868
    %v1013 = vpack.c.b16 %v873, %v869
    %v1014 = vpack.c.b16 %v874, %v870
    %v1015 = vpack.c.b16 %v879, %v875
    %v1016 = vpack.c.b16 %v880, %v876
    %v1017 = vpack.c.b16 %v881, %v877
    %v1018 = vpack.c.b16 %v882, %v878
    %v1019 = vpack.c.b16 %v887, %v883
    %v1020 = vpack.c.b16 %v888, %v884
    %v1021 = vpack.c.b16 %v889, %v885
    %v1022 = vpack.c.b16 %v890, %v886
    %v1023 = vpack.c.b16 %v895, %v891
    %v1024 = vpack.c.b16 %v896, %v892
    %v1025 = vpack.c.b16 %v897, %v893
    %v1026 = vpack.c.b16 %v898, %v894
    %1155 = vmatprep.subr.bf16.mxu0 %v900
    %1156 = vmatpush1.bf16.msra.mxu0 %v899
    %1157 = vmatprep.subr.bf16.mxu0 %v904
    %1158 = vmatpush1.bf16.msra.mxu0 %v903
    %1159 = vmatprep.subr.bf16.mxu0 %v908
    %1160 = vmatpush1.bf16.msra.mxu0 %v907
    %1161 = vmatprep.subr.bf16.mxu0 %v912
    %1162 = vmatpush1.bf16.msra.mxu0 %v911
    %1163 = vmatprep.subr.bf16.mxu0 %v916
    %1164 = vmatpush1.bf16.msra.mxu0 %v915
    %1165 = vmatprep.subr.bf16.mxu0 %v920
    %1166 = vmatpush1.bf16.msra.mxu0 %v919
    %1167 = vmatprep.subr.bf16.mxu0 %v924
    %1168 = vmatpush1.bf16.msra.mxu0 %v923
    %1169 = vmatprep.subr.bf16.mxu0 %v928
    %1170 = vmatpush1.bf16.msra.mxu0 %v927
    %1171 = vmatprep.subr.bf16.mxu0 %v932
    %1172 = vmatpush1.bf16.msra.mxu0 %v931
    %1173 = vmatprep.subr.bf16.mxu0 %v936
    %1174 = vmatpush1.bf16.msra.mxu0 %v935
    %1175 = vmatprep.subr.bf16.mxu0 %v940
    %1176 = vmatpush1.bf16.msra.mxu0 %v939
    %1177 = vmatprep.subr.bf16.mxu0 %v944
    %1178 = vmatpush1.bf16.msra.mxu0 %v943
    %1179 = vmatprep.subr.bf16.mxu0 %v948
    %1180 = vmatpush1.bf16.msra.mxu0 %v947
    %1181 = vmatprep.subr.bf16.mxu0 %v952
    %1182 = vmatpush1.bf16.msra.mxu0 %v951
    %1183 = vmatprep.subr.bf16.mxu0 %v956
    %1184 = vmatpush1.bf16.msra.mxu0 %v955
    %1185 = vmatprep.subr.bf16.mxu0 %v960
    %1186 = vmatpush1.bf16.msra.mxu0 %v959
    %1187 = vmatprep.mubr.bf16.mxu0 %v362
    %1188 = vmatmul.mubr.bf16.gmra.mrb[0].mxu0 %v361
    %v1189 = vpop.f32.mrb[0].mxu0
    %v1190 = vadd.f32 %v498, %v1189
    %v1191 = vpop.f32.mrb[0].mxu0
    %v1192 = vadd.f32 %v502, %v1191
    %v1193 = vpop.f32.mrb[0].mxu0
    %v1194 = vpop.f32.mrb[0].mxu0
    %1195 = vdwg.mxu0
    %1196 = vmatprep.subr.bf16.mxu0 %v964
    %1197 = vmatpush1.bf16.msra.mxu0 %v963
    %1198 = vmatprep.subr.bf16.mxu0 %v968
    %1199 = vmatpush1.bf16.msra.mxu0 %v967
    %1200 = vmatprep.subr.bf16.mxu0 %v972
    %1201 = vmatpush1.bf16.msra.mxu0 %v971
    %1202 = vmatprep.subr.bf16.mxu0 %v976
    %1203 = vmatpush1.bf16.msra.mxu0 %v975
    %1204 = vmatprep.subr.bf16.mxu0 %v980
    %1205 = vmatpush1.bf16.msra.mxu0 %v979
    %1206 = vmatprep.subr.bf16.mxu0 %v984
    %1207 = vmatpush1.bf16.msra.mxu0 %v983
    %1208 = vmatprep.subr.bf16.mxu0 %v988
    %1209 = vmatpush1.bf16.msra.mxu0 %v987
    %1210 = vmatprep.subr.bf16.mxu0 %v992
    %1211 = vmatpush1.bf16.msra.mxu0 %v991
    %1212 = vmatprep.subr.bf16.mxu0 %v996
    %1213 = vmatpush1.bf16.msra.mxu0 %v995
    %1214 = vmatprep.subr.bf16.mxu0 %v1000
    %1215 = vmatpush1.bf16.msra.mxu0 %v999
    %1216 = vmatprep.subr.bf16.mxu0 %v1004
    %1217 = vmatpush1.bf16.msra.mxu0 %v1003
    %1218 = vmatprep.subr.bf16.mxu0 %v1008
    %1219 = vmatpush1.bf16.msra.mxu0 %v1007
    %1220 = vmatprep.subr.bf16.mxu0 %v1012
    %1221 = vmatpush1.bf16.msra.mxu0 %v1011
    %1222 = vmatprep.subr.bf16.mxu0 %v1016
    %1223 = vmatpush1.bf16.msra.mxu0 %v1015
    %1224 = vmatprep.subr.bf16.mxu0 %v1020
    %1225 = vmatpush1.bf16.msra.mxu0 %v1019
    %1226 = vmatprep.subr.bf16.mxu0 %v1024
    %1227 = vmatpush1.bf16.msra.mxu0 %v1023
    %1228 = vmatprep.mubr.bf16.mxu0 %v364
    %1229 = vmatmul.mubr.bf16.gmra.mrb[0].mxu0 %v363
    %v1230 = vpop.f32.mrb[0].mxu0
    %v1231 = vadd.f32 %v1190, %v1230
    %v1232 = vpop.f32.mrb[0].mxu0
    %v1233 = vadd.f32 %v1192, %v1232
    %v1234 = vpop.f32.mrb[0].mxu0
    %v1235 = vpop.f32.mrb[0].mxu0
    %1236 = vdwg.mxu0
    %1237 = vmatprep.subr.bf16.mxu0 %v902
    %1238 = vmatpush1.bf16.msra.mxu0 %v901
    %1239 = vmatprep.subr.bf16.mxu0 %v906
    %1240 = vmatpush1.bf16.msra.mxu0 %v905
    %1241 = vmatprep.subr.bf16.mxu0 %v910
    %1242 = vmatpush1.bf16.msra.mxu0 %v909
    %1243 = vmatprep.subr.bf16.mxu0 %v914
    %1244 = vmatpush1.bf16.msra.mxu0 %v913
    %1245 = vmatprep.subr.bf16.mxu0 %v918
    %1246 = vmatpush1.bf16.msra.mxu0 %v917
    %1247 = vmatprep.subr.bf16.mxu0 %v922
    %1248 = vmatpush1.bf16.msra.mxu0 %v921
    %1249 = vmatprep.subr.bf16.mxu0 %v926
    %1250 = vmatpush1.bf16.msra.mxu0 %v925
    %1251 = vmatprep.subr.bf16.mxu0 %v930
    %1252 = vmatpush1.bf16.msra.mxu0 %v929
    %1253 = vmatprep.subr.bf16.mxu0 %v934
    %1254 = vmatpush1.bf16.msra.mxu0 %v933
    %1255 = vmatprep.subr.bf16.mxu0 %v938
    %1256 = vmatpush1.bf16.msra.mxu0 %v937
    %1257 = vmatprep.subr.bf16.mxu0 %v942
    %1258 = vmatpush1.bf16.msra.mxu0 %v941
    %1259 = vmatprep.subr.bf16.mxu0 %v946
    %1260 = vmatpush1.bf16.msra.mxu0 %v945
    %1261 = vmatprep.subr.bf16.mxu0 %v950
    %1262 = vmatpush1.bf16.msra.mxu0 %v949
    %1263 = vmatprep.subr.bf16.mxu0 %v954
    %1264 = vmatpush1.bf16.msra.mxu0 %v953
    %1265 = vmatprep.subr.bf16.mxu0 %v958
    %1266 = vmatpush1.bf16.msra.mxu0 %v957
    %1267 = vmatprep.subr.bf16.mxu0 %v962
    %1268 = vmatpush1.bf16.msra.mxu0 %v961
    %1269 = vmatprep.mubr.bf16.mxu0 %v362
    %1270 = vmatmul.mubr.bf16.gmra.mrb[0].mxu0 %v361
    %v1271 = vpop.f32.mrb[0].mxu0
    %v1272 = vadd.f32 %v506, %v1271
    %v1273 = vpop.f32.mrb[0].mxu0
    %v1274 = vadd.f32 %v510, %v1273
    %v1275 = vpop.f32.mrb[0].mxu0
    %v1276 = vpop.f32.mrb[0].mxu0
    %1277 = vdwg.mxu0
    %1278 = vmatprep.subr.bf16.mxu0 %v966
    %1279 = vmatpush1.bf16.msra.mxu0 %v965
    %1280 = vmatprep.subr.bf16.mxu0 %v970
    %1281 = vmatpush1.bf16.msra.mxu0 %v969
    %1282 = vmatprep.subr.bf16.mxu0 %v974
    %1283 = vmatpush1.bf16.msra.mxu0 %v973
    %1284 = vmatprep.subr.bf16.mxu0 %v978
    %1285 = vmatpush1.bf16.msra.mxu0 %v977
    %1286 = vmatprep.subr.bf16.mxu0 %v982
    %1287 = vmatpush1.bf16.msra.mxu0 %v981
    %1288 = vmatprep.subr.bf16.mxu0 %v986
    %1289 = vmatpush1.bf16.msra.mxu0 %v985
    %1290 = vmatprep.subr.bf16.mxu0 %v990
    %1291 = vmatpush1.bf16.msra.mxu0 %v989
    %1292 = vmatprep.subr.bf16.mxu0 %v994
    %1293 = vmatpush1.bf16.msra.mxu0 %v993
    %1294 = vmatprep.subr.bf16.mxu0 %v998
    %1295 = vmatpush1.bf16.msra.mxu0 %v997
    %1296 = vmatprep.subr.bf16.mxu0 %v1002
    %1297 = vmatpush1.bf16.msra.mxu0 %v1001
    %1298 = vmatprep.subr.bf16.mxu0 %v1006
    %1299 = vmatpush1.bf16.msra.mxu0 %v1005
    %1300 = vmatprep.subr.bf16.mxu0 %v1010
    %1301 = vmatpush1.bf16.msra.mxu0 %v1009
    %1302 = vmatprep.subr.bf16.mxu0 %v1014
    %1303 = vmatpush1.bf16.msra.mxu0 %v1013
    %1304 = vmatprep.subr.bf16.mxu0 %v1018
    %1305 = vmatpush1.bf16.msra.mxu0 %v1017
    %1306 = vmatprep.subr.bf16.mxu0 %v1022
    %1307 = vmatpush1.bf16.msra.mxu0 %v1021
    %1308 = vmatprep.subr.bf16.mxu0 %v1026
    %1309 = vmatpush1.bf16.msra.mxu0 %v1025
    %1310 = vmatprep.mubr.bf16.mxu0 %v364
    %1311 = vmatmul.mubr.bf16.gmra.mrb[0].mxu0 %v363
    %v1312 = vpop.f32.mrb[0].mxu0
    %v1313 = vadd.f32 %v1272, %v1312
    %v1314 = vpop.f32.mrb[0].mxu0
    %v1315 = vadd.f32 %v1274, %v1314
    %v1316 = vpop.f32.mrb[0].mxu0
    %v1317 = vpop.f32.mrb[0].mxu0
    %1318 = vdwg.mxu0
    %vm1319 = vcmp.ge.f32.partialorder %v1231, 0.0
    %vm1320 = vcmp.ge.f32.partialorder %v1233, 0.0
    %vm1321 = vcmp.ge.f32.partialorder %v1313, 0.0
    %vm1322 = vcmp.ge.f32.partialorder %v1315, 0.0
    %v1323 = vmul.f32 %v1231, 0.2
    %v1324 = vmul.f32 %v1233, 0.2
    %v1325 = vmul.f32 %v1313, 0.2
    %v1326 = vmul.f32 %v1315, 0.2
    %v1327 = vsel %vm1319, %v1231, %v1323
    %v1328 = vsel %vm1320, %v1233, %v1324
    %v1329 = vsel %vm1321, %v1313, %v1325
    %v1330 = vsel %vm1322, %v1315, %v1326
    %v1331 = vpack.c.bf16 %v1327, %v1327
    %v1332 = vpack.c.bf16 %v1328, %v1328
    %v1333 = vpack.c.bf16 %v1329, %v1329
    %v1334 = vpack.c.bf16 %v1330, %v1330
    %v1335 = vld [vmem:[%s9] sm:$0xf]
    %v1336 = vld [vmem:[%s9 + $0x4] sm:$0xf]
    %v1337 = vld [vmem:[%s9 + $0x8] sm:$0xf]
    %v1338 = vld [vmem:[%s9 + $0xc] sm:$0xf]
    %v1339 = vld [vmem:[%s9 + $0x10] sm:$0xf]
    %v1340 = vld [vmem:[%s9 + $0x14] sm:$0xf]
    %v1341 = vld [vmem:[%s9 + $0x18] sm:$0xf]
    %v1342 = vld [vmem:[%s9 + $0x1c] sm:$0xf]
    %v1343 = vld [vmem:[%s9 + $0x20] sm:$0xf]
    %v1344 = vld [vmem:[%s9 + $0x24] sm:$0xf]
    %v1345 = vld [vmem:[%s9 + $0x28] sm:$0xf]
    %v1346 = vld [vmem:[%s9 + $0x2c] sm:$0xf]
    %v1347 = vld [vmem:[%s9 + $0x30] sm:$0xf]
    %v1348 = vld [vmem:[%s9 + $0x34] sm:$0xf]
    %v1349 = vld [vmem:[%s9 + $0x38] sm:$0xf]
    %v1350 = vld [vmem:[%s9 + $0x3c] sm:$0xf]
    %v1351 = vld [vmem:[%s9 + $0x40] sm:$0xf]
    %v1352 = vld [vmem:[%s9 + $0x44] sm:$0xf]
    %v1353 = vld [vmem:[%s9 + $0x48] sm:$0xf]
    %v1354 = vld [vmem:[%s9 + $0x4c] sm:$0xf]
    %v1355 = vld [vmem:[%s9 + $0x50] sm:$0xf]
    %v1356 = vld [vmem:[%s9 + $0x54] sm:$0xf]
    %v1357 = vld [vmem:[%s9 + $0x58] sm:$0xf]
    %v1358 = vld [vmem:[%s9 + $0x5c] sm:$0xf]
    %v1359 = vld [vmem:[%s9 + $0x60] sm:$0xf]
    %v1360 = vld [vmem:[%s9 + $0x64] sm:$0xf]
    %v1361 = vld [vmem:[%s9 + $0x68] sm:$0xf]
    %v1362 = vld [vmem:[%s9 + $0x6c] sm:$0xf]
    %v1363 = vld [vmem:[%s9 + $0x70] sm:$0xf]
    %v1364 = vld [vmem:[%s9 + $0x74] sm:$0xf]
    %v1365 = vld [vmem:[%s9 + $0x78] sm:$0xf]
    %v1366 = vld [vmem:[%s9 + $0x7c] sm:$0xf]
    %v1367 = vld [vmem:[%s9 + $0x80] sm:$0xf]
    %v1368 = vld [vmem:[%s9 + $0x84] sm:$0xf]
    %v1369 = vld [vmem:[%s9 + $0x88] sm:$0xf]
    %v1370 = vld [vmem:[%s9 + $0x8c] sm:$0xf]
    %v1371 = vld [vmem:[%s9 + $0x90] sm:$0xf]
    %v1372 = vld [vmem:[%s9 + $0x94] sm:$0xf]
    %v1373 = vld [vmem:[%s9 + $0x98] sm:$0xf]
    %v1374 = vld [vmem:[%s9 + $0x9c] sm:$0xf]
    %v1375 = vld [vmem:[%s9 + $0xa0] sm:$0xf]
    %v1376 = vld [vmem:[%s9 + $0xa4] sm:$0xf]
    %v1377 = vld [vmem:[%s9 + $0xa8] sm:$0xf]
    %v1378 = vld [vmem:[%s9 + $0xac] sm:$0xf]
    %v1379 = vld [vmem:[%s9 + $0xb0] sm:$0xf]
    %v1380 = vld [vmem:[%s9 + $0xb4] sm:$0xf]
    %v1381 = vld [vmem:[%s9 + $0xb8] sm:$0xf]
    %v1382 = vld [vmem:[%s9 + $0xbc] sm:$0xf]
    %v1383 = vld [vmem:[%s9 + $0xc0] sm:$0xf]
    %v1384 = vld [vmem:[%s9 + $0xc4] sm:$0xf]
    %v1385 = vld [vmem:[%s9 + $0xc8] sm:$0xf]
    %v1386 = vld [vmem:[%s9 + $0xcc] sm:$0xf]
    %v1387 = vld [vmem:[%s9 + $0xd0] sm:$0xf]
    %v1388 = vld [vmem:[%s9 + $0xd4] sm:$0xf]
    %v1389 = vld [vmem:[%s9 + $0xd8] sm:$0xf]
    %v1390 = vld [vmem:[%s9 + $0xdc] sm:$0xf]
    %v1391 = vld [vmem:[%s9 + $0xe0] sm:$0xf]
    %v1392 = vld [vmem:[%s9 + $0xe4] sm:$0xf]
    %v1393 = vld [vmem:[%s9 + $0xe8] sm:$0xf]
    %v1394 = vld [vmem:[%s9 + $0xec] sm:$0xf]
    %v1395 = vld [vmem:[%s9 + $0xf0] sm:$0xf]
    %v1396 = vld [vmem:[%s9 + $0xf4] sm:$0xf]
    %v1397 = vld [vmem:[%s9 + $0xf8] sm:$0xf]
    %v1398 = vld [vmem:[%s9 + $0xfc] sm:$0xf]
    %v1399 = vld [vmem:[%s10] sm:$0x1]
    %v1401 = vlaneseq
    %v1402 = vshrl.u32 %v1401, 7
    %v1403 = vsub.s32 0, %v1402
    %v1404 = vrot.slane %v1399, %v1403
    %v1470 = vunpack.c.l.b16 %v1335
    %v1471 = vunpack.c.l.b16 %v1336
    %v1472 = vunpack.c.l.b16 %v1337
    %v1473 = vunpack.c.l.b16 %v1338
    %v1474 = vunpack.c.l.b16 %v1339
    %v1475 = vunpack.c.l.b16 %v1340
    %v1476 = vunpack.c.l.b16 %v1341
    %v1477 = vunpack.c.l.b16 %v1342
    %v1478 = vunpack.c.l.b16 %v1343
    %v1479 = vunpack.c.l.b16 %v1344
    %v1480 = vunpack.c.l.b16 %v1345
    %v1481 = vunpack.c.l.b16 %v1346
    %v1482 = vunpack.c.l.b16 %v1347
    %v1483 = vunpack.c.l.b16 %v1348
    %v1484 = vunpack.c.l.b16 %v1349
    %v1485 = vunpack.c.l.b16 %v1350
    %v1486 = vunpack.c.l.b16 %v1351
    %v1487 = vunpack.c.l.b16 %v1352
    %v1488 = vunpack.c.l.b16 %v1353
    %v1489 = vunpack.c.l.b16 %v1354
    %v1490 = vunpack.c.l.b16 %v1355
    %v1491 = vunpack.c.l.b16 %v1356
    %v1492 = vunpack.c.l.b16 %v1357
    %v1493 = vunpack.c.l.b16 %v1358
    %v1494 = vunpack.c.l.b16 %v1359
    %v1495 = vunpack.c.l.b16 %v1360
    %v1496 = vunpack.c.l.b16 %v1361
    %v1497 = vunpack.c.l.b16 %v1362
    %v1498 = vunpack.c.l.b16 %v1363
    %v1499 = vunpack.c.l.b16 %v1364
    %v1500 = vunpack.c.l.b16 %v1365
    %v1501 = vunpack.c.l.b16 %v1366
    %v1502 = vunpack.c.l.b16 %v1367
    %v1503 = vunpack.c.l.b16 %v1368
    %v1504 = vunpack.c.l.b16 %v1369
    %v1505 = vunpack.c.l.b16 %v1370
    %v1506 = vunpack.c.l.b16 %v1371
    %v1507 = vunpack.c.l.b16 %v1372
    %v1508 = vunpack.c.l.b16 %v1373
    %v1509 = vunpack.c.l.b16 %v1374
    %v1510 = vunpack.c.l.b16 %v1375
    %v1511 = vunpack.c.l.b16 %v1376
    %v1512 = vunpack.c.l.b16 %v1377
    %v1513 = vunpack.c.l.b16 %v1378
    %v1514 = vunpack.c.l.b16 %v1379
    %v1515 = vunpack.c.l.b16 %v1380
    %v1516 = vunpack.c.l.b16 %v1381
    %v1517 = vunpack.c.l.b16 %v1382
    %v1518 = vunpack.c.l.b16 %v1383
    %v1519 = vunpack.c.l.b16 %v1384
    %v1520 = vunpack.c.l.b16 %v1385
    %v1521 = vunpack.c.l.b16 %v1386
    %v1522 = vunpack.c.l.b16 %v1387
    %v1523 = vunpack.c.l.b16 %v1388
    %v1524 = vunpack.c.l.b16 %v1389
    %v1525 = vunpack.c.l.b16 %v1390
    %v1526 = vunpack.c.l.b16 %v1391
    %v1527 = vunpack.c.l.b16 %v1392
    %v1528 = vunpack.c.l.b16 %v1393
    %v1529 = vunpack.c.l.b16 %v1394
    %v1530 = vunpack.c.l.b16 %v1395
    %v1531 = vunpack.c.l.b16 %v1396
    %v1532 = vunpack.c.l.b16 %v1397
    %v1533 = vunpack.c.l.b16 %v1398
    %v1534 = vpack.c.b16 %v1471, %v1470
    %v1535 = vpack.c.b16 %v1473, %v1472
    %v1536 = vpack.c.b16 %v1475, %v1474
    %v1537 = vpack.c.b16 %v1477, %v1476
    %v1538 = vpack.c.b16 %v1479, %v1478
    %v1539 = vpack.c.b16 %v1481, %v1480
    %v1540 = vpack.c.b16 %v1483, %v1482
    %v1541 = vpack.c.b16 %v1485, %v1484
    %v1542 = vpack.c.b16 %v1487, %v1486
    %v1543 = vpack.c.b16 %v1489, %v1488
    %v1544 = vpack.c.b16 %v1491, %v1490
    %v1545 = vpack.c.b16 %v1493, %v1492
    %v1546 = vpack.c.b16 %v1495, %v1494
    %v1547 = vpack.c.b16 %v1497, %v1496
    %v1548 = vpack.c.b16 %v1499, %v1498
    %v1549 = vpack.c.b16 %v1501, %v1500
    %v1550 = vpack.c.b16 %v1503, %v1502
    %v1551 = vpack.c.b16 %v1505, %v1504
    %v1552 = vpack.c.b16 %v1507, %v1506
    %v1553 = vpack.c.b16 %v1509, %v1508
    %v1554 = vpack.c.b16 %v1511, %v1510
    %v1555 = vpack.c.b16 %v1513, %v1512
    %v1556 = vpack.c.b16 %v1515, %v1514
    %v1557 = vpack.c.b16 %v1517, %v1516
    %v1558 = vpack.c.b16 %v1519, %v1518
    %v1559 = vpack.c.b16 %v1521, %v1520
    %v1560 = vpack.c.b16 %v1523, %v1522
    %v1561 = vpack.c.b16 %v1525, %v1524
    %v1562 = vpack.c.b16 %v1527, %v1526
    %v1563 = vpack.c.b16 %v1529, %v1528
    %v1564 = vpack.c.b16 %v1531, %v1530
    %v1565 = vpack.c.b16 %v1533, %v1532
    %1598 = vmatprep.subr.bf16.mxu0 0
    %1599 = vmatpush1.bf16.msra.mxu0 %v1534
    %1600 = vmatprep.subr.bf16.mxu0 0
    %1601 = vmatpush1.bf16.msra.mxu0 %v1535
    %1602 = vmatprep.subr.bf16.mxu0 0
    %1603 = vmatpush1.bf16.msra.mxu0 %v1536
    %1604 = vmatprep.subr.bf16.mxu0 0
    %1605 = vmatpush1.bf16.msra.mxu0 %v1537
    %1606 = vmatprep.subr.bf16.mxu0 0
    %1607 = vmatpush1.bf16.msra.mxu0 %v1538
    %1608 = vmatprep.subr.bf16.mxu0 0
    %1609 = vmatpush1.bf16.msra.mxu0 %v1539
    %1610 = vmatprep.subr.bf16.mxu0 0
    %1611 = vmatpush1.bf16.msra.mxu0 %v1540
    %1612 = vmatprep.subr.bf16.mxu0 0
    %1613 = vmatpush1.bf16.msra.mxu0 %v1541
    %1614 = vmatprep.subr.bf16.mxu0 0
    %1615 = vmatpush1.bf16.msra.mxu0 %v1542
    %1616 = vmatprep.subr.bf16.mxu0 0
    %1617 = vmatpush1.bf16.msra.mxu0 %v1543
    %1618 = vmatprep.subr.bf16.mxu0 0
    %1619 = vmatpush1.bf16.msra.mxu0 %v1544
    %1620 = vmatprep.subr.bf16.mxu0 0
    %1621 = vmatpush1.bf16.msra.mxu0 %v1545
    %1622 = vmatprep.subr.bf16.mxu0 0
    %1623 = vmatpush1.bf16.msra.mxu0 %v1546
    %1624 = vmatprep.subr.bf16.mxu0 0
    %1625 = vmatpush1.bf16.msra.mxu0 %v1547
    %1626 = vmatprep.subr.bf16.mxu0 0
    %1627 = vmatpush1.bf16.msra.mxu0 %v1548
    %1628 = vmatprep.subr.bf16.mxu0 0
    %1629 = vmatpush1.bf16.msra.mxu0 %v1549
    %1630 = vmatprep.mubr.bf16.mxu0 %v1332
    %1631 = vmatmul.mubr.bf16.gmra.mrb[0].mxu0 %v1331
    %v1632 = vpop.f32.mrb[0].mxu0
    %v1633 = vadd.f32 %v1404, %v1632
    %v1634 = vpop.f32.mrb[0].mxu0
    %v1635 = vpop.f32.mrb[0].mxu0
    %v1636 = vpop.f32.mrb[0].mxu0
    %1637 = vdwg.mxu0
    %1638 = vmatprep.subr.bf16.mxu0 0
    %1639 = vmatpush1.bf16.msra.mxu0 %v1550
    %1640 = vmatprep.subr.bf16.mxu0 0
    %1641 = vmatpush1.bf16.msra.mxu0 %v1551
    %1642 = vmatprep.subr.bf16.mxu0 0
    %1643 = vmatpush1.bf16.msra.mxu0 %v1552
    %1644 = vmatprep.subr.bf16.mxu0 0
    %1645 = vmatpush1.bf16.msra.mxu0 %v1553
    %1646 = vmatprep.subr.bf16.mxu0 0
    %1647 = vmatpush1.bf16.msra.mxu0 %v1554
    %1648 = vmatprep.subr.bf16.mxu0 0
    %1649 = vmatpush1.bf16.msra.mxu0 %v1555
    %1650 = vmatprep.subr.bf16.mxu0 0
    %1651 = vmatpush1.bf16.msra.mxu0 %v1556
    %1652 = vmatprep.subr.bf16.mxu0 0
    %1653 = vmatpush1.bf16.msra.mxu0 %v1557
    %1654 = vmatprep.subr.bf16.mxu0 0
    %1655 = vmatpush1.bf16.msra.mxu0 %v1558
    %1656 = vmatprep.subr.bf16.mxu0 0
    %1657 = vmatpush1.bf16.msra.mxu0 %v1559
    %1658 = vmatprep.subr.bf16.mxu0 0
    %1659 = vmatpush1.bf16.msra.mxu0 %v1560
    %1660 = vmatprep.subr.bf16.mxu0 0
    %1661 = vmatpush1.bf16.msra.mxu0 %v1561
    %1662 = vmatprep.subr.bf16.mxu0 0
    %1663 = vmatpush1.bf16.msra.mxu0 %v1562
    %1664 = vmatprep.subr.bf16.mxu0 0
    %1665 = vmatpush1.bf16.msra.mxu0 %v1563
    %1666 = vmatprep.subr.bf16.mxu0 0
    %1667 = vmatpush1.bf16.msra.mxu0 %v1564
    %1668 = vmatprep.subr.bf16.mxu0 0
    %1669 = vmatpush1.bf16.msra.mxu0 %v1565
    %1670 = vmatprep.mubr.bf16.mxu0 %v1334
    %1671 = vmatmul.mubr.bf16.gmra.mrb[0].mxu0 %v1333
    %v1672 = vpop.f32.mrb[0].mxu0
    %v1673 = vadd.f32 %v1633, %v1672
    %v1674 = vpop.f32.mrb[0].mxu0
    %v1675 = vpop.f32.mrb[0].mxu0
    %v1676 = vpop.f32.mrb[0].mxu0
    %1677 = vdwg.mxu0
    %vm1678 = vcmask 261120
    %1679 = vst.msk [vmem:[#allocation2] sm:$0xff] %vm1678, %v1673
    %v1680 = vpack.c.bf16 %v1673, %v1673
    %v1681 = vld [vmem:[%s11] sm:$0xff]
    %v1682 = vld [vmem:[%s11 + $0x8] sm:$0xff]
    %v1683 = vld [vmem:[%s11 + $0x10] sm:$0xff]
    %v1684 = vld [vmem:[%s11 + $0x18] sm:$0xff]
    %v1685 = vld [vmem:[%s11 + $0x20] sm:$0xff]
    %v1686 = vld [vmem:[%s11 + $0x28] sm:$0xff]
    %v1687 = vld [vmem:[%s11 + $0x30] sm:$0xff]
    %v1688 = vld [vmem:[%s11 + $0x38] sm:$0xff]
    %v1689 = vld [vmem:[%s12] sm:$0xf]
    %v1691 = vlaneseq
    %v1692 = vshrl.u32 %v1691, 7
    %v1693 = vsub.s32 0, %v1692
    %v1694 = vrot.slane %v1689, %v1693
    %v1695 = vlaneseq
    %v1696 = vshrl.u32 %v1695, 7
    %v1697 = vsub.s32 1, %v1696
    %v1698 = vrot.slane %v1689, %v1697
    %v1699 = vlaneseq
    %v1700 = vshrl.u32 %v1699, 7
    %v1701 = vsub.s32 2, %v1700
    %v1702 = vrot.slane %v1689, %v1701
    %v1703 = vlaneseq
    %v1704 = vshrl.u32 %v1703, 7
    %v1705 = vsub.s32 3, %v1704
    %v1706 = vrot.slane %v1689, %v1705
    %v1719 = vunpack.c.l.b16 %v1681
    %v1720 = vunpack.c.h.b16 %v1681
    %v1721 = vunpack.c.l.b16 %v1682
    %v1722 = vunpack.c.h.b16 %v1682
    %v1723 = vunpack.c.l.b16 %v1683
    %v1724 = vunpack.c.h.b16 %v1683
    %v1725 = vunpack.c.l.b16 %v1684
    %v1726 = vunpack.c.h.b16 %v1684
    %v1727 = vunpack.c.l.b16 %v1685
    %v1728 = vunpack.c.h.b16 %v1685
    %v1729 = vunpack.c.l.b16 %v1686
    %v1730 = vunpack.c.h.b16 %v1686
    %v1731 = vunpack.c.l.b16 %v1687
    %v1732 = vunpack.c.h.b16 %v1687
    %v1733 = vunpack.c.l.b16 %v1688
    %v1734 = vunpack.c.h.b16 %v1688
    %v1735 = vpack.c.b16 %v1723, %v1719
    %v1736 = vpack.c.b16 %v1724, %v1720
    %v1737 = vpack.c.b16 %v1725, %v1721
    %v1738 = vpack.c.b16 %v1726, %v1722
    %v1739 = vpack.c.b16 %v1731, %v1727
    %v1740 = vpack.c.b16 %v1732, %v1728
    %v1741 = vpack.c.b16 %v1733, %v1729
    %v1742 = vpack.c.b16 %v1734, %v1730
    %v1752 = vsel %vm1678, %v1680, 0
    %1754 = vmatprep.subr.bf16.mxu0 %v1736
    %1755 = vmatpush1.bf16.msra.mxu0 %v1735
    %1756 = vmatprep.subr.bf16.mxu0 %v1740
    %1757 = vmatpush1.bf16.msra.mxu0 %v1739
    %1758 = vmatprep.subr.bf16.mxu0 0
    %1759 = vmatpush1.bf16.msra.mxu0 0
    %1760 = vmatprep.subr.bf16.mxu0 0
    %1761 = vmatpush1.bf16.msra.mxu0 0
    %1762 = vmatprep.subr.bf16.mxu0 0
    %1763 = vmatpush1.bf16.msra.mxu0 0
    %1764 = vmatprep.subr.bf16.mxu0 0
    %1765 = vmatpush1.bf16.msra.mxu0 0
    %1766 = vmatprep.subr.bf16.mxu0 0
    %1767 = vmatpush1.bf16.msra.mxu0 0
    %1768 = vmatprep.subr.bf16.mxu0 0
    %1769 = vmatpush1.bf16.msra.mxu0 0
    %1770 = vmatprep.subr.bf16.mxu0 0
    %1771 = vmatpush1.bf16.msra.mxu0 0
    %1772 = vmatprep.subr.bf16.mxu0 0
    %1773 = vmatpush1.bf16.msra.mxu0 0
    %1774 = vmatprep.subr.bf16.mxu0 0
    %1775 = vmatpush1.bf16.msra.mxu0 0
    %1776 = vmatprep.subr.bf16.mxu0 0
    %1777 = vmatpush1.bf16.msra.mxu0 0
    %1778 = vmatprep.subr.bf16.mxu0 0
    %1779 = vmatpush1.bf16.msra.mxu0 0
    %1780 = vmatprep.subr.bf16.mxu0 0
    %1781 = vmatpush1.bf16.msra.mxu0 0
    %1782 = vmatprep.subr.bf16.mxu0 0
    %1783 = vmatpush1.bf16.msra.mxu0 0
    %1784 = vmatprep.subr.bf16.mxu0 0
    %1785 = vmatpush1.bf16.msra.mxu0 0
    %1786 = vmatprep.mubr.bf16.mxu0 0
    %1787 = vmatmul.mubr.bf16.gmra.mrb[0].mxu0 %v1752
    %v1788 = vpop.f32.mrb[0].mxu0
    %v1789 = vadd.f32 %v1694, %v1788
    %v1790 = vpop.f32.mrb[0].mxu0
    %v1791 = vadd.f32 %v1698, %v1790
    %v1792 = vpop.f32.mrb[0].mxu0
    %v1793 = vpop.f32.mrb[0].mxu0
    %1794 = vdwg.mxu0
    %1795 = vmatprep.subr.bf16.mxu0 %v1738
    %1796 = vmatpush1.bf16.msra.mxu0 %v1737
    %1797 = vmatprep.subr.bf16.mxu0 %v1742
    %1798 = vmatpush1.bf16.msra.mxu0 %v1741
    %1799 = vmatprep.subr.bf16.mxu0 0
    %1800 = vmatpush1.bf16.msra.mxu0 0
    %1801 = vmatprep.subr.bf16.mxu0 0
    %1802 = vmatpush1.bf16.msra.mxu0 0
    %1803 = vmatprep.subr.bf16.mxu0 0
    %1804 = vmatpush1.bf16.msra.mxu0 0
    %1805 = vmatprep.subr.bf16.mxu0 0
    %1806 = vmatpush1.bf16.msra.mxu0 0
    %1807 = vmatprep.subr.bf16.mxu0 0
    %1808 = vmatpush1.bf16.msra.mxu0 0
    %1809 = vmatprep.subr.bf16.mxu0 0
    %1810 = vmatpush1.bf16.msra.mxu0 0
    %1811 = vmatprep.subr.bf16.mxu0 0
    %1812 = vmatpush1.bf16.msra.mxu0 0
    %1813 = vmatprep.subr.bf16.mxu0 0
    %1814 = vmatpush1.bf16.msra.mxu0 0
    %1815 = vmatprep.subr.bf16.mxu0 0
    %1816 = vmatpush1.bf16.msra.mxu0 0
    %1817 = vmatprep.subr.bf16.mxu0 0
    %1818 = vmatpush1.bf16.msra.mxu0 0
    %1819 = vmatprep.subr.bf16.mxu0 0
    %1820 = vmatpush1.bf16.msra.mxu0 0
    %1821 = vmatprep.subr.bf16.mxu0 0
    %1822 = vmatpush1.bf16.msra.mxu0 0
    %1823 = vmatprep.subr.bf16.mxu0 0
    %1824 = vmatpush1.bf16.msra.mxu0 0
    %1825 = vmatprep.subr.bf16.mxu0 0
    %1826 = vmatpush1.bf16.msra.mxu0 0
    %1827 = vmatprep.mubr.bf16.mxu0 0
    %1828 = vmatmul.mubr.bf16.gmra.mrb[0].mxu0 %v1752
    %v1829 = vpop.f32.mrb[0].mxu0
    %v1830 = vadd.f32 %v1702, %v1829
    %v1831 = vpop.f32.mrb[0].mxu0
    %v1832 = vadd.f32 %v1706, %v1831
    %v1833 = vpop.f32.mrb[0].mxu0
    %v1834 = vpop.f32.mrb[0].mxu0
    %1835 = vdwg.mxu0
    %vm1836 = vcmp.ge.f32.partialorder %v1789, 0.0
    %vm1837 = vcmp.ge.f32.partialorder %v1791, 0.0
    %vm1838 = vcmp.ge.f32.partialorder %v1830, 0.0
    %vm1839 = vcmp.ge.f32.partialorder %v1832, 0.0
    %v1840 = vmul.f32 %v1789, 0.2
    %v1841 = vmul.f32 %v1791, 0.2
    %v1842 = vmul.f32 %v1830, 0.2
    %v1843 = vmul.f32 %v1832, 0.2
    %v1844 = vsel %vm1836, %v1789, %v1840
    %v1845 = vsel %vm1837, %v1791, %v1841
    %v1846 = vsel %vm1838, %v1830, %v1842
    %v1847 = vsel %vm1839, %v1832, %v1843
    %v1848 = vpack.c.bf16 %v1844, %v1844
    %v1849 = vpack.c.bf16 %v1845, %v1845
    %v1850 = vpack.c.bf16 %v1846, %v1846
    %v1851 = vpack.c.bf16 %v1847, %v1847
    %v1852 = vld [vmem:[%s13] sm:$0xff]
    %v1853 = vld [vmem:[%s13 + $0x8] sm:$0xff]
    %v1854 = vld [vmem:[%s13 + $0x10] sm:$0xff]
    %v1855 = vld [vmem:[%s13 + $0x18] sm:$0xff]
    %v1856 = vld [vmem:[%s13 + $0x20] sm:$0xff]
    %v1857 = vld [vmem:[%s13 + $0x28] sm:$0xff]
    %v1858 = vld [vmem:[%s13 + $0x30] sm:$0xff]
    %v1859 = vld [vmem:[%s13 + $0x38] sm:$0xff]
    %v1860 = vld [vmem:[%s13 + $0x40] sm:$0xff]
    %v1861 = vld [vmem:[%s13 + $0x48] sm:$0xff]
    %v1862 = vld [vmem:[%s13 + $0x50] sm:$0xff]
    %v1863 = vld [vmem:[%s13 + $0x58] sm:$0xff]
    %v1864 = vld [vmem:[%s13 + $0x60] sm:$0xff]
    %v1865 = vld [vmem:[%s13 + $0x68] sm:$0xff]
    %v1866 = vld [vmem:[%s13 + $0x70] sm:$0xff]
    %v1867 = vld [vmem:[%s13 + $0x78] sm:$0xff]
    %v1868 = vld [vmem:[%s13 + $0x80] sm:$0xff]
    %v1869 = vld [vmem:[%s13 + $0x88] sm:$0xff]
    %v1870 = vld [vmem:[%s13 + $0x90] sm:$0xff]
    %v1871 = vld [vmem:[%s13 + $0x98] sm:$0xff]
    %v1872 = vld [vmem:[%s13 + $0xa0] sm:$0xff]
    %v1873 = vld [vmem:[%s13 + $0xa8] sm:$0xff]
    %v1874 = vld [vmem:[%s13 + $0xb0] sm:$0xff]
    %v1875 = vld [vmem:[%s13 + $0xb8] sm:$0xff]
    %v1876 = vld [vmem:[%s13 + $0xc0] sm:$0xff]
    %v1877 = vld [vmem:[%s13 + $0xc8] sm:$0xff]
    %v1878 = vld [vmem:[%s13 + $0xd0] sm:$0xff]
    %v1879 = vld [vmem:[%s13 + $0xd8] sm:$0xff]
    %v1880 = vld [vmem:[%s13 + $0xe0] sm:$0xff]
    %v1881 = vld [vmem:[%s13 + $0xe8] sm:$0xff]
    %v1882 = vld [vmem:[%s13 + $0xf0] sm:$0xff]
    %v1883 = vld [vmem:[%s13 + $0xf8] sm:$0xff]
    %v1884 = vld [vmem:[%s13 + $0x100] sm:$0xff]
    %v1885 = vld [vmem:[%s13 + $0x108] sm:$0xff]
    %v1886 = vld [vmem:[%s13 + $0x110] sm:$0xff]
    %v1887 = vld [vmem:[%s13 + $0x118] sm:$0xff]
    %v1888 = vld [vmem:[%s13 + $0x120] sm:$0xff]
    %v1889 = vld [vmem:[%s13 + $0x128] sm:$0xff]
    %v1890 = vld [vmem:[%s13 + $0x130] sm:$0xff]
    %v1891 = vld [vmem:[%s13 + $0x138] sm:$0xff]
    %v1892 = vld [vmem:[%s13 + $0x140] sm:$0xff]
    %v1893 = vld [vmem:[%s13 + $0x148] sm:$0xff]
    %v1894 = vld [vmem:[%s13 + $0x150] sm:$0xff]
    %v1895 = vld [vmem:[%s13 + $0x158] sm:$0xff]
    %v1896 = vld [vmem:[%s13 + $0x160] sm:$0xff]
    %v1897 = vld [vmem:[%s13 + $0x168] sm:$0xff]
    %v1898 = vld [vmem:[%s13 + $0x170] sm:$0xff]
    %v1899 = vld [vmem:[%s13 + $0x178] sm:$0xff]
    %v1900 = vld [vmem:[%s13 + $0x180] sm:$0xff]
    %v1901 = vld [vmem:[%s13 + $0x188] sm:$0xff]
    %v1902 = vld [vmem:[%s13 + $0x190] sm:$0xff]
    %v1903 = vld [vmem:[%s13 + $0x198] sm:$0xff]
    %v1904 = vld [vmem:[%s13 + $0x1a0] sm:$0xff]
    %v1905 = vld [vmem:[%s13 + $0x1a8] sm:$0xff]
    %v1906 = vld [vmem:[%s13 + $0x1b0] sm:$0xff]
    %v1907 = vld [vmem:[%s13 + $0x1b8] sm:$0xff]
    %v1908 = vld [vmem:[%s13 + $0x1c0] sm:$0xff]
    %v1909 = vld [vmem:[%s13 + $0x1c8] sm:$0xff]
    %v1910 = vld [vmem:[%s13 + $0x1d0] sm:$0xff]
    %v1911 = vld [vmem:[%s13 + $0x1d8] sm:$0xff]
    %v1912 = vld [vmem:[%s13 + $0x1e0] sm:$0xff]
    %v1913 = vld [vmem:[%s13 + $0x1e8] sm:$0xff]
    %v1914 = vld [vmem:[%s13 + $0x1f0] sm:$0xff]
    %v1915 = vld [vmem:[%s13 + $0x1f8] sm:$0xff]
    %v1916 = vld [vmem:[%s13 + $0x200] sm:$0xff]
    %v1917 = vld [vmem:[%s13 + $0x208] sm:$0xff]
    %v1918 = vld [vmem:[%s13 + $0x210] sm:$0xff]
    %v1919 = vld [vmem:[%s13 + $0x218] sm:$0xff]
    %v1920 = vld [vmem:[%s13 + $0x220] sm:$0xff]
    %v1921 = vld [vmem:[%s13 + $0x228] sm:$0xff]
    %v1922 = vld [vmem:[%s13 + $0x230] sm:$0xff]
    %v1923 = vld [vmem:[%s13 + $0x238] sm:$0xff]
    %v1924 = vld [vmem:[%s13 + $0x240] sm:$0xff]
    %v1925 = vld [vmem:[%s13 + $0x248] sm:$0xff]
    %v1926 = vld [vmem:[%s13 + $0x250] sm:$0xff]
    %v1927 = vld [vmem:[%s13 + $0x258] sm:$0xff]
    %v1928 = vld [vmem:[%s13 + $0x260] sm:$0xff]
    %v1929 = vld [vmem:[%s13 + $0x268] sm:$0xff]
    %v1930 = vld [vmem:[%s13 + $0x270] sm:$0xff]
    %v1931 = vld [vmem:[%s13 + $0x278] sm:$0xff]
    %v1932 = vld [vmem:[%s13 + $0x280] sm:$0xff]
    %v1933 = vld [vmem:[%s13 + $0x288] sm:$0xff]
    %v1934 = vld [vmem:[%s13 + $0x290] sm:$0xff]
    %v1935 = vld [vmem:[%s13 + $0x298] sm:$0xff]
    %v1936 = vld [vmem:[%s13 + $0x2a0] sm:$0xff]
    %v1937 = vld [vmem:[%s13 + $0x2a8] sm:$0xff]
    %v1938 = vld [vmem:[%s13 + $0x2b0] sm:$0xff]
    %v1939 = vld [vmem:[%s13 + $0x2b8] sm:$0xff]
    %v1940 = vld [vmem:[%s13 + $0x2c0] sm:$0xff]
    %v1941 = vld [vmem:[%s13 + $0x2c8] sm:$0xff]
    %v1942 = vld [vmem:[%s13 + $0x2d0] sm:$0xff]
    %v1943 = vld [vmem:[%s13 + $0x2d8] sm:$0xff]
    %v1944 = vld [vmem:[%s13 + $0x2e0] sm:$0xff]
    %v1945 = vld [vmem:[%s13 + $0x2e8] sm:$0xff]
    %v1946 = vld [vmem:[%s13 + $0x2f0] sm:$0xff]
    %v1947 = vld [vmem:[%s13 + $0x2f8] sm:$0xff]
    %v1948 = vld [vmem:[%s13 + $0x300] sm:$0xff]
    %v1949 = vld [vmem:[%s13 + $0x308] sm:$0xff]
    %v1950 = vld [vmem:[%s13 + $0x310] sm:$0xff]
    %v1951 = vld [vmem:[%s13 + $0x318] sm:$0xff]
    %v1952 = vld [vmem:[%s13 + $0x320] sm:$0xff]
    %v1953 = vld [vmem:[%s13 + $0x328] sm:$0xff]
    %v1954 = vld [vmem:[%s13 + $0x330] sm:$0xff]
    %v1955 = vld [vmem:[%s13 + $0x338] sm:$0xff]
    %v1956 = vld [vmem:[%s13 + $0x340] sm:$0xff]
    %v1957 = vld [vmem:[%s13 + $0x348] sm:$0xff]
    %v1958 = vld [vmem:[%s13 + $0x350] sm:$0xff]
    %v1959 = vld [vmem:[%s13 + $0x358] sm:$0xff]
    %v1960 = vld [vmem:[%s13 + $0x360] sm:$0xff]
    %v1961 = vld [vmem:[%s13 + $0x368] sm:$0xff]
    %v1962 = vld [vmem:[%s13 + $0x370] sm:$0xff]
    %v1963 = vld [vmem:[%s13 + $0x378] sm:$0xff]
    %v1964 = vld [vmem:[%s13 + $0x380] sm:$0xff]
    %v1965 = vld [vmem:[%s13 + $0x388] sm:$0xff]
    %v1966 = vld [vmem:[%s13 + $0x390] sm:$0xff]
    %v1967 = vld [vmem:[%s13 + $0x398] sm:$0xff]
    %v1968 = vld [vmem:[%s13 + $0x3a0] sm:$0xff]
    %v1969 = vld [vmem:[%s13 + $0x3a8] sm:$0xff]
    %v1970 = vld [vmem:[%s13 + $0x3b0] sm:$0xff]
    %v1971 = vld [vmem:[%s13 + $0x3b8] sm:$0xff]
    %v1972 = vld [vmem:[%s13 + $0x3c0] sm:$0xff]
    %v1973 = vld [vmem:[%s13 + $0x3c8] sm:$0xff]
    %v1974 = vld [vmem:[%s13 + $0x3d0] sm:$0xff]
    %v1975 = vld [vmem:[%s13 + $0x3d8] sm:$0xff]
    %v1976 = vld [vmem:[%s13 + $0x3e0] sm:$0xff]
    %v1977 = vld [vmem:[%s13 + $0x3e8] sm:$0xff]
    %v1978 = vld [vmem:[%s13 + $0x3f0] sm:$0xff]
    %v1979 = vld [vmem:[%s13 + $0x3f8] sm:$0xff]
    %v1980 = vld [vmem:[%s14] sm:$0xf]
    %v1982 = vlaneseq
    %v1983 = vshrl.u32 %v1982, 7
    %v1984 = vsub.s32 0, %v1983
    %v1985 = vrot.slane %v1980, %v1984
    %v1986 = vlaneseq
    %v1987 = vshrl.u32 %v1986, 7
    %v1988 = vsub.s32 1, %v1987
    %v1989 = vrot.slane %v1980, %v1988
    %v1990 = vlaneseq
    %v1991 = vshrl.u32 %v1990, 7
    %v1992 = vsub.s32 2, %v1991
    %v1993 = vrot.slane %v1980, %v1992
    %v1994 = vlaneseq
    %v1995 = vshrl.u32 %v1994, 7
    %v1996 = vsub.s32 3, %v1995
    %v1997 = vrot.slane %v1980, %v1996
    %v2130 = vunpack.c.l.b16 %v1852
    %v2131 = vunpack.c.h.b16 %v1852
    %v2132 = vunpack.c.l.b16 %v1853
    %v2133 = vunpack.c.h.b16 %v1853
    %v2134 = vunpack.c.l.b16 %v1854
    %v2135 = vunpack.c.h.b16 %v1854
    %v2136 = vunpack.c.l.b16 %v1855
    %v2137 = vunpack.c.h.b16 %v1855
    %v2138 = vunpack.c.l.b16 %v1856
    %v2139 = vunpack.c.h.b16 %v1856
    %v2140 = vunpack.c.l.b16 %v1857
    %v2141 = vunpack.c.h.b16 %v1857
    %v2142 = vunpack.c.l.b16 %v1858
    %v2143 = vunpack.c.h.b16 %v1858
    %v2144 = vunpack.c.l.b16 %v1859
    %v2145 = vunpack.c.h.b16 %v1859
    %v2146 = vunpack.c.l.b16 %v1860
    %v2147 = vunpack.c.h.b16 %v1860
    %v2148 = vunpack.c.l.b16 %v1861
    %v2149 = vunpack.c.h.b16 %v1861
    %v2150 = vunpack.c.l.b16 %v1862
    %v2151 = vunpack.c.h.b16 %v1862
    %v2152 = vunpack.c.l.b16 %v1863
    %v2153 = vunpack.c.h.b16 %v1863
    %v2154 = vunpack.c.l.b16 %v1864
    %v2155 = vunpack.c.h.b16 %v1864
    %v2156 = vunpack.c.l.b16 %v1865
    %v2157 = vunpack.c.h.b16 %v1865
    %v2158 = vunpack.c.l.b16 %v1866
    %v2159 = vunpack.c.h.b16 %v1866
    %v2160 = vunpack.c.l.b16 %v1867
    %v2161 = vunpack.c.h.b16 %v1867
    %v2162 = vunpack.c.l.b16 %v1868
    %v2163 = vunpack.c.h.b16 %v1868
    %v2164 = vunpack.c.l.b16 %v1869
    %v2165 = vunpack.c.h.b16 %v1869
    %v2166 = vunpack.c.l.b16 %v1870
    %v2167 = vunpack.c.h.b16 %v1870
    %v2168 = vunpack.c.l.b16 %v1871
    %v2169 = vunpack.c.h.b16 %v1871
    %v2170 = vunpack.c.l.b16 %v1872
    %v2171 = vunpack.c.h.b16 %v1872
    %v2172 = vunpack.c.l.b16 %v1873
    %v2173 = vunpack.c.h.b16 %v1873
    %v2174 = vunpack.c.l.b16 %v1874
    %v2175 = vunpack.c.h.b16 %v1874
    %v2176 = vunpack.c.l.b16 %v1875
    %v2177 = vunpack.c.h.b16 %v1875
    %v2178 = vunpack.c.l.b16 %v1876
    %v2179 = vunpack.c.h.b16 %v1876
    %v2180 = vunpack.c.l.b16 %v1877
    %v2181 = vunpack.c.h.b16 %v1877
    %v2182 = vunpack.c.l.b16 %v1878
    %v2183 = vunpack.c.h.b16 %v1878
    %v2184 = vunpack.c.l.b16 %v1879
    %v2185 = vunpack.c.h.b16 %v1879
    %v2186 = vunpack.c.l.b16 %v1880
    %v2187 = vunpack.c.h.b16 %v1880
    %v2188 = vunpack.c.l.b16 %v1881
    %v2189 = vunpack.c.h.b16 %v1881
    %v2190 = vunpack.c.l.b16 %v1882
    %v2191 = vunpack.c.h.b16 %v1882
    %v2192 = vunpack.c.l.b16 %v1883
    %v2193 = vunpack.c.h.b16 %v1883
    %v2194 = vunpack.c.l.b16 %v1884
    %v2195 = vunpack.c.h.b16 %v1884
    %v2196 = vunpack.c.l.b16 %v1885
    %v2197 = vunpack.c.h.b16 %v1885
    %v2198 = vunpack.c.l.b16 %v1886
    %v2199 = vunpack.c.h.b16 %v1886
    %v2200 = vunpack.c.l.b16 %v1887
    %v2201 = vunpack.c.h.b16 %v1887
    %v2202 = vunpack.c.l.b16 %v1888
    %v2203 = vunpack.c.h.b16 %v1888
    %v2204 = vunpack.c.l.b16 %v1889
    %v2205 = vunpack.c.h.b16 %v1889
    %v2206 = vunpack.c.l.b16 %v1890
    %v2207 = vunpack.c.h.b16 %v1890
    %v2208 = vunpack.c.l.b16 %v1891
    %v2209 = vunpack.c.h.b16 %v1891
    %v2210 = vunpack.c.l.b16 %v1892
    %v2211 = vunpack.c.h.b16 %v1892
    %v2212 = vunpack.c.l.b16 %v1893
    %v2213 = vunpack.c.h.b16 %v1893
    %v2214 = vunpack.c.l.b16 %v1894
    %v2215 = vunpack.c.h.b16 %v1894
    %v2216 = vunpack.c.l.b16 %v1895
    %v2217 = vunpack.c.h.b16 %v1895
    %v2218 = vunpack.c.l.b16 %v1896
    %v2219 = vunpack.c.h.b16 %v1896
    %v2220 = vunpack.c.l.b16 %v1897
    %v2221 = vunpack.c.h.b16 %v1897
    %v2222 = vunpack.c.l.b16 %v1898
    %v2223 = vunpack.c.h.b16 %v1898
    %v2224 = vunpack.c.l.b16 %v1899
    %v2225 = vunpack.c.h.b16 %v1899
    %v2226 = vunpack.c.l.b16 %v1900
    %v2227 = vunpack.c.h.b16 %v1900
    %v2228 = vunpack.c.l.b16 %v1901
    %v2229 = vunpack.c.h.b16 %v1901
    %v2230 = vunpack.c.l.b16 %v1902
    %v2231 = vunpack.c.h.b16 %v1902
    %v2232 = vunpack.c.l.b16 %v1903
    %v2233 = vunpack.c.h.b16 %v1903
    %v2234 = vunpack.c.l.b16 %v1904
    %v2235 = vunpack.c.h.b16 %v1904
    %v2236 = vunpack.c.l.b16 %v1905
    %v2237 = vunpack.c.h.b16 %v1905
    %v2238 = vunpack.c.l.b16 %v1906
    %v2239 = vunpack.c.h.b16 %v1906
    %v2240 = vunpack.c.l.b16 %v1907
    %v2241 = vunpack.c.h.b16 %v1907
    %v2242 = vunpack.c.l.b16 %v1908
    %v2243 = vunpack.c.h.b16 %v1908
    %v2244 = vunpack.c.l.b16 %v1909
    %v2245 = vunpack.c.h.b16 %v1909
    %v2246 = vunpack.c.l.b16 %v1910
    %v2247 = vunpack.c.h.b16 %v1910
    %v2248 = vunpack.c.l.b16 %v1911
    %v2249 = vunpack.c.h.b16 %v1911
    %v2250 = vunpack.c.l.b16 %v1912
    %v2251 = vunpack.c.h.b16 %v1912
    %v2252 = vunpack.c.l.b16 %v1913
    %v2253 = vunpack.c.h.b16 %v1913
    %v2254 = vunpack.c.l.b16 %v1914
    %v2255 = vunpack.c.h.b16 %v1914
    %v2256 = vunpack.c.l.b16 %v1915
    %v2257 = vunpack.c.h.b16 %v1915
    %v2258 = vunpack.c.l.b16 %v1916
    %v2259 = vunpack.c.h.b16 %v1916
    %v2260 = vunpack.c.l.b16 %v1917
    %v2261 = vunpack.c.h.b16 %v1917
    %v2262 = vunpack.c.l.b16 %v1918
    %v2263 = vunpack.c.h.b16 %v1918
    %v2264 = vunpack.c.l.b16 %v1919
    %v2265 = vunpack.c.h.b16 %v1919
    %v2266 = vunpack.c.l.b16 %v1920
    %v2267 = vunpack.c.h.b16 %v1920
    %v2268 = vunpack.c.l.b16 %v1921
    %v2269 = vunpack.c.h.b16 %v1921
    %v2270 = vunpack.c.l.b16 %v1922
    %v2271 = vunpack.c.h.b16 %v1922
    %v2272 = vunpack.c.l.b16 %v1923
    %v2273 = vunpack.c.h.b16 %v1923
    %v2274 = vunpack.c.l.b16 %v1924
    %v2275 = vunpack.c.h.b16 %v1924
    %v2276 = vunpack.c.l.b16 %v1925
    %v2277 = vunpack.c.h.b16 %v1925
    %v2278 = vunpack.c.l.b16 %v1926
    %v2279 = vunpack.c.h.b16 %v1926
    %v2280 = vunpack.c.l.b16 %v1927
    %v2281 = vunpack.c.h.b16 %v1927
    %v2282 = vunpack.c.l.b16 %v1928
    %v2283 = vunpack.c.h.b16 %v1928
    %v2284 = vunpack.c.l.b16 %v1929
    %v2285 = vunpack.c.h.b16 %v1929
    %v2286 = vunpack.c.l.b16 %v1930
    %v2287 = vunpack.c.h.b16 %v1930
    %v2288 = vunpack.c.l.b16 %v1931
    %v2289 = vunpack.c.h.b16 %v1931
    %v2290 = vunpack.c.l.b16 %v1932
    %v2291 = vunpack.c.h.b16 %v1932
    %v2292 = vunpack.c.l.b16 %v1933
    %v2293 = vunpack.c.h.b16 %v1933
    %v2294 = vunpack.c.l.b16 %v1934
    %v2295 = vunpack.c.h.b16 %v1934
    %v2296 = vunpack.c.l.b16 %v1935
    %v2297 = vunpack.c.h.b16 %v1935
    %v2298 = vunpack.c.l.b16 %v1936
    %v2299 = vunpack.c.h.b16 %v1936
    %v2300 = vunpack.c.l.b16 %v1937
    %v2301 = vunpack.c.h.b16 %v1937
    %v2302 = vunpack.c.l.b16 %v1938
    %v2303 = vunpack.c.h.b16 %v1938
    %v2304 = vunpack.c.l.b16 %v1939
    %v2305 = vunpack.c.h.b16 %v1939
    %v2306 = vunpack.c.l.b16 %v1940
    %v2307 = vunpack.c.h.b16 %v1940
    %v2308 = vunpack.c.l.b16 %v1941
    %v2309 = vunpack.c.h.b16 %v1941
    %v2310 = vunpack.c.l.b16 %v1942
    %v2311 = vunpack.c.h.b16 %v1942
    %v2312 = vunpack.c.l.b16 %v1943
    %v2313 = vunpack.c.h.b16 %v1943
    %v2314 = vunpack.c.l.b16 %v1944
    %v2315 = vunpack.c.h.b16 %v1944
    %v2316 = vunpack.c.l.b16 %v1945
    %v2317 = vunpack.c.h.b16 %v1945
    %v2318 = vunpack.c.l.b16 %v1946
    %v2319 = vunpack.c.h.b16 %v1946
    %v2320 = vunpack.c.l.b16 %v1947
    %v2321 = vunpack.c.h.b16 %v1947
    %v2322 = vunpack.c.l.b16 %v1948
    %v2323 = vunpack.c.h.b16 %v1948
    %v2324 = vunpack.c.l.b16 %v1949
    %v2325 = vunpack.c.h.b16 %v1949
    %v2326 = vunpack.c.l.b16 %v1950
    %v2327 = vunpack.c.h.b16 %v1950
    %v2328 = vunpack.c.l.b16 %v1951
    %v2329 = vunpack.c.h.b16 %v1951
    %v2330 = vunpack.c.l.b16 %v1952
    %v2331 = vunpack.c.h.b16 %v1952
    %v2332 = vunpack.c.l.b16 %v1953
    %v2333 = vunpack.c.h.b16 %v1953
    %v2334 = vunpack.c.l.b16 %v1954
    %v2335 = vunpack.c.h.b16 %v1954
    %v2336 = vunpack.c.l.b16 %v1955
    %v2337 = vunpack.c.h.b16 %v1955
    %v2338 = vunpack.c.l.b16 %v1956
    %v2339 = vunpack.c.h.b16 %v1956
    %v2340 = vunpack.c.l.b16 %v1957
    %v2341 = vunpack.c.h.b16 %v1957
    %v2342 = vunpack.c.l.b16 %v1958
    %v2343 = vunpack.c.h.b16 %v1958
    %v2344 = vunpack.c.l.b16 %v1959
    %v2345 = vunpack.c.h.b16 %v1959
    %v2346 = vunpack.c.l.b16 %v1960
    %v2347 = vunpack.c.h.b16 %v1960
    %v2348 = vunpack.c.l.b16 %v1961
    %v2349 = vunpack.c.h.b16 %v1961
    %v2350 = vunpack.c.l.b16 %v1962
    %v2351 = vunpack.c.h.b16 %v1962
    %v2352 = vunpack.c.l.b16 %v1963
    %v2353 = vunpack.c.h.b16 %v1963
    %v2354 = vunpack.c.l.b16 %v1964
    %v2355 = vunpack.c.h.b16 %v1964
    %v2356 = vunpack.c.l.b16 %v1965
    %v2357 = vunpack.c.h.b16 %v1965
    %v2358 = vunpack.c.l.b16 %v1966
    %v2359 = vunpack.c.h.b16 %v1966
    %v2360 = vunpack.c.l.b16 %v1967
    %v2361 = vunpack.c.h.b16 %v1967
    %v2362 = vunpack.c.l.b16 %v1968
    %v2363 = vunpack.c.h.b16 %v1968
    %v2364 = vunpack.c.l.b16 %v1969
    %v2365 = vunpack.c.h.b16 %v1969
    %v2366 = vunpack.c.l.b16 %v1970
    %v2367 = vunpack.c.h.b16 %v1970
    %v2368 = vunpack.c.l.b16 %v1971
    %v2369 = vunpack.c.h.b16 %v1971
    %v2370 = vunpack.c.l.b16 %v1972
    %v2371 = vunpack.c.h.b16 %v1972
    %v2372 = vunpack.c.l.b16 %v1973
    %v2373 = vunpack.c.h.b16 %v1973
    %v2374 = vunpack.c.l.b16 %v1974
    %v2375 = vunpack.c.h.b16 %v1974
    %v2376 = vunpack.c.l.b16 %v1975
    %v2377 = vunpack.c.h.b16 %v1975
    %v2378 = vunpack.c.l.b16 %v1976
    %v2379 = vunpack.c.h.b16 %v1976
    %v2380 = vunpack.c.l.b16 %v1977
    %v2381 = vunpack.c.h.b16 %v1977
    %v2382 = vunpack.c.l.b16 %v1978
    %v2383 = vunpack.c.h.b16 %v1978
    %v2384 = vunpack.c.l.b16 %v1979
    %v2385 = vunpack.c.h.b16 %v1979
    %v2386 = vpack.c.b16 %v2134, %v2130
    %v2387 = vpack.c.b16 %v2135, %v2131
    %v2388 = vpack.c.b16 %v2136, %v2132
    %v2389 = vpack.c.b16 %v2137, %v2133
    %v2390 = vpack.c.b16 %v2142, %v2138
    %v2391 = vpack.c.b16 %v2143, %v2139
    %v2392 = vpack.c.b16 %v2144, %v2140
    %v2393 = vpack.c.b16 %v2145, %v2141
    %v2394 = vpack.c.b16 %v2150, %v2146
    %v2395 = vpack.c.b16 %v2151, %v2147
    %v2396 = vpack.c.b16 %v2152, %v2148
    %v2397 = vpack.c.b16 %v2153, %v2149
    %v2398 = vpack.c.b16 %v2158, %v2154
    %v2399 = vpack.c.b16 %v2159, %v2155
    %v2400 = vpack.c.b16 %v2160, %v2156
    %v2401 = vpack.c.b16 %v2161, %v2157
    %v2402 = vpack.c.b16 %v2166, %v2162
    %v2403 = vpack.c.b16 %v2167, %v2163
    %v2404 = vpack.c.b16 %v2168, %v2164
    %v2405 = vpack.c.b16 %v2169, %v2165
    %v2406 = vpack.c.b16 %v2174, %v2170
    %v2407 = vpack.c.b16 %v2175, %v2171
    %v2408 = vpack.c.b16 %v2176, %v2172
    %v2409 = vpack.c.b16 %v2177, %v2173
    %v2410 = vpack.c.b16 %v2182, %v2178
    %v2411 = vpack.c.b16 %v2183, %v2179
    %v2412 = vpack.c.b16 %v2184, %v2180
    %v2413 = vpack.c.b16 %v2185, %v2181
    %v2414 = vpack.c.b16 %v2190, %v2186
    %v2415 = vpack.c.b16 %v2191, %v2187
    %v2416 = vpack.c.b16 %v2192, %v2188
    %v2417 = vpack.c.b16 %v2193, %v2189
    %v2418 = vpack.c.b16 %v2198, %v2194
    %v2419 = vpack.c.b16 %v2199, %v2195
    %v2420 = vpack.c.b16 %v2200, %v2196
    %v2421 = vpack.c.b16 %v2201, %v2197
    %v2422 = vpack.c.b16 %v2206, %v2202
    %v2423 = vpack.c.b16 %v2207, %v2203
    %v2424 = vpack.c.b16 %v2208, %v2204
    %v2425 = vpack.c.b16 %v2209, %v2205
    %v2426 = vpack.c.b16 %v2214, %v2210
    %v2427 = vpack.c.b16 %v2215, %v2211
    %v2428 = vpack.c.b16 %v2216, %v2212
    %v2429 = vpack.c.b16 %v2217, %v2213
    %v2430 = vpack.c.b16 %v2222, %v2218
    %v2431 = vpack.c.b16 %v2223, %v2219
    %v2432 = vpack.c.b16 %v2224, %v2220
    %v2433 = vpack.c.b16 %v2225, %v2221
    %v2434 = vpack.c.b16 %v2230, %v2226
    %v2435 = vpack.c.b16 %v2231, %v2227
    %v2436 = vpack.c.b16 %v2232, %v2228
    %v2437 = vpack.c.b16 %v2233, %v2229
    %v2438 = vpack.c.b16 %v2238, %v2234
    %v2439 = vpack.c.b16 %v2239, %v2235
    %v2440 = vpack.c.b16 %v2240, %v2236
    %v2441 = vpack.c.b16 %v2241, %v2237
    %v2442 = vpack.c.b16 %v2246, %v2242
    %v2443 = vpack.c.b16 %v2247, %v2243
    %v2444 = vpack.c.b16 %v2248, %v2244
    %v2445 = vpack.c.b16 %v2249, %v2245
    %v2446 = vpack.c.b16 %v2254, %v2250
    %v2447 = vpack.c.b16 %v2255, %v2251
    %v2448 = vpack.c.b16 %v2256, %v2252
    %v2449 = vpack.c.b16 %v2257, %v2253
    %v2450 = vpack.c.b16 %v2262, %v2258
    %v2451 = vpack.c.b16 %v2263, %v2259
    %v2452 = vpack.c.b16 %v2264, %v2260
    %v2453 = vpack.c.b16 %v2265, %v2261
    %v2454 = vpack.c.b16 %v2270, %v2266
    %v2455 = vpack.c.b16 %v2271, %v2267
    %v2456 = vpack.c.b16 %v2272, %v2268
    %v2457 = vpack.c.b16 %v2273, %v2269
    %v2458 = vpack.c.b16 %v2278, %v2274
    %v2459 = vpack.c.b16 %v2279, %v2275
    %v2460 = vpack.c.b16 %v2280, %v2276
    %v2461 = vpack.c.b16 %v2281, %v2277
    %v2462 = vpack.c.b16 %v2286, %v2282
    %v2463 = vpack.c.b16 %v2287, %v2283
    %v2464 = vpack.c.b16 %v2288, %v2284
    %v2465 = vpack.c.b16 %v2289, %v2285
    %v2466 = vpack.c.b16 %v2294, %v2290
    %v2467 = vpack.c.b16 %v2295, %v2291
    %v2468 = vpack.c.b16 %v2296, %v2292
    %v2469 = vpack.c.b16 %v2297, %v2293
    %v2470 = vpack.c.b16 %v2302, %v2298
    %v2471 = vpack.c.b16 %v2303, %v2299
    %v2472 = vpack.c.b16 %v2304, %v2300
    %v2473 = vpack.c.b16 %v2305, %v2301
    %v2474 = vpack.c.b16 %v2310, %v2306
    %v2475 = vpack.c.b16 %v2311, %v2307
    %v2476 = vpack.c.b16 %v2312, %v2308
    %v2477 = vpack.c.b16 %v2313, %v2309
    %v2478 = vpack.c.b16 %v2318, %v2314
    %v2479 = vpack.c.b16 %v2319, %v2315
    %v2480 = vpack.c.b16 %v2320, %v2316
    %v2481 = vpack.c.b16 %v2321, %v2317
    %v2482 = vpack.c.b16 %v2326, %v2322
    %v2483 = vpack.c.b16 %v2327, %v2323
    %v2484 = vpack.c.b16 %v2328, %v2324
    %v2485 = vpack.c.b16 %v2329, %v2325
    %v2486 = vpack.c.b16 %v2334, %v2330
    %v2487 = vpack.c.b16 %v2335, %v2331
    %v2488 = vpack.c.b16 %v2336, %v2332
    %v2489 = vpack.c.b16 %v2337, %v2333
    %v2490 = vpack.c.b16 %v2342, %v2338
    %v2491 = vpack.c.b16 %v2343, %v2339
    %v2492 = vpack.c.b16 %v2344, %v2340
    %v2493 = vpack.c.b16 %v2345, %v2341
    %v2494 = vpack.c.b16 %v2350, %v2346
    %v2495 = vpack.c.b16 %v2351, %v2347
    %v2496 = vpack.c.b16 %v2352, %v2348
    %v2497 = vpack.c.b16 %v2353, %v2349
    %v2498 = vpack.c.b16 %v2358, %v2354
    %v2499 = vpack.c.b16 %v2359, %v2355
    %v2500 = vpack.c.b16 %v2360, %v2356
    %v2501 = vpack.c.b16 %v2361, %v2357
    %v2502 = vpack.c.b16 %v2366, %v2362
    %v2503 = vpack.c.b16 %v2367, %v2363
    %v2504 = vpack.c.b16 %v2368, %v2364
    %v2505 = vpack.c.b16 %v2369, %v2365
    %v2506 = vpack.c.b16 %v2374, %v2370
    %v2507 = vpack.c.b16 %v2375, %v2371
    %v2508 = vpack.c.b16 %v2376, %v2372
    %v2509 = vpack.c.b16 %v2377, %v2373
    %v2510 = vpack.c.b16 %v2382, %v2378
    %v2511 = vpack.c.b16 %v2383, %v2379
    %v2512 = vpack.c.b16 %v2384, %v2380
    %v2513 = vpack.c.b16 %v2385, %v2381
    %2642 = vmatprep.subr.bf16.mxu0 %v2387
    %2643 = vmatpush1.bf16.msra.mxu0 %v2386
    %2644 = vmatprep.subr.bf16.mxu0 %v2391
    %2645 = vmatpush1.bf16.msra.mxu0 %v2390
    %2646 = vmatprep.subr.bf16.mxu0 %v2395
    %2647 = vmatpush1.bf16.msra.mxu0 %v2394
    %2648 = vmatprep.subr.bf16.mxu0 %v2399
    %2649 = vmatpush1.bf16.msra.mxu0 %v2398
    %2650 = vmatprep.subr.bf16.mxu0 %v2403
    %2651 = vmatpush1.bf16.msra.mxu0 %v2402
    %2652 = vmatprep.subr.bf16.mxu0 %v2407
    %2653 = vmatpush1.bf16.msra.mxu0 %v2406
    %2654 = vmatprep.subr.bf16.mxu0 %v2411
    %2655 = vmatpush1.bf16.msra.mxu0 %v2410
    %2656 = vmatprep.subr.bf16.mxu0 %v2415
    %2657 = vmatpush1.bf16.msra.mxu0 %v2414
    %2658 = vmatprep.subr.bf16.mxu0 %v2419
    %2659 = vmatpush1.bf16.msra.mxu0 %v2418
    %2660 = vmatprep.subr.bf16.mxu0 %v2423
    %2661 = vmatpush1.bf16.msra.mxu0 %v2422
    %2662 = vmatprep.subr.bf16.mxu0 %v2427
    %2663 = vmatpush1.bf16.msra.mxu0 %v2426
    %2664 = vmatprep.subr.bf16.mxu0 %v2431
    %2665 = vmatpush1.bf16.msra.mxu0 %v2430
    %2666 = vmatprep.subr.bf16.mxu0 %v2435
    %2667 = vmatpush1.bf16.msra.mxu0 %v2434
    %2668 = vmatprep.subr.bf16.mxu0 %v2439
    %2669 = vmatpush1.bf16.msra.mxu0 %v2438
    %2670 = vmatprep.subr.bf16.mxu0 %v2443
    %2671 = vmatpush1.bf16.msra.mxu0 %v2442
    %2672 = vmatprep.subr.bf16.mxu0 %v2447
    %2673 = vmatpush1.bf16.msra.mxu0 %v2446
    %2674 = vmatprep.mubr.bf16.mxu0 %v1849
    %2675 = vmatmul.mubr.bf16.gmra.mrb[0].mxu0 %v1848
    %v2676 = vpop.f32.mrb[0].mxu0
    %v2677 = vadd.f32 %v1985, %v2676
    %v2678 = vpop.f32.mrb[0].mxu0
    %v2679 = vadd.f32 %v1989, %v2678
    %v2680 = vpop.f32.mrb[0].mxu0
    %v2681 = vpop.f32.mrb[0].mxu0
    %2682 = vdwg.mxu0
    %2683 = vmatprep.subr.bf16.mxu0 %v2451
    %2684 = vmatpush1.bf16.msra.mxu0 %v2450
    %2685 = vmatprep.subr.bf16.mxu0 %v2455
    %2686 = vmatpush1.bf16.msra.mxu0 %v2454
    %2687 = vmatprep.subr.bf16.mxu0 %v2459
    %2688 = vmatpush1.bf16.msra.mxu0 %v2458
    %2689 = vmatprep.subr.bf16.mxu0 %v2463
    %2690 = vmatpush1.bf16.msra.mxu0 %v2462
    %2691 = vmatprep.subr.bf16.mxu0 %v2467
    %2692 = vmatpush1.bf16.msra.mxu0 %v2466
    %2693 = vmatprep.subr.bf16.mxu0 %v2471
    %2694 = vmatpush1.bf16.msra.mxu0 %v2470
    %2695 = vmatprep.subr.bf16.mxu0 %v2475
    %2696 = vmatpush1.bf16.msra.mxu0 %v2474
    %2697 = vmatprep.subr.bf16.mxu0 %v2479
    %2698 = vmatpush1.bf16.msra.mxu0 %v2478
    %2699 = vmatprep.subr.bf16.mxu0 %v2483
    %2700 = vmatpush1.bf16.msra.mxu0 %v2482
    %2701 = vmatprep.subr.bf16.mxu0 %v2487
    %2702 = vmatpush1.bf16.msra.mxu0 %v2486
    %2703 = vmatprep.subr.bf16.mxu0 %v2491
    %2704 = vmatpush1.bf16.msra.mxu0 %v2490
    %2705 = vmatprep.subr.bf16.mxu0 %v2495
    %2706 = vmatpush1.bf16.msra.mxu0 %v2494
    %2707 = vmatprep.subr.bf16.mxu0 %v2499
    %2708 = vmatpush1.bf16.msra.mxu0 %v2498
    %2709 = vmatprep.subr.bf16.mxu0 %v2503
    %2710 = vmatpush1.bf16.msra.mxu0 %v2502
    %2711 = vmatprep.subr.bf16.mxu0 %v2507
    %2712 = vmatpush1.bf16.msra.mxu0 %v2506
    %2713 = vmatprep.subr.bf16.mxu0 %v2511
    %2714 = vmatpush1.bf16.msra.mxu0 %v2510
    %2715 = vmatprep.mubr.bf16.mxu0 %v1851
    %2716 = vmatmul.mubr.bf16.gmra.mrb[0].mxu0 %v1850
    %v2717 = vpop.f32.mrb[0].mxu0
    %v2718 = vadd.f32 %v2677, %v2717
    %v2719 = vpop.f32.mrb[0].mxu0
    %v2720 = vadd.f32 %v2679, %v2719
    %v2721 = vpop.f32.mrb[0].mxu0
    %v2722 = vpop.f32.mrb[0].mxu0
    %2723 = vdwg.mxu0
    %2724 = vmatprep.subr.bf16.mxu0 %v2389
    %2725 = vmatpush1.bf16.msra.mxu0 %v2388
    %2726 = vmatprep.subr.bf16.mxu0 %v2393
    %2727 = vmatpush1.bf16.msra.mxu0 %v2392
    %2728 = vmatprep.subr.bf16.mxu0 %v2397
    %2729 = vmatpush1.bf16.msra.mxu0 %v2396
    %2730 = vmatprep.subr.bf16.mxu0 %v2401
    %2731 = vmatpush1.bf16.msra.mxu0 %v2400
    %2732 = vmatprep.subr.bf16.mxu0 %v2405
    %2733 = vmatpush1.bf16.msra.mxu0 %v2404
    %2734 = vmatprep.subr.bf16.mxu0 %v2409
    %2735 = vmatpush1.bf16.msra.mxu0 %v2408
    %2736 = vmatprep.subr.bf16.mxu0 %v2413
    %2737 = vmatpush1.bf16.msra.mxu0 %v2412
    %2738 = vmatprep.subr.bf16.mxu0 %v2417
    %2739 = vmatpush1.bf16.msra.mxu0 %v2416
    %2740 = vmatprep.subr.bf16.mxu0 %v2421
    %2741 = vmatpush1.bf16.msra.mxu0 %v2420
    %2742 = vmatprep.subr.bf16.mxu0 %v2425
    %2743 = vmatpush1.bf16.msra.mxu0 %v2424
    %2744 = vmatprep.subr.bf16.mxu0 %v2429
    %2745 = vmatpush1.bf16.msra.mxu0 %v2428
    %2746 = vmatprep.subr.bf16.mxu0 %v2433
    %2747 = vmatpush1.bf16.msra.mxu0 %v2432
    %2748 = vmatprep.subr.bf16.mxu0 %v2437
    %2749 = vmatpush1.bf16.msra.mxu0 %v2436
    %2750 = vmatprep.subr.bf16.mxu0 %v2441
    %2751 = vmatpush1.bf16.msra.mxu0 %v2440
    %2752 = vmatprep.subr.bf16.mxu0 %v2445
    %2753 = vmatpush1.bf16.msra.mxu0 %v2444
    %2754 = vmatprep.subr.bf16.mxu0 %v2449
    %2755 = vmatpush1.bf16.msra.mxu0 %v2448
    %2756 = vmatprep.mubr.bf16.mxu0 %v1849
    %2757 = vmatmul.mubr.bf16.gmra.mrb[0].mxu0 %v1848
    %v2758 = vpop.f32.mrb[0].mxu0
    %v2759 = vadd.f32 %v1993, %v2758
    %v2760 = vpop.f32.mrb[0].mxu0
    %v2761 = vadd.f32 %v1997, %v2760
    %v2762 = vpop.f32.mrb[0].mxu0
    %v2763 = vpop.f32.mrb[0].mxu0
    %2764 = vdwg.mxu0
    %2765 = vmatprep.subr.bf16.mxu0 %v2453
    %2766 = vmatpush1.bf16.msra.mxu0 %v2452
    %2767 = vmatprep.subr.bf16.mxu0 %v2457
    %2768 = vmatpush1.bf16.msra.mxu0 %v2456
    %2769 = vmatprep.subr.bf16.mxu0 %v2461
    %2770 = vmatpush1.bf16.msra.mxu0 %v2460
    %2771 = vmatprep.subr.bf16.mxu0 %v2465
    %2772 = vmatpush1.bf16.msra.mxu0 %v2464
    %2773 = vmatprep.subr.bf16.mxu0 %v2469
    %2774 = vmatpush1.bf16.msra.mxu0 %v2468
    %2775 = vmatprep.subr.bf16.mxu0 %v2473
    %2776 = vmatpush1.bf16.msra.mxu0 %v2472
    %2777 = vmatprep.subr.bf16.mxu0 %v2477
    %2778 = vmatpush1.bf16.msra.mxu0 %v2476
    %2779 = vmatprep.subr.bf16.mxu0 %v2481
    %2780 = vmatpush1.bf16.msra.mxu0 %v2480
    %2781 = vmatprep.subr.bf16.mxu0 %v2485
    %2782 = vmatpush1.bf16.msra.mxu0 %v2484
    %2783 = vmatprep.subr.bf16.mxu0 %v2489
    %2784 = vmatpush1.bf16.msra.mxu0 %v2488
    %2785 = vmatprep.subr.bf16.mxu0 %v2493
    %2786 = vmatpush1.bf16.msra.mxu0 %v2492
    %2787 = vmatprep.subr.bf16.mxu0 %v2497
    %2788 = vmatpush1.bf16.msra.mxu0 %v2496
    %2789 = vmatprep.subr.bf16.mxu0 %v2501
    %2790 = vmatpush1.bf16.msra.mxu0 %v2500
    %2791 = vmatprep.subr.bf16.mxu0 %v2505
    %2792 = vmatpush1.bf16.msra.mxu0 %v2504
    %2793 = vmatprep.subr.bf16.mxu0 %v2509
    %2794 = vmatpush1.bf16.msra.mxu0 %v2508
    %2795 = vmatprep.subr.bf16.mxu0 %v2513
    %2796 = vmatpush1.bf16.msra.mxu0 %v2512
    %2797 = vmatprep.mubr.bf16.mxu0 %v1851
    %2798 = vmatmul.mubr.bf16.gmra.mrb[0].mxu0 %v1850
    %v2799 = vpop.f32.mrb[0].mxu0
    %v2800 = vadd.f32 %v2759, %v2799
    %v2801 = vpop.f32.mrb[0].mxu0
    %v2802 = vadd.f32 %v2761, %v2801
    %v2803 = vpop.f32.mrb[0].mxu0
    %v2804 = vpop.f32.mrb[0].mxu0
    %2805 = vdwg.mxu0
    %vm2806 = vcmp.ge.f32.partialorder %v2718, 0.0
    %vm2807 = vcmp.ge.f32.partialorder %v2720, 0.0
    %vm2808 = vcmp.ge.f32.partialorder %v2800, 0.0
    %vm2809 = vcmp.ge.f32.partialorder %v2802, 0.0
    %v2810 = vmul.f32 %v2718, 0.2
    %v2811 = vmul.f32 %v2720, 0.2
    %v2812 = vmul.f32 %v2800, 0.2
    %v2813 = vmul.f32 %v2802, 0.2
    %v2814 = vsel %vm2806, %v2718, %v2810
    %v2815 = vsel %vm2807, %v2720, %v2811
    %v2816 = vsel %vm2808, %v2800, %v2812
    %v2817 = vsel %vm2809, %v2802, %v2813
    %v2818 = vpack.c.bf16 %v2814, %v2814
    %v2819 = vpack.c.bf16 %v2815, %v2815
    %v2820 = vpack.c.bf16 %v2816, %v2816
    %v2821 = vpack.c.bf16 %v2817, %v2817
    %v2822 = vld [vmem:[%s15] sm:$0xf]
    %v2823 = vld [vmem:[%s15 + $0x4] sm:$0xf]
    %v2824 = vld [vmem:[%s15 + $0x8] sm:$0xf]
    %v2825 = vld [vmem:[%s15 + $0xc] sm:$0xf]
    %v2826 = vld [vmem:[%s15 + $0x10] sm:$0xf]
    %v2827 = vld [vmem:[%s15 + $0x14] sm:$0xf]
    %v2828 = vld [vmem:[%s15 + $0x18] sm:$0xf]
    %v2829 = vld [vmem:[%s15 + $0x1c] sm:$0xf]
    %v2830 = vld [vmem:[%s15 + $0x20] sm:$0xf]
    %v2831 = vld [vmem:[%s15 + $0x24] sm:$0xf]
    %v2832 = vld [vmem:[%s15 + $0x28] sm:$0xf]
    %v2833 = vld [vmem:[%s15 + $0x2c] sm:$0xf]
    %v2834 = vld [vmem:[%s15 + $0x30] sm:$0xf]
    %v2835 = vld [vmem:[%s15 + $0x34] sm:$0xf]
    %v2836 = vld [vmem:[%s15 + $0x38] sm:$0xf]
    %v2837 = vld [vmem:[%s15 + $0x3c] sm:$0xf]
    %v2838 = vld [vmem:[%s15 + $0x40] sm:$0xf]
    %v2839 = vld [vmem:[%s15 + $0x44] sm:$0xf]
    %v2840 = vld [vmem:[%s15 + $0x48] sm:$0xf]
    %v2841 = vld [vmem:[%s15 + $0x4c] sm:$0xf]
    %v2842 = vld [vmem:[%s15 + $0x50] sm:$0xf]
    %v2843 = vld [vmem:[%s15 + $0x54] sm:$0xf]
    %v2844 = vld [vmem:[%s15 + $0x58] sm:$0xf]
    %v2845 = vld [vmem:[%s15 + $0x5c] sm:$0xf]
    %v2846 = vld [vmem:[%s15 + $0x60] sm:$0xf]
    %v2847 = vld [vmem:[%s15 + $0x64] sm:$0xf]
    %v2848 = vld [vmem:[%s15 + $0x68] sm:$0xf]
    %v2849 = vld [vmem:[%s15 + $0x6c] sm:$0xf]
    %v2850 = vld [vmem:[%s15 + $0x70] sm:$0xf]
    %v2851 = vld [vmem:[%s15 + $0x74] sm:$0xf]
    %v2852 = vld [vmem:[%s15 + $0x78] sm:$0xf]
    %v2853 = vld [vmem:[%s15 + $0x7c] sm:$0xf]
    %v2854 = vld [vmem:[%s15 + $0x80] sm:$0xf]
    %v2855 = vld [vmem:[%s15 + $0x84] sm:$0xf]
    %v2856 = vld [vmem:[%s15 + $0x88] sm:$0xf]
    %v2857 = vld [vmem:[%s15 + $0x8c] sm:$0xf]
    %v2858 = vld [vmem:[%s15 + $0x90] sm:$0xf]
    %v2859 = vld [vmem:[%s15 + $0x94] sm:$0xf]
    %v2860 = vld [vmem:[%s15 + $0x98] sm:$0xf]
    %v2861 = vld [vmem:[%s15 + $0x9c] sm:$0xf]
    %v2862 = vld [vmem:[%s15 + $0xa0] sm:$0xf]
    %v2863 = vld [vmem:[%s15 + $0xa4] sm:$0xf]
    %v2864 = vld [vmem:[%s15 + $0xa8] sm:$0xf]
    %v2865 = vld [vmem:[%s15 + $0xac] sm:$0xf]
    %v2866 = vld [vmem:[%s15 + $0xb0] sm:$0xf]
    %v2867 = vld [vmem:[%s15 + $0xb4] sm:$0xf]
    %v2868 = vld [vmem:[%s15 + $0xb8] sm:$0xf]
    %v2869 = vld [vmem:[%s15 + $0xbc] sm:$0xf]
    %v2870 = vld [vmem:[%s15 + $0xc0] sm:$0xf]
    %v2871 = vld [vmem:[%s15 + $0xc4] sm:$0xf]
    %v2872 = vld [vmem:[%s15 + $0xc8] sm:$0xf]
    %v2873 = vld [vmem:[%s15 + $0xcc] sm:$0xf]
    %v2874 = vld [vmem:[%s15 + $0xd0] sm:$0xf]
    %v2875 = vld [vmem:[%s15 + $0xd4] sm:$0xf]
    %v2876 = vld [vmem:[%s15 + $0xd8] sm:$0xf]
    %v2877 = vld [vmem:[%s15 + $0xdc] sm:$0xf]
    %v2878 = vld [vmem:[%s15 + $0xe0] sm:$0xf]
    %v2879 = vld [vmem:[%s15 + $0xe4] sm:$0xf]
    %v2880 = vld [vmem:[%s15 + $0xe8] sm:$0xf]
    %v2881 = vld [vmem:[%s15 + $0xec] sm:$0xf]
    %v2882 = vld [vmem:[%s15 + $0xf0] sm:$0xf]
    %v2883 = vld [vmem:[%s15 + $0xf4] sm:$0xf]
    %v2884 = vld [vmem:[%s15 + $0xf8] sm:$0xf]
    %v2885 = vld [vmem:[%s15 + $0xfc] sm:$0xf]
    %v2886 = vld [vmem:[%s16] sm:$0x1]
    %v2888 = vlaneseq
    %v2889 = vshrl.u32 %v2888, 7
    %v2890 = vsub.s32 0, %v2889
    %v2891 = vrot.slane %v2886, %v2890
    %v2957 = vunpack.c.l.b16 %v2822
    %v2958 = vunpack.c.l.b16 %v2823
    %v2959 = vunpack.c.l.b16 %v2824
    %v2960 = vunpack.c.l.b16 %v2825
    %v2961 = vunpack.c.l.b16 %v2826
    %v2962 = vunpack.c.l.b16 %v2827
    %v2963 = vunpack.c.l.b16 %v2828
    %v2964 = vunpack.c.l.b16 %v2829
    %v2965 = vunpack.c.l.b16 %v2830
    %v2966 = vunpack.c.l.b16 %v2831
    %v2967 = vunpack.c.l.b16 %v2832
    %v2968 = vunpack.c.l.b16 %v2833
    %v2969 = vunpack.c.l.b16 %v2834
    %v2970 = vunpack.c.l.b16 %v2835
    %v2971 = vunpack.c.l.b16 %v2836
    %v2972 = vunpack.c.l.b16 %v2837
    %v2973 = vunpack.c.l.b16 %v2838
    %v2974 = vunpack.c.l.b16 %v2839
    %v2975 = vunpack.c.l.b16 %v2840
    %v2976 = vunpack.c.l.b16 %v2841
    %v2977 = vunpack.c.l.b16 %v2842
    %v2978 = vunpack.c.l.b16 %v2843
    %v2979 = vunpack.c.l.b16 %v2844
    %v2980 = vunpack.c.l.b16 %v2845
    %v2981 = vunpack.c.l.b16 %v2846
    %v2982 = vunpack.c.l.b16 %v2847
    %v2983 = vunpack.c.l.b16 %v2848
    %v2984 = vunpack.c.l.b16 %v2849
    %v2985 = vunpack.c.l.b16 %v2850
    %v2986 = vunpack.c.l.b16 %v2851
    %v2987 = vunpack.c.l.b16 %v2852
    %v2988 = vunpack.c.l.b16 %v2853
    %v2989 = vunpack.c.l.b16 %v2854
    %v2990 = vunpack.c.l.b16 %v2855
    %v2991 = vunpack.c.l.b16 %v2856
    %v2992 = vunpack.c.l.b16 %v2857
    %v2993 = vunpack.c.l.b16 %v2858
    %v2994 = vunpack.c.l.b16 %v2859
    %v2995 = vunpack.c.l.b16 %v2860
    %v2996 = vunpack.c.l.b16 %v2861
    %v2997 = vunpack.c.l.b16 %v2862
    %v2998 = vunpack.c.l.b16 %v2863
    %v2999 = vunpack.c.l.b16 %v2864
    %v3000 = vunpack.c.l.b16 %v2865
    %v3001 = vunpack.c.l.b16 %v2866
    %v3002 = vunpack.c.l.b16 %v2867
    %v3003 = vunpack.c.l.b16 %v2868
    %v3004 = vunpack.c.l.b16 %v2869
    %v3005 = vunpack.c.l.b16 %v2870
    %v3006 = vunpack.c.l.b16 %v2871
    %v3007 = vunpack.c.l.b16 %v2872
    %v3008 = vunpack.c.l.b16 %v2873
    %v3009 = vunpack.c.l.b16 %v2874
    %v3010 = vunpack.c.l.b16 %v2875
    %v3011 = vunpack.c.l.b16 %v2876
    %v3012 = vunpack.c.l.b16 %v2877
    %v3013 = vunpack.c.l.b16 %v2878
    %v3014 = vunpack.c.l.b16 %v2879
    %v3015 = vunpack.c.l.b16 %v2880
    %v3016 = vunpack.c.l.b16 %v2881
    %v3017 = vunpack.c.l.b16 %v2882
    %v3018 = vunpack.c.l.b16 %v2883
    %v3019 = vunpack.c.l.b16 %v2884
    %v3020 = vunpack.c.l.b16 %v2885
    %v3021 = vpack.c.b16 %v2958, %v2957
    %v3022 = vpack.c.b16 %v2960, %v2959
    %v3023 = vpack.c.b16 %v2962, %v2961
    %v3024 = vpack.c.b16 %v2964, %v2963
    %v3025 = vpack.c.b16 %v2966, %v2965
    %v3026 = vpack.c.b16 %v2968, %v2967
    %v3027 = vpack.c.b16 %v2970, %v2969
    %v3028 = vpack.c.b16 %v2972, %v2971
    %v3029 = vpack.c.b16 %v2974, %v2973
    %v3030 = vpack.c.b16 %v2976, %v2975
    %v3031 = vpack.c.b16 %v2978, %v2977
    %v3032 = vpack.c.b16 %v2980, %v2979
    %v3033 = vpack.c.b16 %v2982, %v2981
    %v3034 = vpack.c.b16 %v2984, %v2983
    %v3035 = vpack.c.b16 %v2986, %v2985
    %v3036 = vpack.c.b16 %v2988, %v2987
    %v3037 = vpack.c.b16 %v2990, %v2989
    %v3038 = vpack.c.b16 %v2992, %v2991
    %v3039 = vpack.c.b16 %v2994, %v2993
    %v3040 = vpack.c.b16 %v2996, %v2995
    %v3041 = vpack.c.b16 %v2998, %v2997
    %v3042 = vpack.c.b16 %v3000, %v2999
    %v3043 = vpack.c.b16 %v3002, %v3001
    %v3044 = vpack.c.b16 %v3004, %v3003
    %v3045 = vpack.c.b16 %v3006, %v3005
    %v3046 = vpack.c.b16 %v3008, %v3007
    %v3047 = vpack.c.b16 %v3010, %v3009
    %v3048 = vpack.c.b16 %v3012, %v3011
    %v3049 = vpack.c.b16 %v3014, %v3013
    %v3050 = vpack.c.b16 %v3016, %v3015
    %v3051 = vpack.c.b16 %v3018, %v3017
    %v3052 = vpack.c.b16 %v3020, %v3019
    %3085 = vmatprep.subr.bf16.mxu0 0
    %3086 = vmatpush1.bf16.msra.mxu0 %v3021
    %3087 = vmatprep.subr.bf16.mxu0 0
    %3088 = vmatpush1.bf16.msra.mxu0 %v3022
    %3089 = vmatprep.subr.bf16.mxu0 0
    %3090 = vmatpush1.bf16.msra.mxu0 %v3023
    %3091 = vmatprep.subr.bf16.mxu0 0
    %3092 = vmatpush1.bf16.msra.mxu0 %v3024
    %3093 = vmatprep.subr.bf16.mxu0 0
    %3094 = vmatpush1.bf16.msra.mxu0 %v3025
    %3095 = vmatprep.subr.bf16.mxu0 0
    %3096 = vmatpush1.bf16.msra.mxu0 %v3026
    %3097 = vmatprep.subr.bf16.mxu0 0
    %3098 = vmatpush1.bf16.msra.mxu0 %v3027
    %3099 = vmatprep.subr.bf16.mxu0 0
    %3100 = vmatpush1.bf16.msra.mxu0 %v3028
    %3101 = vmatprep.subr.bf16.mxu0 0
    %3102 = vmatpush1.bf16.msra.mxu0 %v3029
    %3103 = vmatprep.subr.bf16.mxu0 0
    %3104 = vmatpush1.bf16.msra.mxu0 %v3030
    %3105 = vmatprep.subr.bf16.mxu0 0
    %3106 = vmatpush1.bf16.msra.mxu0 %v3031
    %3107 = vmatprep.subr.bf16.mxu0 0
    %3108 = vmatpush1.bf16.msra.mxu0 %v3032
    %3109 = vmatprep.subr.bf16.mxu0 0
    %3110 = vmatpush1.bf16.msra.mxu0 %v3033
    %3111 = vmatprep.subr.bf16.mxu0 0
    %3112 = vmatpush1.bf16.msra.mxu0 %v3034
    %3113 = vmatprep.subr.bf16.mxu0 0
    %3114 = vmatpush1.bf16.msra.mxu0 %v3035
    %3115 = vmatprep.subr.bf16.mxu0 0
    %3116 = vmatpush1.bf16.msra.mxu0 %v3036
    %3117 = vmatprep.mubr.bf16.mxu0 %v2819
    %3118 = vmatmul.mubr.bf16.gmra.mrb[0].mxu0 %v2818
    %v3119 = vpop.f32.mrb[0].mxu0
    %v3120 = vadd.f32 %v2891, %v3119
    %v3121 = vpop.f32.mrb[0].mxu0
    %v3122 = vpop.f32.mrb[0].mxu0
    %v3123 = vpop.f32.mrb[0].mxu0
    %3124 = vdwg.mxu0
    %3125 = vmatprep.subr.bf16.mxu0 0
    %3126 = vmatpush1.bf16.msra.mxu0 %v3037
    %3127 = vmatprep.subr.bf16.mxu0 0
    %3128 = vmatpush1.bf16.msra.mxu0 %v3038
    %3129 = vmatprep.subr.bf16.mxu0 0
    %3130 = vmatpush1.bf16.msra.mxu0 %v3039
    %3131 = vmatprep.subr.bf16.mxu0 0
    %3132 = vmatpush1.bf16.msra.mxu0 %v3040
    %3133 = vmatprep.subr.bf16.mxu0 0
    %3134 = vmatpush1.bf16.msra.mxu0 %v3041
    %3135 = vmatprep.subr.bf16.mxu0 0
    %3136 = vmatpush1.bf16.msra.mxu0 %v3042
    %3137 = vmatprep.subr.bf16.mxu0 0
    %3138 = vmatpush1.bf16.msra.mxu0 %v3043
    %3139 = vmatprep.subr.bf16.mxu0 0
    %3140 = vmatpush1.bf16.msra.mxu0 %v3044
    %3141 = vmatprep.subr.bf16.mxu0 0
    %3142 = vmatpush1.bf16.msra.mxu0 %v3045
    %3143 = vmatprep.subr.bf16.mxu0 0
    %3144 = vmatpush1.bf16.msra.mxu0 %v3046
    %3145 = vmatprep.subr.bf16.mxu0 0
    %3146 = vmatpush1.bf16.msra.mxu0 %v3047
    %3147 = vmatprep.subr.bf16.mxu0 0
    %3148 = vmatpush1.bf16.msra.mxu0 %v3048
    %3149 = vmatprep.subr.bf16.mxu0 0
    %3150 = vmatpush1.bf16.msra.mxu0 %v3049
    %3151 = vmatprep.subr.bf16.mxu0 0
    %3152 = vmatpush1.bf16.msra.mxu0 %v3050
    %3153 = vmatprep.subr.bf16.mxu0 0
    %3154 = vmatpush1.bf16.msra.mxu0 %v3051
    %3155 = vmatprep.subr.bf16.mxu0 0
    %3156 = vmatpush1.bf16.msra.mxu0 %v3052
    %3157 = vmatprep.mubr.bf16.mxu0 %v2821
    %3158 = vmatmul.mubr.bf16.gmra.mrb[0].mxu0 %v2820
    %v3159 = vpop.f32.mrb[0].mxu0
    %v3160 = vadd.f32 %v3120, %v3159
    %v3161 = vpop.f32.mrb[0].mxu0
    %v3162 = vpop.f32.mrb[0].mxu0
    %v3163 = vpop.f32.mrb[0].mxu0
    %3164 = vdwg.mxu0
    %s3165 = scalar_lea.vmem %s15, 256
    %v3166 = vld [vmem:[%s3165] sm:$0xf]
    %v3167 = vld [vmem:[%s3165 + $0x4] sm:$0xf]
    %v3168 = vld [vmem:[%s3165 + $0x8] sm:$0xf]
    %v3169 = vld [vmem:[%s3165 + $0xc] sm:$0xf]
    %v3170 = vld [vmem:[%s3165 + $0x10] sm:$0xf]
    %v3171 = vld [vmem:[%s3165 + $0x14] sm:$0xf]
    %v3172 = vld [vmem:[%s3165 + $0x18] sm:$0xf]
    %v3173 = vld [vmem:[%s3165 + $0x1c] sm:$0xf]
    %v3174 = vld [vmem:[%s3165 + $0x20] sm:$0xf]
    %v3175 = vld [vmem:[%s3165 + $0x24] sm:$0xf]
    %v3176 = vld [vmem:[%s3165 + $0x28] sm:$0xf]
    %v3177 = vld [vmem:[%s3165 + $0x2c] sm:$0xf]
    %v3178 = vld [vmem:[%s3165 + $0x30] sm:$0xf]
    %v3179 = vld [vmem:[%s3165 + $0x34] sm:$0xf]
    %v3180 = vld [vmem:[%s3165 + $0x38] sm:$0xf]
    %v3181 = vld [vmem:[%s3165 + $0x3c] sm:$0xf]
    %v3182 = vld [vmem:[%s3165 + $0x40] sm:$0xf]
    %v3183 = vld [vmem:[%s3165 + $0x44] sm:$0xf]
    %v3184 = vld [vmem:[%s3165 + $0x48] sm:$0xf]
    %v3185 = vld [vmem:[%s3165 + $0x4c] sm:$0xf]
    %v3186 = vld [vmem:[%s3165 + $0x50] sm:$0xf]
    %v3187 = vld [vmem:[%s3165 + $0x54] sm:$0xf]
    %v3188 = vld [vmem:[%s3165 + $0x58] sm:$0xf]
    %v3189 = vld [vmem:[%s3165 + $0x5c] sm:$0xf]
    %v3190 = vld [vmem:[%s3165 + $0x60] sm:$0xf]
    %v3191 = vld [vmem:[%s3165 + $0x64] sm:$0xf]
    %v3192 = vld [vmem:[%s3165 + $0x68] sm:$0xf]
    %v3193 = vld [vmem:[%s3165 + $0x6c] sm:$0xf]
    %v3194 = vld [vmem:[%s3165 + $0x70] sm:$0xf]
    %v3195 = vld [vmem:[%s3165 + $0x74] sm:$0xf]
    %v3196 = vld [vmem:[%s3165 + $0x78] sm:$0xf]
    %v3197 = vld [vmem:[%s3165 + $0x7c] sm:$0xf]
    %v3198 = vld [vmem:[%s3165 + $0x80] sm:$0xf]
    %v3199 = vld [vmem:[%s3165 + $0x84] sm:$0xf]
    %v3200 = vld [vmem:[%s3165 + $0x88] sm:$0xf]
    %v3201 = vld [vmem:[%s3165 + $0x8c] sm:$0xf]
    %v3202 = vld [vmem:[%s3165 + $0x90] sm:$0xf]
    %v3203 = vld [vmem:[%s3165 + $0x94] sm:$0xf]
    %v3204 = vld [vmem:[%s3165 + $0x98] sm:$0xf]
    %v3205 = vld [vmem:[%s3165 + $0x9c] sm:$0xf]
    %v3206 = vld [vmem:[%s3165 + $0xa0] sm:$0xf]
    %v3207 = vld [vmem:[%s3165 + $0xa4] sm:$0xf]
    %v3208 = vld [vmem:[%s3165 + $0xa8] sm:$0xf]
    %v3209 = vld [vmem:[%s3165 + $0xac] sm:$0xf]
    %v3210 = vld [vmem:[%s3165 + $0xb0] sm:$0xf]
    %v3211 = vld [vmem:[%s3165 + $0xb4] sm:$0xf]
    %v3212 = vld [vmem:[%s3165 + $0xb8] sm:$0xf]
    %v3213 = vld [vmem:[%s3165 + $0xbc] sm:$0xf]
    %v3214 = vld [vmem:[%s3165 + $0xc0] sm:$0xf]
    %v3215 = vld [vmem:[%s3165 + $0xc4] sm:$0xf]
    %v3216 = vld [vmem:[%s3165 + $0xc8] sm:$0xf]
    %v3217 = vld [vmem:[%s3165 + $0xcc] sm:$0xf]
    %v3218 = vld [vmem:[%s3165 + $0xd0] sm:$0xf]
    %v3219 = vld [vmem:[%s3165 + $0xd4] sm:$0xf]
    %v3220 = vld [vmem:[%s3165 + $0xd8] sm:$0xf]
    %v3221 = vld [vmem:[%s3165 + $0xdc] sm:$0xf]
    %v3222 = vld [vmem:[%s3165 + $0xe0] sm:$0xf]
    %v3223 = vld [vmem:[%s3165 + $0xe4] sm:$0xf]
    %v3224 = vld [vmem:[%s3165 + $0xe8] sm:$0xf]
    %v3225 = vld [vmem:[%s3165 + $0xec] sm:$0xf]
    %v3226 = vld [vmem:[%s3165 + $0xf0] sm:$0xf]
    %v3227 = vld [vmem:[%s3165 + $0xf4] sm:$0xf]
    %v3228 = vld [vmem:[%s3165 + $0xf8] sm:$0xf]
    %v3229 = vld [vmem:[%s3165 + $0xfc] sm:$0xf]
    %s3230 = scalar_lea.vmem %s16, 1
    %v3231 = vld [vmem:[%s3230] sm:$0x1]
    %v3233 = vlaneseq
    %v3234 = vshrl.u32 %v3233, 7
    %v3235 = vsub.s32 0, %v3234
    %v3236 = vrot.slane %v3231, %v3235
    %v3302 = vunpack.c.l.b16 %v3166
    %v3303 = vunpack.c.l.b16 %v3167
    %v3304 = vunpack.c.l.b16 %v3168
    %v3305 = vunpack.c.l.b16 %v3169
    %v3306 = vunpack.c.l.b16 %v3170
    %v3307 = vunpack.c.l.b16 %v3171
    %v3308 = vunpack.c.l.b16 %v3172
    %v3309 = vunpack.c.l.b16 %v3173
    %v3310 = vunpack.c.l.b16 %v3174
    %v3311 = vunpack.c.l.b16 %v3175
    %v3312 = vunpack.c.l.b16 %v3176
    %v3313 = vunpack.c.l.b16 %v3177
    %v3314 = vunpack.c.l.b16 %v3178
    %v3315 = vunpack.c.l.b16 %v3179
    %v3316 = vunpack.c.l.b16 %v3180
    %v3317 = vunpack.c.l.b16 %v3181
    %v3318 = vunpack.c.l.b16 %v3182
    %v3319 = vunpack.c.l.b16 %v3183
    %v3320 = vunpack.c.l.b16 %v3184
    %v3321 = vunpack.c.l.b16 %v3185
    %v3322 = vunpack.c.l.b16 %v3186
    %v3323 = vunpack.c.l.b16 %v3187
    %v3324 = vunpack.c.l.b16 %v3188
    %v3325 = vunpack.c.l.b16 %v3189
    %v3326 = vunpack.c.l.b16 %v3190
    %v3327 = vunpack.c.l.b16 %v3191
    %v3328 = vunpack.c.l.b16 %v3192
    %v3329 = vunpack.c.l.b16 %v3193
    %v3330 = vunpack.c.l.b16 %v3194
    %v3331 = vunpack.c.l.b16 %v3195
    %v3332 = vunpack.c.l.b16 %v3196
    %v3333 = vunpack.c.l.b16 %v3197
    %v3334 = vunpack.c.l.b16 %v3198
    %v3335 = vunpack.c.l.b16 %v3199
    %v3336 = vunpack.c.l.b16 %v3200
    %v3337 = vunpack.c.l.b16 %v3201
    %v3338 = vunpack.c.l.b16 %v3202
    %v3339 = vunpack.c.l.b16 %v3203
    %v3340 = vunpack.c.l.b16 %v3204
    %v3341 = vunpack.c.l.b16 %v3205
    %v3342 = vunpack.c.l.b16 %v3206
    %v3343 = vunpack.c.l.b16 %v3207
    %v3344 = vunpack.c.l.b16 %v3208
    %v3345 = vunpack.c.l.b16 %v3209
    %v3346 = vunpack.c.l.b16 %v3210
    %v3347 = vunpack.c.l.b16 %v3211
    %v3348 = vunpack.c.l.b16 %v3212
    %v3349 = vunpack.c.l.b16 %v3213
    %v3350 = vunpack.c.l.b16 %v3214
    %v3351 = vunpack.c.l.b16 %v3215
    %v3352 = vunpack.c.l.b16 %v3216
    %v3353 = vunpack.c.l.b16 %v3217
    %v3354 = vunpack.c.l.b16 %v3218
    %v3355 = vunpack.c.l.b16 %v3219
    %v3356 = vunpack.c.l.b16 %v3220
    %v3357 = vunpack.c.l.b16 %v3221
    %v3358 = vunpack.c.l.b16 %v3222
    %v3359 = vunpack.c.l.b16 %v3223
    %v3360 = vunpack.c.l.b16 %v3224
    %v3361 = vunpack.c.l.b16 %v3225
    %v3362 = vunpack.c.l.b16 %v3226
    %v3363 = vunpack.c.l.b16 %v3227
    %v3364 = vunpack.c.l.b16 %v3228
    %v3365 = vunpack.c.l.b16 %v3229
    %v3366 = vpack.c.b16 %v3303, %v3302
    %v3367 = vpack.c.b16 %v3305, %v3304
    %v3368 = vpack.c.b16 %v3307, %v3306
    %v3369 = vpack.c.b16 %v3309, %v3308
    %v3370 = vpack.c.b16 %v3311, %v3310
    %v3371 = vpack.c.b16 %v3313, %v3312
    %v3372 = vpack.c.b16 %v3315, %v3314
    %v3373 = vpack.c.b16 %v3317, %v3316
    %v3374 = vpack.c.b16 %v3319, %v3318
    %v3375 = vpack.c.b16 %v3321, %v3320
    %v3376 = vpack.c.b16 %v3323, %v3322
    %v3377 = vpack.c.b16 %v3325, %v3324
    %v3378 = vpack.c.b16 %v3327, %v3326
    %v3379 = vpack.c.b16 %v3329, %v3328
    %v3380 = vpack.c.b16 %v3331, %v3330
    %v3381 = vpack.c.b16 %v3333, %v3332
    %v3382 = vpack.c.b16 %v3335, %v3334
    %v3383 = vpack.c.b16 %v3337, %v3336
    %v3384 = vpack.c.b16 %v3339, %v3338
    %v3385 = vpack.c.b16 %v3341, %v3340
    %v3386 = vpack.c.b16 %v3343, %v3342
    %v3387 = vpack.c.b16 %v3345, %v3344
    %v3388 = vpack.c.b16 %v3347, %v3346
    %v3389 = vpack.c.b16 %v3349, %v3348
    %v3390 = vpack.c.b16 %v3351, %v3350
    %v3391 = vpack.c.b16 %v3353, %v3352
    %v3392 = vpack.c.b16 %v3355, %v3354
    %v3393 = vpack.c.b16 %v3357, %v3356
    %v3394 = vpack.c.b16 %v3359, %v3358
    %v3395 = vpack.c.b16 %v3361, %v3360
    %v3396 = vpack.c.b16 %v3363, %v3362
    %v3397 = vpack.c.b16 %v3365, %v3364
    %3430 = vmatprep.subr.bf16.mxu0 0
    %3431 = vmatpush1.bf16.msra.mxu0 %v3366
    %3432 = vmatprep.subr.bf16.mxu0 0
    %3433 = vmatpush1.bf16.msra.mxu0 %v3367
    %3434 = vmatprep.subr.bf16.mxu0 0
    %3435 = vmatpush1.bf16.msra.mxu0 %v3368
    %3436 = vmatprep.subr.bf16.mxu0 0
    %3437 = vmatpush1.bf16.msra.mxu0 %v3369
    %3438 = vmatprep.subr.bf16.mxu0 0
    %3439 = vmatpush1.bf16.msra.mxu0 %v3370
    %3440 = vmatprep.subr.bf16.mxu0 0
    %3441 = vmatpush1.bf16.msra.mxu0 %v3371
    %3442 = vmatprep.subr.bf16.mxu0 0
    %3443 = vmatpush1.bf16.msra.mxu0 %v3372
    %3444 = vmatprep.subr.bf16.mxu0 0
    %3445 = vmatpush1.bf16.msra.mxu0 %v3373
    %3446 = vmatprep.subr.bf16.mxu0 0
    %3447 = vmatpush1.bf16.msra.mxu0 %v3374
    %3448 = vmatprep.subr.bf16.mxu0 0
    %3449 = vmatpush1.bf16.msra.mxu0 %v3375
    %3450 = vmatprep.subr.bf16.mxu0 0
    %3451 = vmatpush1.bf16.msra.mxu0 %v3376
    %3452 = vmatprep.subr.bf16.mxu0 0
    %3453 = vmatpush1.bf16.msra.mxu0 %v3377
    %3454 = vmatprep.subr.bf16.mxu0 0
    %3455 = vmatpush1.bf16.msra.mxu0 %v3378
    %3456 = vmatprep.subr.bf16.mxu0 0
    %3457 = vmatpush1.bf16.msra.mxu0 %v3379
    %3458 = vmatprep.subr.bf16.mxu0 0
    %3459 = vmatpush1.bf16.msra.mxu0 %v3380
    %3460 = vmatprep.subr.bf16.mxu0 0
    %3461 = vmatpush1.bf16.msra.mxu0 %v3381
    %3462 = vmatprep.mubr.bf16.mxu0 %v2819
    %3463 = vmatmul.mubr.bf16.gmra.mrb[0].mxu0 %v2818
    %v3464 = vpop.f32.mrb[0].mxu0
    %v3465 = vadd.f32 %v3236, %v3464
    %v3466 = vpop.f32.mrb[0].mxu0
    %v3467 = vpop.f32.mrb[0].mxu0
    %v3468 = vpop.f32.mrb[0].mxu0
    %3469 = vdwg.mxu0
    %3470 = vmatprep.subr.bf16.mxu0 0
    %3471 = vmatpush1.bf16.msra.mxu0 %v3382
    %3472 = vmatprep.subr.bf16.mxu0 0
    %3473 = vmatpush1.bf16.msra.mxu0 %v3383
    %3474 = vmatprep.subr.bf16.mxu0 0
    %3475 = vmatpush1.bf16.msra.mxu0 %v3384
    %3476 = vmatprep.subr.bf16.mxu0 0
    %3477 = vmatpush1.bf16.msra.mxu0 %v3385
    %3478 = vmatprep.subr.bf16.mxu0 0
    %3479 = vmatpush1.bf16.msra.mxu0 %v3386
    %3480 = vmatprep.subr.bf16.mxu0 0
    %3481 = vmatpush1.bf16.msra.mxu0 %v3387
    %3482 = vmatprep.subr.bf16.mxu0 0
    %3483 = vmatpush1.bf16.msra.mxu0 %v3388
    %3484 = vmatprep.subr.bf16.mxu0 0
    %3485 = vmatpush1.bf16.msra.mxu0 %v3389
    %3486 = vmatprep.subr.bf16.mxu0 0
    %3487 = vmatpush1.bf16.msra.mxu0 %v3390
    %3488 = vmatprep.subr.bf16.mxu0 0
    %3489 = vmatpush1.bf16.msra.mxu0 %v3391
    %3490 = vmatprep.subr.bf16.mxu0 0
    %3491 = vmatpush1.bf16.msra.mxu0 %v3392
    %3492 = vmatprep.subr.bf16.mxu0 0
    %3493 = vmatpush1.bf16.msra.mxu0 %v3393
    %3494 = vmatprep.subr.bf16.mxu0 0
    %3495 = vmatpush1.bf16.msra.mxu0 %v3394
    %3496 = vmatprep.subr.bf16.mxu0 0
    %3497 = vmatpush1.bf16.msra.mxu0 %v3395
    %3498 = vmatprep.subr.bf16.mxu0 0
    %3499 = vmatpush1.bf16.msra.mxu0 %v3396
    %3500 = vmatprep.subr.bf16.mxu0 0
    %3501 = vmatpush1.bf16.msra.mxu0 %v3397
    %3502 = vmatprep.mubr.bf16.mxu0 %v2821
    %3503 = vmatmul.mubr.bf16.gmra.mrb[0].mxu0 %v2820
    %v3504 = vpop.f32.mrb[0].mxu0
    %v3505 = vadd.f32 %v3465, %v3504
    %v3506 = vpop.f32.mrb[0].mxu0
    %v3507 = vpop.f32.mrb[0].mxu0
    %v3508 = vpop.f32.mrb[0].mxu0
    %3509 = vdwg.mxu0
    %s3510 = scalar_lea.vmem %s15, 512
    %v3511 = vld [vmem:[%s3510] sm:$0xf]
    %v3512 = vld [vmem:[%s3510 + $0x4] sm:$0xf]
    %v3513 = vld [vmem:[%s3510 + $0x8] sm:$0xf]
    %v3514 = vld [vmem:[%s3510 + $0xc] sm:$0xf]
    %v3515 = vld [vmem:[%s3510 + $0x10] sm:$0xf]
    %v3516 = vld [vmem:[%s3510 + $0x14] sm:$0xf]
    %v3517 = vld [vmem:[%s3510 + $0x18] sm:$0xf]
    %v3518 = vld [vmem:[%s3510 + $0x1c] sm:$0xf]
    %v3519 = vld [vmem:[%s3510 + $0x20] sm:$0xf]
    %v3520 = vld [vmem:[%s3510 + $0x24] sm:$0xf]
    %v3521 = vld [vmem:[%s3510 + $0x28] sm:$0xf]
    %v3522 = vld [vmem:[%s3510 + $0x2c] sm:$0xf]
    %v3523 = vld [vmem:[%s3510 + $0x30] sm:$0xf]
    %v3524 = vld [vmem:[%s3510 + $0x34] sm:$0xf]
    %v3525 = vld [vmem:[%s3510 + $0x38] sm:$0xf]
    %v3526 = vld [vmem:[%s3510 + $0x3c] sm:$0xf]
    %v3527 = vld [vmem:[%s3510 + $0x40] sm:$0xf]
    %v3528 = vld [vmem:[%s3510 + $0x44] sm:$0xf]
    %v3529 = vld [vmem:[%s3510 + $0x48] sm:$0xf]
    %v3530 = vld [vmem:[%s3510 + $0x4c] sm:$0xf]
    %v3531 = vld [vmem:[%s3510 + $0x50] sm:$0xf]
    %v3532 = vld [vmem:[%s3510 + $0x54] sm:$0xf]
    %v3533 = vld [vmem:[%s3510 + $0x58] sm:$0xf]
    %v3534 = vld [vmem:[%s3510 + $0x5c] sm:$0xf]
    %v3535 = vld [vmem:[%s3510 + $0x60] sm:$0xf]
    %v3536 = vld [vmem:[%s3510 + $0x64] sm:$0xf]
    %v3537 = vld [vmem:[%s3510 + $0x68] sm:$0xf]
    %v3538 = vld [vmem:[%s3510 + $0x6c] sm:$0xf]
    %v3539 = vld [vmem:[%s3510 + $0x70] sm:$0xf]
    %v3540 = vld [vmem:[%s3510 + $0x74] sm:$0xf]
    %v3541 = vld [vmem:[%s3510 + $0x78] sm:$0xf]
    %v3542 = vld [vmem:[%s3510 + $0x7c] sm:$0xf]
    %v3543 = vld [vmem:[%s3510 + $0x80] sm:$0xf]
    %v3544 = vld [vmem:[%s3510 + $0x84] sm:$0xf]
    %v3545 = vld [vmem:[%s3510 + $0x88] sm:$0xf]
    %v3546 = vld [vmem:[%s3510 + $0x8c] sm:$0xf]
    %v3547 = vld [vmem:[%s3510 + $0x90] sm:$0xf]
    %v3548 = vld [vmem:[%s3510 + $0x94] sm:$0xf]
    %v3549 = vld [vmem:[%s3510 + $0x98] sm:$0xf]
    %v3550 = vld [vmem:[%s3510 + $0x9c] sm:$0xf]
    %v3551 = vld [vmem:[%s3510 + $0xa0] sm:$0xf]
    %v3552 = vld [vmem:[%s3510 + $0xa4] sm:$0xf]
    %v3553 = vld [vmem:[%s3510 + $0xa8] sm:$0xf]
    %v3554 = vld [vmem:[%s3510 + $0xac] sm:$0xf]
    %v3555 = vld [vmem:[%s3510 + $0xb0] sm:$0xf]
    %v3556 = vld [vmem:[%s3510 + $0xb4] sm:$0xf]
    %v3557 = vld [vmem:[%s3510 + $0xb8] sm:$0xf]
    %v3558 = vld [vmem:[%s3510 + $0xbc] sm:$0xf]
    %v3559 = vld [vmem:[%s3510 + $0xc0] sm:$0xf]
    %v3560 = vld [vmem:[%s3510 + $0xc4] sm:$0xf]
    %v3561 = vld [vmem:[%s3510 + $0xc8] sm:$0xf]
    %v3562 = vld [vmem:[%s3510 + $0xcc] sm:$0xf]
    %v3563 = vld [vmem:[%s3510 + $0xd0] sm:$0xf]
    %v3564 = vld [vmem:[%s3510 + $0xd4] sm:$0xf]
    %v3565 = vld [vmem:[%s3510 + $0xd8] sm:$0xf]
    %v3566 = vld [vmem:[%s3510 + $0xdc] sm:$0xf]
    %v3567 = vld [vmem:[%s3510 + $0xe0] sm:$0xf]
    %v3568 = vld [vmem:[%s3510 + $0xe4] sm:$0xf]
    %v3569 = vld [vmem:[%s3510 + $0xe8] sm:$0xf]
    %v3570 = vld [vmem:[%s3510 + $0xec] sm:$0xf]
    %v3571 = vld [vmem:[%s3510 + $0xf0] sm:$0xf]
    %v3572 = vld [vmem:[%s3510 + $0xf4] sm:$0xf]
    %v3573 = vld [vmem:[%s3510 + $0xf8] sm:$0xf]
    %v3574 = vld [vmem:[%s3510 + $0xfc] sm:$0xf]
    %s3575 = scalar_lea.vmem %s16, 2
    %v3576 = vld [vmem:[%s3575] sm:$0x1]
    %v3578 = vlaneseq
    %v3579 = vshrl.u32 %v3578, 7
    %v3580 = vsub.s32 0, %v3579
    %v3581 = vrot.slane %v3576, %v3580
    %v3647 = vunpack.c.l.b16 %v3511
    %v3648 = vunpack.c.l.b16 %v3512
    %v3649 = vunpack.c.l.b16 %v3513
    %v3650 = vunpack.c.l.b16 %v3514
    %v3651 = vunpack.c.l.b16 %v3515
    %v3652 = vunpack.c.l.b16 %v3516
    %v3653 = vunpack.c.l.b16 %v3517
    %v3654 = vunpack.c.l.b16 %v3518
    %v3655 = vunpack.c.l.b16 %v3519
    %v3656 = vunpack.c.l.b16 %v3520
    %v3657 = vunpack.c.l.b16 %v3521
    %v3658 = vunpack.c.l.b16 %v3522
    %v3659 = vunpack.c.l.b16 %v3523
    %v3660 = vunpack.c.l.b16 %v3524
    %v3661 = vunpack.c.l.b16 %v3525
    %v3662 = vunpack.c.l.b16 %v3526
    %v3663 = vunpack.c.l.b16 %v3527
    %v3664 = vunpack.c.l.b16 %v3528
    %v3665 = vunpack.c.l.b16 %v3529
    %v3666 = vunpack.c.l.b16 %v3530
    %v3667 = vunpack.c.l.b16 %v3531
    %v3668 = vunpack.c.l.b16 %v3532
    %v3669 = vunpack.c.l.b16 %v3533
    %v3670 = vunpack.c.l.b16 %v3534
    %v3671 = vunpack.c.l.b16 %v3535
    %v3672 = vunpack.c.l.b16 %v3536
    %v3673 = vunpack.c.l.b16 %v3537
    %v3674 = vunpack.c.l.b16 %v3538
    %v3675 = vunpack.c.l.b16 %v3539
    %v3676 = vunpack.c.l.b16 %v3540
    %v3677 = vunpack.c.l.b16 %v3541
    %v3678 = vunpack.c.l.b16 %v3542
    %v3679 = vunpack.c.l.b16 %v3543
    %v3680 = vunpack.c.l.b16 %v3544
    %v3681 = vunpack.c.l.b16 %v3545
    %v3682 = vunpack.c.l.b16 %v3546
    %v3683 = vunpack.c.l.b16 %v3547
    %v3684 = vunpack.c.l.b16 %v3548
    %v3685 = vunpack.c.l.b16 %v3549
    %v3686 = vunpack.c.l.b16 %v3550
    %v3687 = vunpack.c.l.b16 %v3551
    %v3688 = vunpack.c.l.b16 %v3552
    %v3689 = vunpack.c.l.b16 %v3553
    %v3690 = vunpack.c.l.b16 %v3554
    %v3691 = vunpack.c.l.b16 %v3555
    %v3692 = vunpack.c.l.b16 %v3556
    %v3693 = vunpack.c.l.b16 %v3557
    %v3694 = vunpack.c.l.b16 %v3558
    %v3695 = vunpack.c.l.b16 %v3559
    %v3696 = vunpack.c.l.b16 %v3560
    %v3697 = vunpack.c.l.b16 %v3561
    %v3698 = vunpack.c.l.b16 %v3562
    %v3699 = vunpack.c.l.b16 %v3563
    %v3700 = vunpack.c.l.b16 %v3564
    %v3701 = vunpack.c.l.b16 %v3565
    %v3702 = vunpack.c.l.b16 %v3566
    %v3703 = vunpack.c.l.b16 %v3567
    %v3704 = vunpack.c.l.b16 %v3568
    %v3705 = vunpack.c.l.b16 %v3569
    %v3706 = vunpack.c.l.b16 %v3570
    %v3707 = vunpack.c.l.b16 %v3571
    %v3708 = vunpack.c.l.b16 %v3572
    %v3709 = vunpack.c.l.b16 %v3573
    %v3710 = vunpack.c.l.b16 %v3574
    %v3711 = vpack.c.b16 %v3648, %v3647
    %v3712 = vpack.c.b16 %v3650, %v3649
    %v3713 = vpack.c.b16 %v3652, %v3651
    %v3714 = vpack.c.b16 %v3654, %v3653
    %v3715 = vpack.c.b16 %v3656, %v3655
    %v3716 = vpack.c.b16 %v3658, %v3657
    %v3717 = vpack.c.b16 %v3660, %v3659
    %v3718 = vpack.c.b16 %v3662, %v3661
    %v3719 = vpack.c.b16 %v3664, %v3663
    %v3720 = vpack.c.b16 %v3666, %v3665
    %v3721 = vpack.c.b16 %v3668, %v3667
    %v3722 = vpack.c.b16 %v3670, %v3669
    %v3723 = vpack.c.b16 %v3672, %v3671
    %v3724 = vpack.c.b16 %v3674, %v3673
    %v3725 = vpack.c.b16 %v3676, %v3675
    %v3726 = vpack.c.b16 %v3678, %v3677
    %v3727 = vpack.c.b16 %v3680, %v3679
    %v3728 = vpack.c.b16 %v3682, %v3681
    %v3729 = vpack.c.b16 %v3684, %v3683
    %v3730 = vpack.c.b16 %v3686, %v3685
    %v3731 = vpack.c.b16 %v3688, %v3687
    %v3732 = vpack.c.b16 %v3690, %v3689
    %v3733 = vpack.c.b16 %v3692, %v3691
    %v3734 = vpack.c.b16 %v3694, %v3693
    %v3735 = vpack.c.b16 %v3696, %v3695
    %v3736 = vpack.c.b16 %v3698, %v3697
    %v3737 = vpack.c.b16 %v3700, %v3699
    %v3738 = vpack.c.b16 %v3702, %v3701
    %v3739 = vpack.c.b16 %v3704, %v3703
    %v3740 = vpack.c.b16 %v3706, %v3705
    %v3741 = vpack.c.b16 %v3708, %v3707
    %v3742 = vpack.c.b16 %v3710, %v3709
    %3775 = vmatprep.subr.bf16.mxu0 0
    %3776 = vmatpush1.bf16.msra.mxu0 %v3711
    %3777 = vmatprep.subr.bf16.mxu0 0
    %3778 = vmatpush1.bf16.msra.mxu0 %v3712
    %3779 = vmatprep.subr.bf16.mxu0 0
    %3780 = vmatpush1.bf16.msra.mxu0 %v3713
    %3781 = vmatprep.subr.bf16.mxu0 0
    %3782 = vmatpush1.bf16.msra.mxu0 %v3714
    %3783 = vmatprep.subr.bf16.mxu0 0
    %3784 = vmatpush1.bf16.msra.mxu0 %v3715
    %3785 = vmatprep.subr.bf16.mxu0 0
    %3786 = vmatpush1.bf16.msra.mxu0 %v3716
    %3787 = vmatprep.subr.bf16.mxu0 0
    %3788 = vmatpush1.bf16.msra.mxu0 %v3717
    %3789 = vmatprep.subr.bf16.mxu0 0
    %3790 = vmatpush1.bf16.msra.mxu0 %v3718
    %3791 = vmatprep.subr.bf16.mxu0 0
    %3792 = vmatpush1.bf16.msra.mxu0 %v3719
    %3793 = vmatprep.subr.bf16.mxu0 0
    %3794 = vmatpush1.bf16.msra.mxu0 %v3720
    %3795 = vmatprep.subr.bf16.mxu0 0
    %3796 = vmatpush1.bf16.msra.mxu0 %v3721
    %3797 = vmatprep.subr.bf16.mxu0 0
    %3798 = vmatpush1.bf16.msra.mxu0 %v3722
    %3799 = vmatprep.subr.bf16.mxu0 0
    %3800 = vmatpush1.bf16.msra.mxu0 %v3723
    %3801 = vmatprep.subr.bf16.mxu0 0
    %3802 = vmatpush1.bf16.msra.mxu0 %v3724
    %3803 = vmatprep.subr.bf16.mxu0 0
    %3804 = vmatpush1.bf16.msra.mxu0 %v3725
    %3805 = vmatprep.subr.bf16.mxu0 0
    %3806 = vmatpush1.bf16.msra.mxu0 %v3726
    %3807 = vmatprep.mubr.bf16.mxu0 %v2819
    %3808 = vmatmul.mubr.bf16.gmra.mrb[0].mxu0 %v2818
    %v3809 = vpop.f32.mrb[0].mxu0
    %v3810 = vadd.f32 %v3581, %v3809
    %v3811 = vpop.f32.mrb[0].mxu0
    %v3812 = vpop.f32.mrb[0].mxu0
    %v3813 = vpop.f32.mrb[0].mxu0
    %3814 = vdwg.mxu0
    %3815 = vmatprep.subr.bf16.mxu0 0
    %3816 = vmatpush1.bf16.msra.mxu0 %v3727
    %3817 = vmatprep.subr.bf16.mxu0 0
    %3818 = vmatpush1.bf16.msra.mxu0 %v3728
    %3819 = vmatprep.subr.bf16.mxu0 0
    %3820 = vmatpush1.bf16.msra.mxu0 %v3729
    %3821 = vmatprep.subr.bf16.mxu0 0
    %3822 = vmatpush1.bf16.msra.mxu0 %v3730
    %3823 = vmatprep.subr.bf16.mxu0 0
    %3824 = vmatpush1.bf16.msra.mxu0 %v3731
    %3825 = vmatprep.subr.bf16.mxu0 0
    %3826 = vmatpush1.bf16.msra.mxu0 %v3732
    %3827 = vmatprep.subr.bf16.mxu0 0
    %3828 = vmatpush1.bf16.msra.mxu0 %v3733
    %3829 = vmatprep.subr.bf16.mxu0 0
    %3830 = vmatpush1.bf16.msra.mxu0 %v3734
    %3831 = vmatprep.subr.bf16.mxu0 0
    %3832 = vmatpush1.bf16.msra.mxu0 %v3735
    %3833 = vmatprep.subr.bf16.mxu0 0
    %3834 = vmatpush1.bf16.msra.mxu0 %v3736
    %3835 = vmatprep.subr.bf16.mxu0 0
    %3836 = vmatpush1.bf16.msra.mxu0 %v3737
    %3837 = vmatprep.subr.bf16.mxu0 0
    %3838 = vmatpush1.bf16.msra.mxu0 %v3738
    %3839 = vmatprep.subr.bf16.mxu0 0
    %3840 = vmatpush1.bf16.msra.mxu0 %v3739
    %3841 = vmatprep.subr.bf16.mxu0 0
    %3842 = vmatpush1.bf16.msra.mxu0 %v3740
    %3843 = vmatprep.subr.bf16.mxu0 0
    %3844 = vmatpush1.bf16.msra.mxu0 %v3741
    %3845 = vmatprep.subr.bf16.mxu0 0
    %3846 = vmatpush1.bf16.msra.mxu0 %v3742
    %3847 = vmatprep.mubr.bf16.mxu0 %v2821
    %3848 = vmatmul.mubr.bf16.gmra.mrb[0].mxu0 %v2820
    %v3849 = vpop.f32.mrb[0].mxu0
    %v3850 = vadd.f32 %v3810, %v3849
    %v3851 = vpop.f32.mrb[0].mxu0
    %v3852 = vpop.f32.mrb[0].mxu0
    %v3853 = vpop.f32.mrb[0].mxu0
    %3854 = vdwg.mxu0
    %s3855 = scalar_lea.vmem %s15, 768
    %v3856 = vld [vmem:[%s3855] sm:$0xf]
    %v3857 = vld [vmem:[%s3855 + $0x4] sm:$0xf]
    %v3858 = vld [vmem:[%s3855 + $0x8] sm:$0xf]
    %v3859 = vld [vmem:[%s3855 + $0xc] sm:$0xf]
    %v3860 = vld [vmem:[%s3855 + $0x10] sm:$0xf]
    %v3861 = vld [vmem:[%s3855 + $0x14] sm:$0xf]
    %v3862 = vld [vmem:[%s3855 + $0x18] sm:$0xf]
    %v3863 = vld [vmem:[%s3855 + $0x1c] sm:$0xf]
    %v3864 = vld [vmem:[%s3855 + $0x20] sm:$0xf]
    %v3865 = vld [vmem:[%s3855 + $0x24] sm:$0xf]
    %v3866 = vld [vmem:[%s3855 + $0x28] sm:$0xf]
    %v3867 = vld [vmem:[%s3855 + $0x2c] sm:$0xf]
    %v3868 = vld [vmem:[%s3855 + $0x30] sm:$0xf]
    %v3869 = vld [vmem:[%s3855 + $0x34] sm:$0xf]
    %v3870 = vld [vmem:[%s3855 + $0x38] sm:$0xf]
    %v3871 = vld [vmem:[%s3855 + $0x3c] sm:$0xf]
    %v3872 = vld [vmem:[%s3855 + $0x40] sm:$0xf]
    %v3873 = vld [vmem:[%s3855 + $0x44] sm:$0xf]
    %v3874 = vld [vmem:[%s3855 + $0x48] sm:$0xf]
    %v3875 = vld [vmem:[%s3855 + $0x4c] sm:$0xf]
    %v3876 = vld [vmem:[%s3855 + $0x50] sm:$0xf]
    %v3877 = vld [vmem:[%s3855 + $0x54] sm:$0xf]
    %v3878 = vld [vmem:[%s3855 + $0x58] sm:$0xf]
    %v3879 = vld [vmem:[%s3855 + $0x5c] sm:$0xf]
    %v3880 = vld [vmem:[%s3855 + $0x60] sm:$0xf]
    %v3881 = vld [vmem:[%s3855 + $0x64] sm:$0xf]
    %v3882 = vld [vmem:[%s3855 + $0x68] sm:$0xf]
    %v3883 = vld [vmem:[%s3855 + $0x6c] sm:$0xf]
    %v3884 = vld [vmem:[%s3855 + $0x70] sm:$0xf]
    %v3885 = vld [vmem:[%s3855 + $0x74] sm:$0xf]
    %v3886 = vld [vmem:[%s3855 + $0x78] sm:$0xf]
    %v3887 = vld [vmem:[%s3855 + $0x7c] sm:$0xf]
    %v3888 = vld [vmem:[%s3855 + $0x80] sm:$0xf]
    %v3889 = vld [vmem:[%s3855 + $0x84] sm:$0xf]
    %v3890 = vld [vmem:[%s3855 + $0x88] sm:$0xf]
    %v3891 = vld [vmem:[%s3855 + $0x8c] sm:$0xf]
    %v3892 = vld [vmem:[%s3855 + $0x90] sm:$0xf]
    %v3893 = vld [vmem:[%s3855 + $0x94] sm:$0xf]
    %v3894 = vld [vmem:[%s3855 + $0x98] sm:$0xf]
    %v3895 = vld [vmem:[%s3855 + $0x9c] sm:$0xf]
    %v3896 = vld [vmem:[%s3855 + $0xa0] sm:$0xf]
    %v3897 = vld [vmem:[%s3855 + $0xa4] sm:$0xf]
    %v3898 = vld [vmem:[%s3855 + $0xa8] sm:$0xf]
    %v3899 = vld [vmem:[%s3855 + $0xac] sm:$0xf]
    %v3900 = vld [vmem:[%s3855 + $0xb0] sm:$0xf]
    %v3901 = vld [vmem:[%s3855 + $0xb4] sm:$0xf]
    %v3902 = vld [vmem:[%s3855 + $0xb8] sm:$0xf]
    %v3903 = vld [vmem:[%s3855 + $0xbc] sm:$0xf]
    %v3904 = vld [vmem:[%s3855 + $0xc0] sm:$0xf]
    %v3905 = vld [vmem:[%s3855 + $0xc4] sm:$0xf]
    %v3906 = vld [vmem:[%s3855 + $0xc8] sm:$0xf]
    %v3907 = vld [vmem:[%s3855 + $0xcc] sm:$0xf]
    %v3908 = vld [vmem:[%s3855 + $0xd0] sm:$0xf]
    %v3909 = vld [vmem:[%s3855 + $0xd4] sm:$0xf]
    %v3910 = vld [vmem:[%s3855 + $0xd8] sm:$0xf]
    %v3911 = vld [vmem:[%s3855 + $0xdc] sm:$0xf]
    %v3912 = vld [vmem:[%s3855 + $0xe0] sm:$0xf]
    %v3913 = vld [vmem:[%s3855 + $0xe4] sm:$0xf]
    %v3914 = vld [vmem:[%s3855 + $0xe8] sm:$0xf]
    %v3915 = vld [vmem:[%s3855 + $0xec] sm:$0xf]
    %v3916 = vld [vmem:[%s3855 + $0xf0] sm:$0xf]
    %v3917 = vld [vmem:[%s3855 + $0xf4] sm:$0xf]
    %v3918 = vld [vmem:[%s3855 + $0xf8] sm:$0xf]
    %v3919 = vld [vmem:[%s3855 + $0xfc] sm:$0xf]
    %s3920 = scalar_lea.vmem %s16, 3
    %v3921 = vld [vmem:[%s3920] sm:$0x1]
    %v3923 = vlaneseq
    %v3924 = vshrl.u32 %v3923, 7
    %v3925 = vsub.s32 0, %v3924
    %v3926 = vrot.slane %v3921, %v3925
    %v3992 = vunpack.c.l.b16 %v3856
    %v3993 = vunpack.c.l.b16 %v3857
    %v3994 = vunpack.c.l.b16 %v3858
    %v3995 = vunpack.c.l.b16 %v3859
    %v3996 = vunpack.c.l.b16 %v3860
    %v3997 = vunpack.c.l.b16 %v3861
    %v3998 = vunpack.c.l.b16 %v3862
    %v3999 = vunpack.c.l.b16 %v3863
    %v4000 = vunpack.c.l.b16 %v3864
    %v4001 = vunpack.c.l.b16 %v3865
    %v4002 = vunpack.c.l.b16 %v3866
    %v4003 = vunpack.c.l.b16 %v3867
    %v4004 = vunpack.c.l.b16 %v3868
    %v4005 = vunpack.c.l.b16 %v3869
    %v4006 = vunpack.c.l.b16 %v3870
    %v4007 = vunpack.c.l.b16 %v3871
    %v4008 = vunpack.c.l.b16 %v3872
    %v4009 = vunpack.c.l.b16 %v3873
    %v4010 = vunpack.c.l.b16 %v3874
    %v4011 = vunpack.c.l.b16 %v3875
    %v4012 = vunpack.c.l.b16 %v3876
    %v4013 = vunpack.c.l.b16 %v3877
    %v4014 = vunpack.c.l.b16 %v3878
    %v4015 = vunpack.c.l.b16 %v3879
    %v4016 = vunpack.c.l.b16 %v3880
    %v4017 = vunpack.c.l.b16 %v3881
    %v4018 = vunpack.c.l.b16 %v3882
    %v4019 = vunpack.c.l.b16 %v3883
    %v4020 = vunpack.c.l.b16 %v3884
    %v4021 = vunpack.c.l.b16 %v3885
    %v4022 = vunpack.c.l.b16 %v3886
    %v4023 = vunpack.c.l.b16 %v3887
    %v4024 = vunpack.c.l.b16 %v3888
    %v4025 = vunpack.c.l.b16 %v3889
    %v4026 = vunpack.c.l.b16 %v3890
    %v4027 = vunpack.c.l.b16 %v3891
    %v4028 = vunpack.c.l.b16 %v3892
    %v4029 = vunpack.c.l.b16 %v3893
    %v4030 = vunpack.c.l.b16 %v3894
    %v4031 = vunpack.c.l.b16 %v3895
    %v4032 = vunpack.c.l.b16 %v3896
    %v4033 = vunpack.c.l.b16 %v3897
    %v4034 = vunpack.c.l.b16 %v3898
    %v4035 = vunpack.c.l.b16 %v3899
    %v4036 = vunpack.c.l.b16 %v3900
    %v4037 = vunpack.c.l.b16 %v3901
    %v4038 = vunpack.c.l.b16 %v3902
    %v4039 = vunpack.c.l.b16 %v3903
    %v4040 = vunpack.c.l.b16 %v3904
    %v4041 = vunpack.c.l.b16 %v3905
    %v4042 = vunpack.c.l.b16 %v3906
    %v4043 = vunpack.c.l.b16 %v3907
    %v4044 = vunpack.c.l.b16 %v3908
    %v4045 = vunpack.c.l.b16 %v3909
    %v4046 = vunpack.c.l.b16 %v3910
    %v4047 = vunpack.c.l.b16 %v3911
    %v4048 = vunpack.c.l.b16 %v3912
    %v4049 = vunpack.c.l.b16 %v3913
    %v4050 = vunpack.c.l.b16 %v3914
    %v4051 = vunpack.c.l.b16 %v3915
    %v4052 = vunpack.c.l.b16 %v3916
    %v4053 = vunpack.c.l.b16 %v3917
    %v4054 = vunpack.c.l.b16 %v3918
    %v4055 = vunpack.c.l.b16 %v3919
    %v4056 = vpack.c.b16 %v3993, %v3992
    %v4057 = vpack.c.b16 %v3995, %v3994
    %v4058 = vpack.c.b16 %v3997, %v3996
    %v4059 = vpack.c.b16 %v3999, %v3998
    %v4060 = vpack.c.b16 %v4001, %v4000
    %v4061 = vpack.c.b16 %v4003, %v4002
    %v4062 = vpack.c.b16 %v4005, %v4004
    %v4063 = vpack.c.b16 %v4007, %v4006
    %v4064 = vpack.c.b16 %v4009, %v4008
    %v4065 = vpack.c.b16 %v4011, %v4010
    %v4066 = vpack.c.b16 %v4013, %v4012
    %v4067 = vpack.c.b16 %v4015, %v4014
    %v4068 = vpack.c.b16 %v4017, %v4016
    %v4069 = vpack.c.b16 %v4019, %v4018
    %v4070 = vpack.c.b16 %v4021, %v4020
    %v4071 = vpack.c.b16 %v4023, %v4022
    %v4072 = vpack.c.b16 %v4025, %v4024
    %v4073 = vpack.c.b16 %v4027, %v4026
    %v4074 = vpack.c.b16 %v4029, %v4028
    %v4075 = vpack.c.b16 %v4031, %v4030
    %v4076 = vpack.c.b16 %v4033, %v4032
    %v4077 = vpack.c.b16 %v4035, %v4034
    %v4078 = vpack.c.b16 %v4037, %v4036
    %v4079 = vpack.c.b16 %v4039, %v4038
    %v4080 = vpack.c.b16 %v4041, %v4040
    %v4081 = vpack.c.b16 %v4043, %v4042
    %v4082 = vpack.c.b16 %v4045, %v4044
    %v4083 = vpack.c.b16 %v4047, %v4046
    %v4084 = vpack.c.b16 %v4049, %v4048
    %v4085 = vpack.c.b16 %v4051, %v4050
    %v4086 = vpack.c.b16 %v4053, %v4052
    %v4087 = vpack.c.b16 %v4055, %v4054
    %4120 = vmatprep.subr.bf16.mxu0 0
    %4121 = vmatpush1.bf16.msra.mxu0 %v4056
    %4122 = vmatprep.subr.bf16.mxu0 0
    %4123 = vmatpush1.bf16.msra.mxu0 %v4057
    %4124 = vmatprep.subr.bf16.mxu0 0
    %4125 = vmatpush1.bf16.msra.mxu0 %v4058
    %4126 = vmatprep.subr.bf16.mxu0 0
    %4127 = vmatpush1.bf16.msra.mxu0 %v4059
    %4128 = vmatprep.subr.bf16.mxu0 0
    %4129 = vmatpush1.bf16.msra.mxu0 %v4060
    %4130 = vmatprep.subr.bf16.mxu0 0
    %4131 = vmatpush1.bf16.msra.mxu0 %v4061
    %4132 = vmatprep.subr.bf16.mxu0 0
    %4133 = vmatpush1.bf16.msra.mxu0 %v4062
    %4134 = vmatprep.subr.bf16.mxu0 0
    %4135 = vmatpush1.bf16.msra.mxu0 %v4063
    %4136 = vmatprep.subr.bf16.mxu0 0
    %4137 = vmatpush1.bf16.msra.mxu0 %v4064
    %4138 = vmatprep.subr.bf16.mxu0 0
    %4139 = vmatpush1.bf16.msra.mxu0 %v4065
    %4140 = vmatprep.subr.bf16.mxu0 0
    %4141 = vmatpush1.bf16.msra.mxu0 %v4066
    %4142 = vmatprep.subr.bf16.mxu0 0
    %4143 = vmatpush1.bf16.msra.mxu0 %v4067
    %4144 = vmatprep.subr.bf16.mxu0 0
    %4145 = vmatpush1.bf16.msra.mxu0 %v4068
    %4146 = vmatprep.subr.bf16.mxu0 0
    %4147 = vmatpush1.bf16.msra.mxu0 %v4069
    %4148 = vmatprep.subr.bf16.mxu0 0
    %4149 = vmatpush1.bf16.msra.mxu0 %v4070
    %4150 = vmatprep.subr.bf16.mxu0 0
    %4151 = vmatpush1.bf16.msra.mxu0 %v4071
    %4152 = vmatprep.mubr.bf16.mxu0 %v2819
    %4153 = vmatmul.mubr.bf16.gmra.mrb[0].mxu0 %v2818
    %v4154 = vpop.f32.mrb[0].mxu0
    %v4155 = vadd.f32 %v3926, %v4154
    %v4156 = vpop.f32.mrb[0].mxu0
    %v4157 = vpop.f32.mrb[0].mxu0
    %v4158 = vpop.f32.mrb[0].mxu0
    %4159 = vdwg.mxu0
    %4160 = vmatprep.subr.bf16.mxu0 0
    %4161 = vmatpush1.bf16.msra.mxu0 %v4072
    %4162 = vmatprep.subr.bf16.mxu0 0
    %4163 = vmatpush1.bf16.msra.mxu0 %v4073
    %4164 = vmatprep.subr.bf16.mxu0 0
    %4165 = vmatpush1.bf16.msra.mxu0 %v4074
    %4166 = vmatprep.subr.bf16.mxu0 0
    %4167 = vmatpush1.bf16.msra.mxu0 %v4075
    %4168 = vmatprep.subr.bf16.mxu0 0
    %4169 = vmatpush1.bf16.msra.mxu0 %v4076
    %4170 = vmatprep.subr.bf16.mxu0 0
    %4171 = vmatpush1.bf16.msra.mxu0 %v4077
    %4172 = vmatprep.subr.bf16.mxu0 0
    %4173 = vmatpush1.bf16.msra.mxu0 %v4078
    %4174 = vmatprep.subr.bf16.mxu0 0
    %4175 = vmatpush1.bf16.msra.mxu0 %v4079
    %4176 = vmatprep.subr.bf16.mxu0 0
    %4177 = vmatpush1.bf16.msra.mxu0 %v4080
    %4178 = vmatprep.subr.bf16.mxu0 0
    %4179 = vmatpush1.bf16.msra.mxu0 %v4081
    %4180 = vmatprep.subr.bf16.mxu0 0
    %4181 = vmatpush1.bf16.msra.mxu0 %v4082
    %4182 = vmatprep.subr.bf16.mxu0 0
    %4183 = vmatpush1.bf16.msra.mxu0 %v4083
    %4184 = vmatprep.subr.bf16.mxu0 0
    %4185 = vmatpush1.bf16.msra.mxu0 %v4084
    %4186 = vmatprep.subr.bf16.mxu0 0
    %4187 = vmatpush1.bf16.msra.mxu0 %v4085
    %4188 = vmatprep.subr.bf16.mxu0 0
    %4189 = vmatpush1.bf16.msra.mxu0 %v4086
    %4190 = vmatprep.subr.bf16.mxu0 0
    %4191 = vmatpush1.bf16.msra.mxu0 %v4087
    %4192 = vmatprep.mubr.bf16.mxu0 %v2821
    %4193 = vmatmul.mubr.bf16.gmra.mrb[0].mxu0 %v2820
    %v4194 = vpop.f32.mrb[0].mxu0
    %v4195 = vadd.f32 %v4155, %v4194
    %v4196 = vpop.f32.mrb[0].mxu0
    %v4197 = vpop.f32.mrb[0].mxu0
    %v4198 = vpop.f32.mrb[0].mxu0
    %4199 = vdwg.mxu0
    %s4200 = scalar_lea.vmem %s15, 1024
    %v4201 = vld [vmem:[%s4200] sm:$0xf]
    %v4202 = vld [vmem:[%s4200 + $0x4] sm:$0xf]
    %v4203 = vld [vmem:[%s4200 + $0x8] sm:$0xf]
    %v4204 = vld [vmem:[%s4200 + $0xc] sm:$0xf]
    %v4205 = vld [vmem:[%s4200 + $0x10] sm:$0xf]
    %v4206 = vld [vmem:[%s4200 + $0x14] sm:$0xf]
    %v4207 = vld [vmem:[%s4200 + $0x18] sm:$0xf]
    %v4208 = vld [vmem:[%s4200 + $0x1c] sm:$0xf]
    %v4209 = vld [vmem:[%s4200 + $0x20] sm:$0xf]
    %v4210 = vld [vmem:[%s4200 + $0x24] sm:$0xf]
    %v4211 = vld [vmem:[%s4200 + $0x28] sm:$0xf]
    %v4212 = vld [vmem:[%s4200 + $0x2c] sm:$0xf]
    %v4213 = vld [vmem:[%s4200 + $0x30] sm:$0xf]
    %v4214 = vld [vmem:[%s4200 + $0x34] sm:$0xf]
    %v4215 = vld [vmem:[%s4200 + $0x38] sm:$0xf]
    %v4216 = vld [vmem:[%s4200 + $0x3c] sm:$0xf]
    %v4217 = vld [vmem:[%s4200 + $0x40] sm:$0xf]
    %v4218 = vld [vmem:[%s4200 + $0x44] sm:$0xf]
    %v4219 = vld [vmem:[%s4200 + $0x48] sm:$0xf]
    %v4220 = vld [vmem:[%s4200 + $0x4c] sm:$0xf]
    %v4221 = vld [vmem:[%s4200 + $0x50] sm:$0xf]
    %v4222 = vld [vmem:[%s4200 + $0x54] sm:$0xf]
    %v4223 = vld [vmem:[%s4200 + $0x58] sm:$0xf]
    %v4224 = vld [vmem:[%s4200 + $0x5c] sm:$0xf]
    %v4225 = vld [vmem:[%s4200 + $0x60] sm:$0xf]
    %v4226 = vld [vmem:[%s4200 + $0x64] sm:$0xf]
    %v4227 = vld [vmem:[%s4200 + $0x68] sm:$0xf]
    %v4228 = vld [vmem:[%s4200 + $0x6c] sm:$0xf]
    %v4229 = vld [vmem:[%s4200 + $0x70] sm:$0xf]
    %v4230 = vld [vmem:[%s4200 + $0x74] sm:$0xf]
    %v4231 = vld [vmem:[%s4200 + $0x78] sm:$0xf]
    %v4232 = vld [vmem:[%s4200 + $0x7c] sm:$0xf]
    %v4233 = vld [vmem:[%s4200 + $0x80] sm:$0xf]
    %v4234 = vld [vmem:[%s4200 + $0x84] sm:$0xf]
    %v4235 = vld [vmem:[%s4200 + $0x88] sm:$0xf]
    %v4236 = vld [vmem:[%s4200 + $0x8c] sm:$0xf]
    %v4237 = vld [vmem:[%s4200 + $0x90] sm:$0xf]
    %v4238 = vld [vmem:[%s4200 + $0x94] sm:$0xf]
    %v4239 = vld [vmem:[%s4200 + $0x98] sm:$0xf]
    %v4240 = vld [vmem:[%s4200 + $0x9c] sm:$0xf]
    %v4241 = vld [vmem:[%s4200 + $0xa0] sm:$0xf]
    %v4242 = vld [vmem:[%s4200 + $0xa4] sm:$0xf]
    %v4243 = vld [vmem:[%s4200 + $0xa8] sm:$0xf]
    %v4244 = vld [vmem:[%s4200 + $0xac] sm:$0xf]
    %v4245 = vld [vmem:[%s4200 + $0xb0] sm:$0xf]
    %v4246 = vld [vmem:[%s4200 + $0xb4] sm:$0xf]
    %v4247 = vld [vmem:[%s4200 + $0xb8] sm:$0xf]
    %v4248 = vld [vmem:[%s4200 + $0xbc] sm:$0xf]
    %v4249 = vld [vmem:[%s4200 + $0xc0] sm:$0xf]
    %v4250 = vld [vmem:[%s4200 + $0xc4] sm:$0xf]
    %v4251 = vld [vmem:[%s4200 + $0xc8] sm:$0xf]
    %v4252 = vld [vmem:[%s4200 + $0xcc] sm:$0xf]
    %v4253 = vld [vmem:[%s4200 + $0xd0] sm:$0xf]
    %v4254 = vld [vmem:[%s4200 + $0xd4] sm:$0xf]
    %v4255 = vld [vmem:[%s4200 + $0xd8] sm:$0xf]
    %v4256 = vld [vmem:[%s4200 + $0xdc] sm:$0xf]
    %v4257 = vld [vmem:[%s4200 + $0xe0] sm:$0xf]
    %v4258 = vld [vmem:[%s4200 + $0xe4] sm:$0xf]
    %v4259 = vld [vmem:[%s4200 + $0xe8] sm:$0xf]
    %v4260 = vld [vmem:[%s4200 + $0xec] sm:$0xf]
    %v4261 = vld [vmem:[%s4200 + $0xf0] sm:$0xf]
    %v4262 = vld [vmem:[%s4200 + $0xf4] sm:$0xf]
    %v4263 = vld [vmem:[%s4200 + $0xf8] sm:$0xf]
    %v4264 = vld [vmem:[%s4200 + $0xfc] sm:$0xf]
    %s4265 = scalar_lea.vmem %s16, 4
    %v4266 = vld [vmem:[%s4265] sm:$0x1]
    %v4268 = vlaneseq
    %v4269 = vshrl.u32 %v4268, 7
    %v4270 = vsub.s32 0, %v4269
    %v4271 = vrot.slane %v4266, %v4270
    %v4337 = vunpack.c.l.b16 %v4201
    %v4338 = vunpack.c.l.b16 %v4202
    %v4339 = vunpack.c.l.b16 %v4203
    %v4340 = vunpack.c.l.b16 %v4204
    %v4341 = vunpack.c.l.b16 %v4205
    %v4342 = vunpack.c.l.b16 %v4206
    %v4343 = vunpack.c.l.b16 %v4207
    %v4344 = vunpack.c.l.b16 %v4208
    %v4345 = vunpack.c.l.b16 %v4209
    %v4346 = vunpack.c.l.b16 %v4210
    %v4347 = vunpack.c.l.b16 %v4211
    %v4348 = vunpack.c.l.b16 %v4212
    %v4349 = vunpack.c.l.b16 %v4213
    %v4350 = vunpack.c.l.b16 %v4214
    %v4351 = vunpack.c.l.b16 %v4215
    %v4352 = vunpack.c.l.b16 %v4216
    %v4353 = vunpack.c.l.b16 %v4217
    %v4354 = vunpack.c.l.b16 %v4218
    %v4355 = vunpack.c.l.b16 %v4219
    %v4356 = vunpack.c.l.b16 %v4220
    %v4357 = vunpack.c.l.b16 %v4221
    %v4358 = vunpack.c.l.b16 %v4222
    %v4359 = vunpack.c.l.b16 %v4223
    %v4360 = vunpack.c.l.b16 %v4224
    %v4361 = vunpack.c.l.b16 %v4225
    %v4362 = vunpack.c.l.b16 %v4226
    %v4363 = vunpack.c.l.b16 %v4227
    %v4364 = vunpack.c.l.b16 %v4228
    %v4365 = vunpack.c.l.b16 %v4229
    %v4366 = vunpack.c.l.b16 %v4230
    %v4367 = vunpack.c.l.b16 %v4231
    %v4368 = vunpack.c.l.b16 %v4232
    %v4369 = vunpack.c.l.b16 %v4233
    %v4370 = vunpack.c.l.b16 %v4234
    %v4371 = vunpack.c.l.b16 %v4235
    %v4372 = vunpack.c.l.b16 %v4236
    %v4373 = vunpack.c.l.b16 %v4237
    %v4374 = vunpack.c.l.b16 %v4238
    %v4375 = vunpack.c.l.b16 %v4239
    %v4376 = vunpack.c.l.b16 %v4240
    %v4377 = vunpack.c.l.b16 %v4241
    %v4378 = vunpack.c.l.b16 %v4242
    %v4379 = vunpack.c.l.b16 %v4243
    %v4380 = vunpack.c.l.b16 %v4244
    %v4381 = vunpack.c.l.b16 %v4245
    %v4382 = vunpack.c.l.b16 %v4246
    %v4383 = vunpack.c.l.b16 %v4247
    %v4384 = vunpack.c.l.b16 %v4248
    %v4385 = vunpack.c.l.b16 %v4249
    %v4386 = vunpack.c.l.b16 %v4250
    %v4387 = vunpack.c.l.b16 %v4251
    %v4388 = vunpack.c.l.b16 %v4252
    %v4389 = vunpack.c.l.b16 %v4253
    %v4390 = vunpack.c.l.b16 %v4254
    %v4391 = vunpack.c.l.b16 %v4255
    %v4392 = vunpack.c.l.b16 %v4256
    %v4393 = vunpack.c.l.b16 %v4257
    %v4394 = vunpack.c.l.b16 %v4258
    %v4395 = vunpack.c.l.b16 %v4259
    %v4396 = vunpack.c.l.b16 %v4260
    %v4397 = vunpack.c.l.b16 %v4261
    %v4398 = vunpack.c.l.b16 %v4262
    %v4399 = vunpack.c.l.b16 %v4263
    %v4400 = vunpack.c.l.b16 %v4264
    %v4401 = vpack.c.b16 %v4338, %v4337
    %v4402 = vpack.c.b16 %v4340, %v4339
    %v4403 = vpack.c.b16 %v4342, %v4341
    %v4404 = vpack.c.b16 %v4344, %v4343
    %v4405 = vpack.c.b16 %v4346, %v4345
    %v4406 = vpack.c.b16 %v4348, %v4347
    %v4407 = vpack.c.b16 %v4350, %v4349
    %v4408 = vpack.c.b16 %v4352, %v4351
    %v4409 = vpack.c.b16 %v4354, %v4353
    %v4410 = vpack.c.b16 %v4356, %v4355
    %v4411 = vpack.c.b16 %v4358, %v4357
    %v4412 = vpack.c.b16 %v4360, %v4359
    %v4413 = vpack.c.b16 %v4362, %v4361
    %v4414 = vpack.c.b16 %v4364, %v4363
    %v4415 = vpack.c.b16 %v4366, %v4365
    %v4416 = vpack.c.b16 %v4368, %v4367
    %v4417 = vpack.c.b16 %v4370, %v4369
    %v4418 = vpack.c.b16 %v4372, %v4371
    %v4419 = vpack.c.b16 %v4374, %v4373
    %v4420 = vpack.c.b16 %v4376, %v4375
    %v4421 = vpack.c.b16 %v4378, %v4377
    %v4422 = vpack.c.b16 %v4380, %v4379
    %v4423 = vpack.c.b16 %v4382, %v4381
    %v4424 = vpack.c.b16 %v4384, %v4383
    %v4425 = vpack.c.b16 %v4386, %v4385
    %v4426 = vpack.c.b16 %v4388, %v4387
    %v4427 = vpack.c.b16 %v4390, %v4389
    %v4428 = vpack.c.b16 %v4392, %v4391
    %v4429 = vpack.c.b16 %v4394, %v4393
    %v4430 = vpack.c.b16 %v4396, %v4395
    %v4431 = vpack.c.b16 %v4398, %v4397
    %v4432 = vpack.c.b16 %v4400, %v4399
    %4465 = vmatprep.subr.bf16.mxu0 0
    %4466 = vmatpush1.bf16.msra.mxu0 %v4401
    %4467 = vmatprep.subr.bf16.mxu0 0
    %4468 = vmatpush1.bf16.msra.mxu0 %v4402
    %4469 = vmatprep.subr.bf16.mxu0 0
    %4470 = vmatpush1.bf16.msra.mxu0 %v4403
    %4471 = vmatprep.subr.bf16.mxu0 0
    %4472 = vmatpush1.bf16.msra.mxu0 %v4404
    %4473 = vmatprep.subr.bf16.mxu0 0
    %4474 = vmatpush1.bf16.msra.mxu0 %v4405
    %4475 = vmatprep.subr.bf16.mxu0 0
    %4476 = vmatpush1.bf16.msra.mxu0 %v4406
    %4477 = vmatprep.subr.bf16.mxu0 0
    %4478 = vmatpush1.bf16.msra.mxu0 %v4407
    %4479 = vmatprep.subr.bf16.mxu0 0
    %4480 = vmatpush1.bf16.msra.mxu0 %v4408
    %4481 = vmatprep.subr.bf16.mxu0 0
    %4482 = vmatpush1.bf16.msra.mxu0 %v4409
    %4483 = vmatprep.subr.bf16.mxu0 0
    %4484 = vmatpush1.bf16.msra.mxu0 %v4410
    %4485 = vmatprep.subr.bf16.mxu0 0
    %4486 = vmatpush1.bf16.msra.mxu0 %v4411
    %4487 = vmatprep.subr.bf16.mxu0 0
    %4488 = vmatpush1.bf16.msra.mxu0 %v4412
    %4489 = vmatprep.subr.bf16.mxu0 0
    %4490 = vmatpush1.bf16.msra.mxu0 %v4413
    %4491 = vmatprep.subr.bf16.mxu0 0
    %4492 = vmatpush1.bf16.msra.mxu0 %v4414
    %4493 = vmatprep.subr.bf16.mxu0 0
    %4494 = vmatpush1.bf16.msra.mxu0 %v4415
    %4495 = vmatprep.subr.bf16.mxu0 0
    %4496 = vmatpush1.bf16.msra.mxu0 %v4416
    %4497 = vmatprep.mubr.bf16.mxu0 %v2819
    %4498 = vmatmul.mubr.bf16.gmra.mrb[0].mxu0 %v2818
    %v4499 = vpop.f32.mrb[0].mxu0
    %v4500 = vadd.f32 %v4271, %v4499
    %v4501 = vpop.f32.mrb[0].mxu0
    %v4502 = vpop.f32.mrb[0].mxu0
    %v4503 = vpop.f32.mrb[0].mxu0
    %4504 = vdwg.mxu0
    %4505 = vmatprep.subr.bf16.mxu0 0
    %4506 = vmatpush1.bf16.msra.mxu0 %v4417
    %4507 = vmatprep.subr.bf16.mxu0 0
    %4508 = vmatpush1.bf16.msra.mxu0 %v4418
    %4509 = vmatprep.subr.bf16.mxu0 0
    %4510 = vmatpush1.bf16.msra.mxu0 %v4419
    %4511 = vmatprep.subr.bf16.mxu0 0
    %4512 = vmatpush1.bf16.msra.mxu0 %v4420
    %4513 = vmatprep.subr.bf16.mxu0 0
    %4514 = vmatpush1.bf16.msra.mxu0 %v4421
    %4515 = vmatprep.subr.bf16.mxu0 0
    %4516 = vmatpush1.bf16.msra.mxu0 %v4422
    %4517 = vmatprep.subr.bf16.mxu0 0
    %4518 = vmatpush1.bf16.msra.mxu0 %v4423
    %4519 = vmatprep.subr.bf16.mxu0 0
    %4520 = vmatpush1.bf16.msra.mxu0 %v4424
    %4521 = vmatprep.subr.bf16.mxu0 0
    %4522 = vmatpush1.bf16.msra.mxu0 %v4425
    %4523 = vmatprep.subr.bf16.mxu0 0
    %4524 = vmatpush1.bf16.msra.mxu0 %v4426
    %4525 = vmatprep.subr.bf16.mxu0 0
    %4526 = vmatpush1.bf16.msra.mxu0 %v4427
    %4527 = vmatprep.subr.bf16.mxu0 0
    %4528 = vmatpush1.bf16.msra.mxu0 %v4428
    %4529 = vmatprep.subr.bf16.mxu0 0
    %4530 = vmatpush1.bf16.msra.mxu0 %v4429
    %4531 = vmatprep.subr.bf16.mxu0 0
    %4532 = vmatpush1.bf16.msra.mxu0 %v4430
    %4533 = vmatprep.subr.bf16.mxu0 0
    %4534 = vmatpush1.bf16.msra.mxu0 %v4431
    %4535 = vmatprep.subr.bf16.mxu0 0
    %4536 = vmatpush1.bf16.msra.mxu0 %v4432
    %4537 = vmatprep.mubr.bf16.mxu0 %v2821
    %4538 = vmatmul.mubr.bf16.gmra.mrb[0].mxu0 %v2820
    %v4539 = vpop.f32.mrb[0].mxu0
    %v4540 = vadd.f32 %v4500, %v4539
    %v4541 = vpop.f32.mrb[0].mxu0
    %v4542 = vpop.f32.mrb[0].mxu0
    %v4543 = vpop.f32.mrb[0].mxu0
    %4544 = vdwg.mxu0
    %s4545 = scalar_lea.vmem %s15, 1280
    %v4546 = vld [vmem:[%s4545] sm:$0xf]
    %v4547 = vld [vmem:[%s4545 + $0x4] sm:$0xf]
    %v4548 = vld [vmem:[%s4545 + $0x8] sm:$0xf]
    %v4549 = vld [vmem:[%s4545 + $0xc] sm:$0xf]
    %v4550 = vld [vmem:[%s4545 + $0x10] sm:$0xf]
    %v4551 = vld [vmem:[%s4545 + $0x14] sm:$0xf]
    %v4552 = vld [vmem:[%s4545 + $0x18] sm:$0xf]
    %v4553 = vld [vmem:[%s4545 + $0x1c] sm:$0xf]
    %v4554 = vld [vmem:[%s4545 + $0x20] sm:$0xf]
    %v4555 = vld [vmem:[%s4545 + $0x24] sm:$0xf]
    %v4556 = vld [vmem:[%s4545 + $0x28] sm:$0xf]
    %v4557 = vld [vmem:[%s4545 + $0x2c] sm:$0xf]
    %v4558 = vld [vmem:[%s4545 + $0x30] sm:$0xf]
    %v4559 = vld [vmem:[%s4545 + $0x34] sm:$0xf]
    %v4560 = vld [vmem:[%s4545 + $0x38] sm:$0xf]
    %v4561 = vld [vmem:[%s4545 + $0x3c] sm:$0xf]
    %v4562 = vld [vmem:[%s4545 + $0x40] sm:$0xf]
    %v4563 = vld [vmem:[%s4545 + $0x44] sm:$0xf]
    %v4564 = vld [vmem:[%s4545 + $0x48] sm:$0xf]
    %v4565 = vld [vmem:[%s4545 + $0x4c] sm:$0xf]
    %v4566 = vld [vmem:[%s4545 + $0x50] sm:$0xf]
    %v4567 = vld [vmem:[%s4545 + $0x54] sm:$0xf]
    %v4568 = vld [vmem:[%s4545 + $0x58] sm:$0xf]
    %v4569 = vld [vmem:[%s4545 + $0x5c] sm:$0xf]
    %v4570 = vld [vmem:[%s4545 + $0x60] sm:$0xf]
    %v4571 = vld [vmem:[%s4545 + $0x64] sm:$0xf]
    %v4572 = vld [vmem:[%s4545 + $0x68] sm:$0xf]
    %v4573 = vld [vmem:[%s4545 + $0x6c] sm:$0xf]
    %v4574 = vld [vmem:[%s4545 + $0x70] sm:$0xf]
    %v4575 = vld [vmem:[%s4545 + $0x74] sm:$0xf]
    %v4576 = vld [vmem:[%s4545 + $0x78] sm:$0xf]
    %v4577 = vld [vmem:[%s4545 + $0x7c] sm:$0xf]
    %v4578 = vld [vmem:[%s4545 + $0x80] sm:$0xf]
    %v4579 = vld [vmem:[%s4545 + $0x84] sm:$0xf]
    %v4580 = vld [vmem:[%s4545 + $0x88] sm:$0xf]
    %v4581 = vld [vmem:[%s4545 + $0x8c] sm:$0xf]
    %v4582 = vld [vmem:[%s4545 + $0x90] sm:$0xf]
    %v4583 = vld [vmem:[%s4545 + $0x94] sm:$0xf]
    %v4584 = vld [vmem:[%s4545 + $0x98] sm:$0xf]
    %v4585 = vld [vmem:[%s4545 + $0x9c] sm:$0xf]
    %v4586 = vld [vmem:[%s4545 + $0xa0] sm:$0xf]
    %v4587 = vld [vmem:[%s4545 + $0xa4] sm:$0xf]
    %v4588 = vld [vmem:[%s4545 + $0xa8] sm:$0xf]
    %v4589 = vld [vmem:[%s4545 + $0xac] sm:$0xf]
    %v4590 = vld [vmem:[%s4545 + $0xb0] sm:$0xf]
    %v4591 = vld [vmem:[%s4545 + $0xb4] sm:$0xf]
    %v4592 = vld [vmem:[%s4545 + $0xb8] sm:$0xf]
    %v4593 = vld [vmem:[%s4545 + $0xbc] sm:$0xf]
    %v4594 = vld [vmem:[%s4545 + $0xc0] sm:$0xf]
    %v4595 = vld [vmem:[%s4545 + $0xc4] sm:$0xf]
    %v4596 = vld [vmem:[%s4545 + $0xc8] sm:$0xf]
    %v4597 = vld [vmem:[%s4545 + $0xcc] sm:$0xf]
    %v4598 = vld [vmem:[%s4545 + $0xd0] sm:$0xf]
    %v4599 = vld [vmem:[%s4545 + $0xd4] sm:$0xf]
    %v4600 = vld [vmem:[%s4545 + $0xd8] sm:$0xf]
    %v4601 = vld [vmem:[%s4545 + $0xdc] sm:$0xf]
    %v4602 = vld [vmem:[%s4545 + $0xe0] sm:$0xf]
    %v4603 = vld [vmem:[%s4545 + $0xe4] sm:$0xf]
    %v4604 = vld [vmem:[%s4545 + $0xe8] sm:$0xf]
    %v4605 = vld [vmem:[%s4545 + $0xec] sm:$0xf]
    %v4606 = vld [vmem:[%s4545 + $0xf0] sm:$0xf]
    %v4607 = vld [vmem:[%s4545 + $0xf4] sm:$0xf]
    %v4608 = vld [vmem:[%s4545 + $0xf8] sm:$0xf]
    %v4609 = vld [vmem:[%s4545 + $0xfc] sm:$0xf]
    %s4610 = scalar_lea.vmem %s16, 5
    %v4611 = vld [vmem:[%s4610] sm:$0x1]
    %v4613 = vlaneseq
    %v4614 = vshrl.u32 %v4613, 7
    %v4615 = vsub.s32 0, %v4614
    %v4616 = vrot.slane %v4611, %v4615
    %v4682 = vunpack.c.l.b16 %v4546
    %v4683 = vunpack.c.l.b16 %v4547
    %v4684 = vunpack.c.l.b16 %v4548
    %v4685 = vunpack.c.l.b16 %v4549
    %v4686 = vunpack.c.l.b16 %v4550
    %v4687 = vunpack.c.l.b16 %v4551
    %v4688 = vunpack.c.l.b16 %v4552
    %v4689 = vunpack.c.l.b16 %v4553
    %v4690 = vunpack.c.l.b16 %v4554
    %v4691 = vunpack.c.l.b16 %v4555
    %v4692 = vunpack.c.l.b16 %v4556
    %v4693 = vunpack.c.l.b16 %v4557
    %v4694 = vunpack.c.l.b16 %v4558
    %v4695 = vunpack.c.l.b16 %v4559
    %v4696 = vunpack.c.l.b16 %v4560
    %v4697 = vunpack.c.l.b16 %v4561
    %v4698 = vunpack.c.l.b16 %v4562
    %v4699 = vunpack.c.l.b16 %v4563
    %v4700 = vunpack.c.l.b16 %v4564
    %v4701 = vunpack.c.l.b16 %v4565
    %v4702 = vunpack.c.l.b16 %v4566
    %v4703 = vunpack.c.l.b16 %v4567
    %v4704 = vunpack.c.l.b16 %v4568
    %v4705 = vunpack.c.l.b16 %v4569
    %v4706 = vunpack.c.l.b16 %v4570
    %v4707 = vunpack.c.l.b16 %v4571
    %v4708 = vunpack.c.l.b16 %v4572
    %v4709 = vunpack.c.l.b16 %v4573
    %v4710 = vunpack.c.l.b16 %v4574
    %v4711 = vunpack.c.l.b16 %v4575
    %v4712 = vunpack.c.l.b16 %v4576
    %v4713 = vunpack.c.l.b16 %v4577
    %v4714 = vunpack.c.l.b16 %v4578
    %v4715 = vunpack.c.l.b16 %v4579
    %v4716 = vunpack.c.l.b16 %v4580
    %v4717 = vunpack.c.l.b16 %v4581
    %v4718 = vunpack.c.l.b16 %v4582
    %v4719 = vunpack.c.l.b16 %v4583
    %v4720 = vunpack.c.l.b16 %v4584
    %v4721 = vunpack.c.l.b16 %v4585
    %v4722 = vunpack.c.l.b16 %v4586
    %v4723 = vunpack.c.l.b16 %v4587
    %v4724 = vunpack.c.l.b16 %v4588
    %v4725 = vunpack.c.l.b16 %v4589
    %v4726 = vunpack.c.l.b16 %v4590
    %v4727 = vunpack.c.l.b16 %v4591
    %v4728 = vunpack.c.l.b16 %v4592
    %v4729 = vunpack.c.l.b16 %v4593
    %v4730 = vunpack.c.l.b16 %v4594
    %v4731 = vunpack.c.l.b16 %v4595
    %v4732 = vunpack.c.l.b16 %v4596
    %v4733 = vunpack.c.l.b16 %v4597
    %v4734 = vunpack.c.l.b16 %v4598
    %v4735 = vunpack.c.l.b16 %v4599
    %v4736 = vunpack.c.l.b16 %v4600
    %v4737 = vunpack.c.l.b16 %v4601
    %v4738 = vunpack.c.l.b16 %v4602
    %v4739 = vunpack.c.l.b16 %v4603
    %v4740 = vunpack.c.l.b16 %v4604
    %v4741 = vunpack.c.l.b16 %v4605
    %v4742 = vunpack.c.l.b16 %v4606
    %v4743 = vunpack.c.l.b16 %v4607
    %v4744 = vunpack.c.l.b16 %v4608
    %v4745 = vunpack.c.l.b16 %v4609
    %v4746 = vpack.c.b16 %v4683, %v4682
    %v4747 = vpack.c.b16 %v4685, %v4684
    %v4748 = vpack.c.b16 %v4687, %v4686
    %v4749 = vpack.c.b16 %v4689, %v4688
    %v4750 = vpack.c.b16 %v4691, %v4690
    %v4751 = vpack.c.b16 %v4693, %v4692
    %v4752 = vpack.c.b16 %v4695, %v4694
    %v4753 = vpack.c.b16 %v4697, %v4696
    %v4754 = vpack.c.b16 %v4699, %v4698
    %v4755 = vpack.c.b16 %v4701, %v4700
    %v4756 = vpack.c.b16 %v4703, %v4702
    %v4757 = vpack.c.b16 %v4705, %v4704
    %v4758 = vpack.c.b16 %v4707, %v4706
    %v4759 = vpack.c.b16 %v4709, %v4708
    %v4760 = vpack.c.b16 %v4711, %v4710
    %v4761 = vpack.c.b16 %v4713, %v4712
    %v4762 = vpack.c.b16 %v4715, %v4714
    %v4763 = vpack.c.b16 %v4717, %v4716
    %v4764 = vpack.c.b16 %v4719, %v4718
    %v4765 = vpack.c.b16 %v4721, %v4720
    %v4766 = vpack.c.b16 %v4723, %v4722
    %v4767 = vpack.c.b16 %v4725, %v4724
    %v4768 = vpack.c.b16 %v4727, %v4726
    %v4769 = vpack.c.b16 %v4729, %v4728
    %v4770 = vpack.c.b16 %v4731, %v4730
    %v4771 = vpack.c.b16 %v4733, %v4732
    %v4772 = vpack.c.b16 %v4735, %v4734
    %v4773 = vpack.c.b16 %v4737, %v4736
    %v4774 = vpack.c.b16 %v4739, %v4738
    %v4775 = vpack.c.b16 %v4741, %v4740
    %v4776 = vpack.c.b16 %v4743, %v4742
    %v4777 = vpack.c.b16 %v4745, %v4744
    %4810 = vmatprep.subr.bf16.mxu0 0
    %4811 = vmatpush1.bf16.msra.mxu0 %v4746
    %4812 = vmatprep.subr.bf16.mxu0 0
    %4813 = vmatpush1.bf16.msra.mxu0 %v4747
    %4814 = vmatprep.subr.bf16.mxu0 0
    %4815 = vmatpush1.bf16.msra.mxu0 %v4748
    %4816 = vmatprep.subr.bf16.mxu0 0
    %4817 = vmatpush1.bf16.msra.mxu0 %v4749
    %4818 = vmatprep.subr.bf16.mxu0 0
    %4819 = vmatpush1.bf16.msra.mxu0 %v4750
    %4820 = vmatprep.subr.bf16.mxu0 0
    %4821 = vmatpush1.bf16.msra.mxu0 %v4751
    %4822 = vmatprep.subr.bf16.mxu0 0
    %4823 = vmatpush1.bf16.msra.mxu0 %v4752
    %4824 = vmatprep.subr.bf16.mxu0 0
    %4825 = vmatpush1.bf16.msra.mxu0 %v4753
    %4826 = vmatprep.subr.bf16.mxu0 0
    %4827 = vmatpush1.bf16.msra.mxu0 %v4754
    %4828 = vmatprep.subr.bf16.mxu0 0
    %4829 = vmatpush1.bf16.msra.mxu0 %v4755
    %4830 = vmatprep.subr.bf16.mxu0 0
    %4831 = vmatpush1.bf16.msra.mxu0 %v4756
    %4832 = vmatprep.subr.bf16.mxu0 0
    %4833 = vmatpush1.bf16.msra.mxu0 %v4757
    %4834 = vmatprep.subr.bf16.mxu0 0
    %4835 = vmatpush1.bf16.msra.mxu0 %v4758
    %4836 = vmatprep.subr.bf16.mxu0 0
    %4837 = vmatpush1.bf16.msra.mxu0 %v4759
    %4838 = vmatprep.subr.bf16.mxu0 0
    %4839 = vmatpush1.bf16.msra.mxu0 %v4760
    %4840 = vmatprep.subr.bf16.mxu0 0
    %4841 = vmatpush1.bf16.msra.mxu0 %v4761
    %4842 = vmatprep.mubr.bf16.mxu0 %v2819
    %4843 = vmatmul.mubr.bf16.gmra.mrb[0].mxu0 %v2818
    %v4844 = vpop.f32.mrb[0].mxu0
    %v4845 = vadd.f32 %v4616, %v4844
    %v4846 = vpop.f32.mrb[0].mxu0
    %v4847 = vpop.f32.mrb[0].mxu0
    %v4848 = vpop.f32.mrb[0].mxu0
    %4849 = vdwg.mxu0
    %4850 = vmatprep.subr.bf16.mxu0 0
    %4851 = vmatpush1.bf16.msra.mxu0 %v4762
    %4852 = vmatprep.subr.bf16.mxu0 0
    %4853 = vmatpush1.bf16.msra.mxu0 %v4763
    %4854 = vmatprep.subr.bf16.mxu0 0
    %4855 = vmatpush1.bf16.msra.mxu0 %v4764
    %4856 = vmatprep.subr.bf16.mxu0 0
    %4857 = vmatpush1.bf16.msra.mxu0 %v4765
    %4858 = vmatprep.subr.bf16.mxu0 0
    %4859 = vmatpush1.bf16.msra.mxu0 %v4766
    %4860 = vmatprep.subr.bf16.mxu0 0
    %4861 = vmatpush1.bf16.msra.mxu0 %v4767
    %4862 = vmatprep.subr.bf16.mxu0 0
    %4863 = vmatpush1.bf16.msra.mxu0 %v4768
    %4864 = vmatprep.subr.bf16.mxu0 0
    %4865 = vmatpush1.bf16.msra.mxu0 %v4769
    %4866 = vmatprep.subr.bf16.mxu0 0
    %4867 = vmatpush1.bf16.msra.mxu0 %v4770
    %4868 = vmatprep.subr.bf16.mxu0 0
    %4869 = vmatpush1.bf16.msra.mxu0 %v4771
    %4870 = vmatprep.subr.bf16.mxu0 0
    %4871 = vmatpush1.bf16.msra.mxu0 %v4772
    %4872 = vmatprep.subr.bf16.mxu0 0
    %4873 = vmatpush1.bf16.msra.mxu0 %v4773
    %4874 = vmatprep.subr.bf16.mxu0 0
    %4875 = vmatpush1.bf16.msra.mxu0 %v4774
    %4876 = vmatprep.subr.bf16.mxu0 0
    %4877 = vmatpush1.bf16.msra.mxu0 %v4775
    %4878 = vmatprep.subr.bf16.mxu0 0
    %4879 = vmatpush1.bf16.msra.mxu0 %v4776
    %4880 = vmatprep.subr.bf16.mxu0 0
    %4881 = vmatpush1.bf16.msra.mxu0 %v4777
    %4882 = vmatprep.mubr.bf16.mxu0 %v2821
    %4883 = vmatmul.mubr.bf16.gmra.mrb[0].mxu0 %v2820
    %v4884 = vpop.f32.mrb[0].mxu0
    %v4885 = vadd.f32 %v4845, %v4884
    %v4886 = vpop.f32.mrb[0].mxu0
    %v4887 = vpop.f32.mrb[0].mxu0
    %v4888 = vpop.f32.mrb[0].mxu0
    %4889 = vdwg.mxu0
    %v4890 = vmul.f32 %v3160, %v3160
    %v4891 = vmul.f32 %v3850, %v3850
    %v4892 = vadd.f32 %v4890, %v4891
    %v4893 = vmul.f32 %v4540, %v4540
    %v4894 = vadd.f32 %v4892, %v4893
    %v4895 = vadd.f32 %v4894, 1e-12
    %v4896 = vrsqrt.pop %v4895
    %v4897 = vmul.f32 %v3160, %v4896
    %v4898 = vmul.f32 %v3850, %v4896
    %v4899 = vmul.f32 %v4540, %v4896
    %v4900 = vmul.f32 %v4897, %v3505
    %v4901 = vmul.f32 %v4898, %v4195
    %v4902 = vadd.f32 %v4900, %v4901
    %v4903 = vmul.f32 %v4899, %v4885
    %v4904 = vadd.f32 %v4902, %v4903
    %v4905 = vmul.f32 %v4904, %v4897
    %v4906 = vsub.f32 %v3505, %v4905
    %v4907 = vmul.f32 %v4904, %v4898
    %v4908 = vsub.f32 %v4195, %v4907
    %v4909 = vmul.f32 %v4904, %v4899
    %v4910 = vsub.f32 %v4885, %v4909
    %v4911 = vmul.f32 %v4906, %v4906
    %v4912 = vmul.f32 %v4908, %v4908
    %v4913 = vadd.f32 %v4911, %v4912
    %v4914 = vmul.f32 %v4910, %v4910
    %v4915 = vadd.f32 %v4913, %v4914
    %v4916 = vadd.f32 %v4915, 1e-12
    %v4917 = vrsqrt.pop %v4916
    %v4918 = vmul.f32 %v4906, %v4917
    %v4919 = vmul.f32 %v4908, %v4917
    %v4920 = vmul.f32 %v4910, %v4917
    %v4921 = vmul.f32 %v4898, %v4920
    %v4922 = vmul.f32 %v4899, %v4919
    %v4923 = vsub.f32 %v4921, %v4922
    %v4924 = vmul.f32 %v4899, %v4918
    %v4925 = vmul.f32 %v4897, %v4920
    %v4926 = vsub.f32 %v4924, %v4925
    %v4927 = vmul.f32 %v4897, %v4919
    %v4928 = vmul.f32 %v4898, %v4918
    %v4929 = vsub.f32 %v4927, %v4928
    %vm4930 = vcmp.lt.f32.partialorder %v4929, 1e-06
    %vm4931 = vcmp.gt.f32.partialorder %v4897, %v4919
    %v4932 = vsub.f32 0.0, %v4919
    %vm4933 = vcmp.lt.f32.partialorder %v4897, %v4932
    %v4934 = vadd.f32 %v4897, 1.0
    %v4935 = vsub.f32 %v4934, %v4919
    %v4936 = vsub.f32 %v4935, %v4929
    %v4937 = vsub.f32 1.0, %v4897
    %v4938 = vadd.f32 %v4937, %v4919
    %v4939 = vsub.f32 %v4938, %v4929
    %v4940 = vsub.f32 %v4937, %v4919
    %v4941 = vadd.f32 %v4940, %v4929
    %v4942 = vadd.f32 %v4934, %v4919
    %v4943 = vadd.f32 %v4942, %v4929
    %v4944 = vsub.f32 %v4920, %v4926
    %v4945 = vadd.f32 %v4898, %v4918
    %v4946 = vadd.f32 %v4923, %v4899
    %v4947 = vsub.f32 %v4923, %v4899
    %v4948 = vadd.f32 %v4920, %v4926
    %v4949 = vsub.f32 %v4898, %v4918
    %vm4950 = vmand %vm4930, %vm4931
    %v4951 = vsel %vm4950, 1.0, 0.0
    %vm4952 = vmxor %vm4931, 1
    %vm4953 = vmand %vm4930, %vm4952
    %v4954 = vsel %vm4953, 1.0, 0.0
    %vm4955 = vmxor %vm4930, 1
    %vm4956 = vmand %vm4955, %vm4933
    %v4957 = vsel %vm4956, 1.0, 0.0
    %vm4958 = vmxor %vm4933, 1
    %vm4959 = vmand %vm4955, %vm4958
    %v4960 = vsel %vm4959, 1.0, 0.0
    %v4961 = vmul.f32 %v4936, %v4951
    %v4962 = vmul.f32 %v4939, %v4954
    %v4963 = vadd.f32 %v4961, %v4962
    %v4964 = vmul.f32 %v4941, %v4957
    %v4965 = vadd.f32 %v4963, %v4964
    %v4966 = vmul.f32 %v4943, %v4960
    %v4967 = vadd.f32 %v4965, %v4966
    %v4968 = vrsqrt.pop %v4967
    %v4969 = vmul.f32 %v4968, 0.5
    %v4970 = vmul.f32 %v4944, %v4951
    %v4971 = vmul.f32 %v4947, %v4954
    %v4972 = vadd.f32 %v4970, %v4971
    %v4973 = vmul.f32 %v4949, %v4957
    %v4974 = vadd.f32 %v4972, %v4973
    %v4975 = vadd.f32 %v4974, %v4966
    %v4976 = vmul.f32 %v4975, %v4969
    %v4977 = vmul.f32 %v4945, %v4954
    %v4978 = vadd.f32 %v4961, %v4977
    %v4979 = vmul.f32 %v4946, %v4957
    %v4980 = vadd.f32 %v4978, %v4979
    %v4981 = vmul.f32 %v4944, %v4960
    %v4982 = vadd.f32 %v4980, %v4981
    %v4983 = vmul.f32 %v4982, %v4969
    %v4984 = vmul.f32 %v4945, %v4951
    %v4985 = vadd.f32 %v4984, %v4962
    %v4986 = vmul.f32 %v4948, %v4957
    %v4987 = vadd.f32 %v4985, %v4986
    %v4988 = vmul.f32 %v4947, %v4960
    %v4989 = vadd.f32 %v4987, %v4988
    %v4990 = vmul.f32 %v4989, %v4969
    %v4991 = vmul.f32 %v4946, %v4951
    %v4992 = vmul.f32 %v4948, %v4954
    %v4993 = vadd.f32 %v4991, %v4992
    %v4994 = vadd.f32 %v4993, %v4964
    %v4995 = vmul.f32 %v4949, %v4960
    %v4996 = vadd.f32 %v4994, %v4995
    %v4997 = vmul.f32 %v4996, %v4969
    %vm4998 = vcmask 171008
    %4999 = vst.msk [vmem:[%s18] sm:$0xff] %vm4998, %v4976
    %5000 = vst.msk [vmem:[%s19] sm:$0xff] %vm4998, %v4983
    %5001 = vst.msk [vmem:[%s20] sm:$0xff] %vm4998, %v4990
    %5002 = vst.msk [vmem:[%s21] sm:$0xff] %vm4998, %v4997
    // Predicated region
    $region70: #{vposer_autoencode.1} parent=1 // pred_check
      _
    $region71: #{vposer_autoencode.1} parent=1 // pred_check_branch
      %5004 = sbr.rel (0) target = $region73
    $region72: #{vposer_autoencode.1} parent=1 // pred_region
      %s5006 = ssub.s32 128, 128
      %5007 = vsyncadd [#allocation3], %s5006
      %s5009 = sshll.u32 [#allocation2], 4
      %s5010 = int_to_ptr.vmem [resolvable:$true] %s5009
      %5012 = dma.vmem_to_hbm [thread:$0]  %s5010, 128, %s17, [#allocation3]
    $region73: #{vposer_autoencode.1} parent=1 // pred_fallthru
      _
    // Predicated region
    $region74: #{vposer_autoencode.1} parent=1 // pred_check
      _
    $region75: #{vposer_autoencode.1} parent=1 // pred_check_branch
      %5014 = sbr.rel (0) target = $region77
    $region76: #{vposer_autoencode.1} parent=1 // pred_region
      _
    $region77: #{vposer_autoencode.1} parent=1 // pred_fallthru
      _
    // Predicated region
    $region78: #{vposer_autoencode.1} parent=1 // pred_check
      _
    $region79: #{vposer_autoencode.1} parent=1 // pred_check_branch
      %5016 = sbr.rel (0) target = $region81
    $region80: #{vposer_autoencode.1} parent=1 // pred_region
      _
    $region81: #{vposer_autoencode.1} parent=1 // pred_fallthru
      _
    // Predicated region
    $region82: #{vposer_autoencode.1} parent=1 // pred_check
      _
    $region83: #{vposer_autoencode.1} parent=1 // pred_check_branch
      %5018 = sbr.rel (0) target = $region85
    $region84: #{vposer_autoencode.1} parent=1 // pred_region
      _
    $region85: #{vposer_autoencode.1} parent=1 // pred_fallthru
      _
    // Predicated region
    $region86: #{vposer_autoencode.1} parent=1 // pred_check
      _
    $region87: #{vposer_autoencode.1} parent=1 // pred_check_branch
      %5020 = sbr.rel (0) target = $region89
    $region88: #{vposer_autoencode.1} parent=1 // pred_region
      _
    $region89: #{vposer_autoencode.1} parent=1 // pred_fallthru
      _
    // Predicated region
    $region90: #{vposer_autoencode.1} parent=1 // pred_check
      _
    $region91: #{vposer_autoencode.1} parent=1 // pred_check_branch
      %5022 = sbr.rel (0) target = $region93
    $region92: #{vposer_autoencode.1} parent=1 // pred_region
      %5023 = dma.done [#allocation3], 128
    $region93: #{vposer_autoencode.1} parent=1 // pred_fallthru
      _
    // Predicated region
    $region94: #{vposer_autoencode.1} parent=1 // pred_check
      _
    $region95: #{vposer_autoencode.1} parent=1 // pred_check_branch
      %5025 = sbr.rel (0) target = $region97
    $region96: #{vposer_autoencode.1} parent=1 // pred_region
      _
    $region97: #{vposer_autoencode.1} parent=1 // pred_fallthru
      _
    // Predicated region
    $region98: #{vposer_autoencode.1} parent=1 // pred_check
      _
    $region99: #{vposer_autoencode.1} parent=1 // pred_check_branch
      %5027 = sbr.rel (0) target = $region101
    $region100: #{vposer_autoencode.1} parent=1 // pred_region
      _
    $region101: #{vposer_autoencode.1} parent=1 // pred_fallthru
      _
    // Predicated region
    $region102: #{vposer_autoencode.1} parent=1 // pred_check
      _
    $region103: #{vposer_autoencode.1} parent=1 // pred_check_branch
      %5029 = sbr.rel (0) target = $region105
    $region104: #{vposer_autoencode.1} parent=1 // pred_region
      _
    $region105: #{vposer_autoencode.1} parent=1 // pred_fallthru
      _
    // Predicated region
    $region106: #{vposer_autoencode.1} parent=1 // pred_check
      _
    $region107: #{vposer_autoencode.1} parent=1 // pred_check_branch
      %5031 = sbr.rel (0) target = $region109
    $region108: #{vposer_autoencode.1} parent=1 // pred_region
      _
    $region109: #{vposer_autoencode.1} parent=1 // pred_fallthru
      _
    %5032 = vsyncpa [#allocation3], 1

</llo_original>
